<compile_context>
chip_gen: v7x
topology: tpu7x:2x2x1
jax: 0.10.0
libtpu: 0.0.40
codegen_flags: <defaults>
</compile_context>

<pallas_src>
import functools

import jax
import jax.numpy as jnp
from jax.experimental import pallas as pl
from jax.experimental.pallas import tpu as pltpu


# -----------------------------------------------------------------------------
# Kernel
# -----------------------------------------------------------------------------
def _cross_attn_kernel(
    support_ref, queries_ref,
    ws_ref, bs_ref, wq3_ref, bq3_ref,
    mwo_ref, w1_ref, b1_ref, w2_ref, wp_ref,
    small_ref, mask_ref, maskT_ref,
    qproto_ref, cproto_ref,
    *, num_heads: int,
):
    f32, bf16 = jnp.float32, jnp.bfloat16
    Bb, N, D = support_ref.shape
    dh = D // num_heads
    BN = Bb * N
    inv_sqrt_d = 1.0 / (D ** 0.5)
    inv_sqrt_dh = 1.0 / (dh ** 0.5)

    # small_ref rows: 0:g1 1:bt1 2:g2 3:bt2 4:mbo 5:b2 6:bp 7:pad
    g1, bt1 = small_ref[0:1, :], small_ref[1:2, :]
    g2, bt2 = small_ref[2:3, :], small_ref[3:4, :]
    mbo, b2, bp = small_ref[4:5, :], small_ref[5:6, :], small_ref[6:7, :]

    # Leading-dim collapse is layout-free (D stays the lane dim); bf16 for MXU.
    s_flat = support_ref[...].reshape(BN, D).astype(bf16)   # (Bb*N, D)
    q_bf = queries_ref[...].astype(bf16)                    # (Bb, D)

    # ---- fused projections (bf16 in, f32 accumulate) ---------------------------
    # support rows: [ks | vs | mk | mv]   query rows: [qs | qv | mq]
    sp = jnp.dot(s_flat, ws_ref[...], preferred_element_type=f32) + bs_ref[...]   # (BN, 4D)
    qp = jnp.dot(q_bf, wq3_ref[...], preferred_element_type=f32) + bq3_ref[...]   # (Bb, 3D)

    ks = sp[:, 0 * D:1 * D].reshape(Bb, N, D)
    vs = sp[:, 1 * D:2 * D].reshape(Bb, N, D)
    mk = sp[:, 2 * D:3 * D].reshape(Bb, N, D)
    mv = sp[:, 3 * D:4 * D].reshape(Bb, N, D)
    qs = qp[:, 0 * D:1 * D]                                  # (Bb, D)
    qv = qp[:, 1 * D:2 * D]                                  # (Bb, D)  query_prototype
    mq = qp[:, 2 * D:3 * D]                                  # (Bb, D)  MHA query (mwq folded)

    # ---- class prototype: softmax_N(qs . ks / sqrt(D)) @ vs --------------------
    scores = jnp.sum(ks * qs[:, None, :], axis=-1) * inv_sqrt_d       # (Bb, N)
    scores = scores - jnp.max(scores, axis=-1, keepdims=True)
    pcls = jnp.exp(scores)
    aff = pcls / jnp.sum(pcls, axis=-1, keepdims=True)                # (Bb, N)
    class_proto = jnp.sum(aff[:, :, None] * vs, axis=1)               # (Bb, D)

    # ---- nn.MultiheadAttention(query=qv, key=support, value=support), eval -----
    # Per-head scores via head-membership mask (no in-kernel head reshapes).
    # Mask is exactly representable in bf16; accumulation stays f32.
    mkq = (mk * mq[:, None, :]).reshape(BN, D).astype(bf16)
    sc_h = jnp.dot(mkq, mask_ref[...], preferred_element_type=f32)    # (BN, H)
    sc_h = sc_h.reshape(Bb, N, num_heads) * inv_sqrt_dh
    sc_h = sc_h - jnp.max(sc_h, axis=1, keepdims=True)
    ph = jnp.exp(sc_h)
    attn_h = ph / jnp.sum(ph, axis=1, keepdims=True)                  # (Bb, N, H)
    attn_full = jnp.dot(attn_h.reshape(BN, num_heads).astype(bf16), maskT_ref[...],
                        preferred_element_type=f32).reshape(Bb, N, D)
    ctx = jnp.sum(attn_full * mv, axis=1)                             # (Bb, D)
    refined = jnp.dot(ctx.astype(bf16), mwo_ref[...], preferred_element_type=f32) + mbo
    # TODO(synk): attention-weight / FFN dropout (p=0.1) omitted — inference-only kernel.

    # ---- residual + LayerNorm1 --------------------------------------------------
    x = qv + refined
    mu = jnp.mean(x, axis=-1, keepdims=True)
    xc = x - mu
    var = jnp.mean(xc * xc, axis=-1, keepdims=True)
    x1 = xc * jax.lax.rsqrt(var + 1e-5) * g1 + bt1

    # ---- FFN: Linear(D,4D) -> ReLU -> Linear(4D,D) -------------------------------
    h = jnp.dot(x1.astype(bf16), w1_ref[...], preferred_element_type=f32) + b1_ref[...]
    h = jnp.maximum(h, 0.0)
    ff = jnp.dot(h.astype(bf16), w2_ref[...], preferred_element_type=f32) + b2

    # ---- residual + LayerNorm2 ---------------------------------------------------
    x2 = x1 + ff
    mu2 = jnp.mean(x2, axis=-1, keepdims=True)
    xc2 = x2 - mu2
    var2 = jnp.mean(xc2 * xc2, axis=-1, keepdims=True)
    x2n = xc2 * jax.lax.rsqrt(var2 + 1e-5) * g2 + bt2

    # ---- fused output projection over [query rows ; class-proto rows] ------------
    stacked = jnp.concatenate([x2n, class_proto], axis=0).astype(bf16)  # (2*Bb, D)
    out = jnp.dot(stacked, wp_ref[...], preferred_element_type=f32) + bp
    qproto_ref[...] = out[:Bb, :]
    cproto_ref[...] = out[Bb:, :]


# -----------------------------------------------------------------------------
# Block-size selection
# -----------------------------------------------------------------------------
def _num_tensorcores():
    """2 TensorCores per chip only on v7x; otherwise grid steps are serial."""
    try:
        kind = jax.devices()[0].device_kind.lower()
    except Exception:
        return 1
    return 2 if "v7" in kind else 1


def _pick_block_b(B, N, min_steps=1, max_rows=1024):
    """Largest Bb with B % Bb == 0, Bb % 8 == 0 (sublane-aligned), Bb*N <= max_rows
    support rows per step (MXU-friendly), and at least `min_steps` grid steps.
    Falls back to a single whole-batch step when the batch is too small to split."""
    if B % 8 != 0:
        return B                               # tiny / odd batch: single grid step
    best = 8
    for bb in range(8, B + 1, 8):
        if B % bb != 0:
            continue
        if bb * N <= max_rows and (B // bb) >= min_steps:
            best = max(best, bb)
    if B // best < min_steps:                  # batch too small to split
        best = B
    return best


# -----------------------------------------------------------------------------
# Weight packing (call ONCE, outside the forward hot path)
# -----------------------------------------------------------------------------
def pack_params(params):
    bf16, f32 = jnp.bfloat16, jnp.float32
    D = params["wq"].shape[0]
    # Support-side fused projection: [wk | wv | mwk | mwv]  (D, 4D)
    ws = jnp.concatenate([params["wk"], params["wv"], params["mwk"], params["mwv"]], axis=1)
    bs = jnp.concatenate([params["bk"], params["bv"], params["mbk"], params["mbv"]], axis=1)
    # Query-side fused projection with mwq folded in (exact):
    #   mq = (q@wv + bv)@mwq + mbq = q@(wv@mwq) + (bv@mwq + mbq)
    w_qmq = params["wv"] @ params["mwq"]
    b_qmq = params["bv"] @ params["mwq"] + params["mbq"]
    wq3 = jnp.concatenate([params["wq"], params["wv"], w_qmq], axis=1)      # (D, 3D)
    bq3 = jnp.concatenate([params["bq"], params["bv"], b_qmq], axis=1)      # (1, 3D)
    small = jnp.concatenate(
        [params["g1"], params["bt1"], params["g2"], params["bt2"],
         params["mbo"], params["b2"], params["bp"], jnp.zeros((1, D), f32)], axis=0)
    return dict(
        ws=ws.astype(bf16), bs=bs.astype(f32),
        wq3=wq3.astype(bf16), bq3=bq3.astype(f32),
        mwo=params["mwo"].astype(bf16),
        w1=params["w1"].astype(bf16), b1=params["b1"].astype(f32),
        w2=params["w2"].astype(bf16), wp=params["wp"].astype(bf16),
        small=small.astype(f32),
        mask=params["mask"].astype(bf16), maskT=params["maskT"].astype(bf16),
    )


_W_ORDER = ["ws", "bs", "wq3", "bq3", "mwo", "w1", "b1", "w2", "wp",
            "small", "mask", "maskT"]


def _const_index_map(ndim):
    return lambda b: (0,) * ndim


# -----------------------------------------------------------------------------
# Wrapper
# -----------------------------------------------------------------------------
def cross_attention_forward(support, queries, packed, num_heads, block_b=None):
    """mode=0 forward of CrossAttentionModel (eval: dropout = identity).
    `packed` is the output of pack_params(params) (packed once, reused)."""
    B, N, D = support.shape
    assert queries.shape == (B, 1, D)
    assert D % num_heads == 0
    support = support.astype(jnp.float32)
    q2d = queries.reshape(B, D).astype(jnp.float32)

    if block_b is None:
        block_b = _pick_block_b(B, N, min_steps=_num_tensorcores())
    assert B % block_b == 0
    grid = (B // block_b,)

    weights = [packed[k] for k in _W_ORDER]
    kernel = functools.partial(_cross_attn_kernel, num_heads=num_heads)

    in_specs = [
        pl.BlockSpec((block_b, N, D), lambda b: (b, 0, 0)),   # support block
        pl.BlockSpec((block_b, D), lambda b: (b, 0)),          # query block
    ] + [pl.BlockSpec(x.shape, _const_index_map(x.ndim)) for x in weights]
    out_specs = [pl.BlockSpec((block_b, D), lambda b: (b, 0))] * 2
    out_shape = [jax.ShapeDtypeStruct((B, D), jnp.float32)] * 2

    qp_out, cp_out = pl.pallas_call(
        kernel,
        grid=grid,
        in_specs=in_specs,
        out_specs=out_specs,
        out_shape=out_shape,
        compiler_params=pltpu.CompilerParams(
            dimension_semantics=("parallel",),
            vmem_limit_bytes=48 * 1024 * 1024),
    )(support, q2d, *weights)

    return qp_out.reshape(B, 1, D), cp_out.reshape(B, 1, D)


# -----------------------------------------------------------------------------
# Deterministic parameter init (xavier_uniform weights, zero biases, LN = (1, 0))
# -----------------------------------------------------------------------------
def make_params(key, d_model, num_heads):
    D, H = d_model, num_heads

    def xavier(k, fan_in, fan_out):
        limit = (6.0 / (fan_in + fan_out)) ** 0.5
        return jax.random.uniform(k, (fan_in, fan_out), jnp.float32, -limit, limit)

    zeros = lambda n: jnp.zeros((1, n), jnp.float32)
    ks = jax.random.split(key, 10)
    p = {}
    p["wq"], p["bq"] = xavier(ks[0], D, D), zeros(D)
    p["wk"], p["bk"] = xavier(ks[1], D, D), zeros(D)
    p["wv"], p["bv"] = xavier(ks[2], D, D), zeros(D)
    p["mwq"], p["mbq"] = xavier(ks[3], D, D), zeros(D)
    p["mwk"], p["mbk"] = xavier(ks[4], D, D), zeros(D)
    p["mwv"], p["mbv"] = xavier(ks[5], D, D), zeros(D)
    p["mwo"], p["mbo"] = xavier(ks[6], D, D), zeros(D)
    p["g1"], p["bt1"] = jnp.ones((1, D), jnp.float32), zeros(D)
    p["g2"], p["bt2"] = jnp.ones((1, D), jnp.float32), zeros(D)
    p["w1"], p["b1"] = xavier(ks[7], D, 4 * D), zeros(4 * D)
    p["w2"], p["b2"] = xavier(ks[8], 4 * D, D), zeros(D)
    p["wp"], p["bp"] = xavier(ks[9], D, D), zeros(D)

    head_id = jnp.arange(D) // (D // H)
    mask = (head_id[:, None] == jnp.arange(H)[None, :]).astype(jnp.float32)  # (D, H)
    p["mask"], p["maskT"] = mask, mask.T
    return p


# -----------------------------------------------------------------------------
# Pure-JAX reference (explicit multi-head reshape) for validation.
# matmul_dtype builds a bf16-matmul twin (f32 accumulation) for a tight check;
# fuse_mq=True mirrors the kernel's exact mwq folding for that twin.
# -----------------------------------------------------------------------------
def reference_forward(support, queries, p, num_heads, matmul_dtype=jnp.float32,
                      fuse_mq=False):
    B, N, D = support.shape
    dh = D // num_heads
    f32 = jnp.float32

    def mm(x, w):
        return jnp.dot(x.astype(matmul_dtype), w.astype(matmul_dtype),
                       preferred_element_type=f32)

    ks = mm(support, p["wk"]) + p["bk"]
    qs = mm(queries, p["wq"]) + p["bq"]
    vs = mm(support, p["wv"]) + p["bv"]
    qv = mm(queries, p["wv"]) + p["bv"]

    scores = jnp.einsum("bqd,bnd->bqn", qs, ks) / (D ** 0.5)
    aff = jax.nn.softmax(scores, axis=-1)
    class_proto = jnp.einsum("bqn,bnd->bqd", aff, vs)

    if fuse_mq:
        w_qmq = p["wv"] @ p["mwq"]                    # f32 fold, mirrors pack_params
        b_qmq = p["bv"] @ p["mwq"] + p["mbq"]
        mq = (mm(queries, w_qmq) + b_qmq).reshape(B, 1, num_heads, dh)
    else:
        mq = (mm(qv, p["mwq"]) + p["mbq"]).reshape(B, 1, num_heads, dh)
    mk = (mm(support, p["mwk"]) + p["mbk"]).reshape(B, N, num_heads, dh)
    mv = (mm(support, p["mwv"]) + p["mbv"]).reshape(B, N, num_heads, dh)
    sc = jnp.einsum("bqhd,bnhd->bhqn", mq, mk) / (dh ** 0.5)
    a = jax.nn.softmax(sc, axis=-1)
    ctx = jnp.einsum("bhqn,bnhd->bqhd", a, mv).reshape(B, 1, D)
    refined = mm(ctx, p["mwo"]) + p["mbo"]

    def ln(x, g, b):
        mu = jnp.mean(x, axis=-1, keepdims=True)
        var = jnp.mean((x - mu) ** 2, axis=-1, keepdims=True)
        return (x - mu) * jax.lax.rsqrt(var + 1e-5) * g + b

    x1 = ln(qv + refined, p["g1"], p["bt1"])
    ff = mm(jnp.maximum(mm(x1, p["w1"]) + p["b1"], 0.0), p["w2"]) + p["b2"]
    x2 = ln(x1 + ff, p["g2"], p["bt2"])

    qproto = mm(x2, p["wp"]) + p["bp"]
    cproto = mm(class_proto, p["wp"]) + p["bp"]
    return qproto, cproto


# -----------------------------------------------------------------------------
if __name__ == "__main__":
    B, N, D, H = 16, 8, 128, 8

    root = jax.random.PRNGKey(0)
    k_sup, k_qry, k_par = jax.random.split(root, 3)
    support = jax.random.normal(k_sup, (B, N, D), jnp.float32)
    queries = jax.random.normal(k_qry, (B, 1, D), jnp.float32)
    params = make_params(k_par, D, H)

    packed = pack_params(params)   # weight fusion/casts hoisted out of hot path
    fwd = jax.jit(functools.partial(cross_attention_forward, num_heads=H))
    qproto, cproto = fwd(support, queries, packed)
    jax.block_until_ready((qproto, cproto))

    # Tight check vs a reference twin that also feeds bf16 into its matmuls and
    # folds mwq like the kernel; loose sanity check vs the pure-f32 reference
    # (original PyTorch structure) bounding total bf16 drift.
    qref_bf, cref_bf = reference_forward(support, queries, params, H,
                                         jnp.bfloat16, fuse_mq=True)
    qref_f32, cref_f32 = reference_forward(support, queries, params, H, jnp.float32)

    assert jnp.allclose(qproto, qref_bf, atol=5e-2, rtol=5e-2), "query_prototype mismatch (bf16 ref)"
    assert jnp.allclose(cproto, cref_bf, atol=5e-2, rtol=5e-2), "class_prototype mismatch (bf16 ref)"
    assert jnp.allclose(qproto, qref_f32, atol=1e-1, rtol=1e-1), "query_prototype drift vs f32 ref"
    assert jnp.allclose(cproto, cref_f32, atol=1e-1, rtol=1e-1), "class_prototype drift vs f32 ref"

    print("KERNEL_OK")
</pallas_src>

<mosaic_0001>
module attributes {stable_mosaic.version = 11 : i64} {
  func.func @_cross_attn_kernel(%arg0: i32, %arg1: memref<16x8x128xf32, #tpu.memory_space<vmem>>, %arg2: memref<16x128xf32, #tpu.memory_space<vmem>>, %arg3: memref<128x512xbf16, #tpu.memory_space<vmem>>, %arg4: memref<1x512xf32, #tpu.memory_space<vmem>>, %arg5: memref<128x384xbf16, #tpu.memory_space<vmem>>, %arg6: memref<1x384xf32, #tpu.memory_space<vmem>>, %arg7: memref<128x128xbf16, #tpu.memory_space<vmem>>, %arg8: memref<128x512xbf16, #tpu.memory_space<vmem>>, %arg9: memref<1x512xf32, #tpu.memory_space<vmem>>, %arg10: memref<512x128xbf16, #tpu.memory_space<vmem>>, %arg11: memref<128x128xbf16, #tpu.memory_space<vmem>>, %arg12: memref<8x128xf32, #tpu.memory_space<vmem>>, %arg13: memref<128x8xbf16, #tpu.memory_space<vmem>>, %arg14: memref<8x128xbf16, #tpu.memory_space<vmem>>, %arg15: memref<16x128xf32, #tpu.memory_space<vmem>>, %arg16: memref<16x128xf32, #tpu.memory_space<vmem>>) attributes {dimension_semantics = [#tpu.dimension_semantics<parallel>], iteration_bounds = array<i64: 1>, scalar_prefetch = 0 : i64, scratch_operands = 0 : i64, tpu.core_type = #tpu.core_type<tc>, window_params = [{transform_indices = @transform_0, window_bounds = array<i64: 16, 8, 128>}, {transform_indices = @transform_1, window_bounds = array<i64: 16, 128>}, {pipeline_mode = #tpu.pipeline_mode<synchronous>, transform_indices = @transform_2, window_bounds = array<i64: 128, 512>}, {pipeline_mode = #tpu.pipeline_mode<synchronous>, transform_indices = @transform_3, window_bounds = array<i64: 1, 512>}, {pipeline_mode = #tpu.pipeline_mode<synchronous>, transform_indices = @transform_4, window_bounds = array<i64: 128, 384>}, {pipeline_mode = #tpu.pipeline_mode<synchronous>, transform_indices = @transform_5, window_bounds = array<i64: 1, 384>}, {pipeline_mode = #tpu.pipeline_mode<synchronous>, transform_indices = @transform_6, window_bounds = array<i64: 128, 128>}, {pipeline_mode = #tpu.pipeline_mode<synchronous>, transform_indices = @transform_7, window_bounds = array<i64: 128, 512>}, {pipeline_mode = #tpu.pipeline_mode<synchronous>, transform_indices = @transform_8, window_bounds = array<i64: 1, 512>}, {pipeline_mode = #tpu.pipeline_mode<synchronous>, transform_indices = @transform_9, window_bounds = array<i64: 512, 128>}, {pipeline_mode = #tpu.pipeline_mode<synchronous>, transform_indices = @transform_10, window_bounds = array<i64: 128, 128>}, {pipeline_mode = #tpu.pipeline_mode<synchronous>, transform_indices = @transform_11, window_bounds = array<i64: 8, 128>}, {pipeline_mode = #tpu.pipeline_mode<synchronous>, transform_indices = @transform_12, window_bounds = array<i64: 128, 8>}, {pipeline_mode = #tpu.pipeline_mode<synchronous>, transform_indices = @transform_13, window_bounds = array<i64: 8, 128>}, {transform_indices = @transform_14, window_bounds = array<i64: 16, 128>}, {transform_indices = @transform_15, window_bounds = array<i64: 16, 128>}]} {
    %c0 = arith.constant 0 : index
    %c0_0 = arith.constant 0 : index
    %0 = vector.load %arg12[%c0, %c0_0] : memref<8x128xf32, #tpu.memory_space<vmem>>, vector<1x128xf32>
    %c1 = arith.constant 1 : index
    %c0_1 = arith.constant 0 : index
    %1 = vector.load %arg12[%c1, %c0_1] : memref<8x128xf32, #tpu.memory_space<vmem>>, vector<1x128xf32>
    %c2 = arith.constant 2 : index
    %c0_2 = arith.constant 0 : index
    %2 = vector.load %arg12[%c2, %c0_2] : memref<8x128xf32, #tpu.memory_space<vmem>>, vector<1x128xf32>
    %c3 = arith.constant 3 : index
    %c0_3 = arith.constant 0 : index
    %3 = vector.load %arg12[%c3, %c0_3] : memref<8x128xf32, #tpu.memory_space<vmem>>, vector<1x128xf32>
    %c4 = arith.constant 4 : index
    %c0_4 = arith.constant 0 : index
    %4 = vector.load %arg12[%c4, %c0_4] : memref<8x128xf32, #tpu.memory_space<vmem>>, vector<1x128xf32>
    %c5 = arith.constant 5 : index
    %c0_5 = arith.constant 0 : index
    %5 = vector.load %arg12[%c5, %c0_5] : memref<8x128xf32, #tpu.memory_space<vmem>>, vector<1x128xf32>
    %c6 = arith.constant 6 : index
    %c0_6 = arith.constant 0 : index
    %6 = vector.load %arg12[%c6, %c0_6] : memref<8x128xf32, #tpu.memory_space<vmem>>, vector<1x128xf32>
    %c0_7 = arith.constant 0 : index
    %c0_8 = arith.constant 0 : index
    %c0_9 = arith.constant 0 : index
    %7 = vector.load %arg1[%c0_7, %c0_8, %c0_9] : memref<16x8x128xf32, #tpu.memory_space<vmem>>, vector<16x8x128xf32>
    %8 = vector.shape_cast %7 : vector<16x8x128xf32> to vector<128x128xf32>
    %9 = arith.truncf %8 : vector<128x128xf32> to vector<128x128xbf16>
    %c0_10 = arith.constant 0 : index
    %c0_11 = arith.constant 0 : index
    %10 = vector.load %arg2[%c0_10, %c0_11] : memref<16x128xf32, #tpu.memory_space<vmem>>, vector<16x128xf32>
    %11 = arith.truncf %10 : vector<16x128xf32> to vector<16x128xbf16>
    %c0_12 = arith.constant 0 : index
    %c0_13 = arith.constant 0 : index
    %12 = vector.load %arg3[%c0_12, %c0_13] : memref<128x512xbf16, #tpu.memory_space<vmem>>, vector<128x512xbf16>
    %cst = arith.constant dense<0.000000e+00> : vector<128x512xf32>
    %13 = tpu.matmul %9, %12, %cst {dimension_numbers = #tpu.dot_dimension_numbers<[1], [0], [0], [1], [0, 0, 1, 1], [], []>} : vector<128x128xbf16>, vector<128x512xbf16>, vector<128x512xf32> -> vector<128x512xf32>
    %c0_14 = arith.constant 0 : index
    %c0_15 = arith.constant 0 : index
    %14 = vector.load %arg4[%c0_14, %c0_15] : memref<1x512xf32, #tpu.memory_space<vmem>>, vector<1x512xf32>
    %15 = vector.broadcast %14 : vector<1x512xf32> to vector<128x512xf32>
    %16 = arith.addf %13, %15 : vector<128x512xf32>
    %c0_16 = arith.constant 0 : index
    %c0_17 = arith.constant 0 : index
    %17 = vector.load %arg5[%c0_16, %c0_17] : memref<128x384xbf16, #tpu.memory_space<vmem>>, vector<128x384xbf16>
    %cst_18 = arith.constant dense<0.000000e+00> : vector<16x384xf32>
    %18 = tpu.matmul %11, %17, %cst_18 {dimension_numbers = #tpu.dot_dimension_numbers<[1], [0], [0], [1], [0, 0, 1, 1], [], []>} : vector<16x128xbf16>, vector<128x384xbf16>, vector<16x384xf32> -> vector<16x384xf32>
    %c0_19 = arith.constant 0 : index
    %c0_20 = arith.constant 0 : index
    %19 = vector.load %arg6[%c0_19, %c0_20] : memref<1x384xf32, #tpu.memory_space<vmem>>, vector<1x384xf32>
    %20 = vector.broadcast %19 : vector<1x384xf32> to vector<16x384xf32>
    %21 = arith.addf %18, %20 : vector<16x384xf32>
    %22 = vector.extract_strided_slice %16 {offsets = [0, 0], sizes = [128, 128], strides = [1, 1]} : vector<128x512xf32> to vector<128x128xf32>
    %23 = vector.shape_cast %22 : vector<128x128xf32> to vector<16x8x128xf32>
    %24 = vector.extract_strided_slice %16 {offsets = [0, 128], sizes = [128, 128], strides = [1, 1]} : vector<128x512xf32> to vector<128x128xf32>
    %25 = vector.shape_cast %24 : vector<128x128xf32> to vector<16x8x128xf32>
    %26 = vector.extract_strided_slice %16 {offsets = [0, 256], sizes = [128, 128], strides = [1, 1]} : vector<128x512xf32> to vector<128x128xf32>
    %27 = vector.shape_cast %26 : vector<128x128xf32> to vector<16x8x128xf32>
    %28 = vector.extract_strided_slice %16 {offsets = [0, 384], sizes = [128, 128], strides = [1, 1]} : vector<128x512xf32> to vector<128x128xf32>
    %29 = vector.shape_cast %28 : vector<128x128xf32> to vector<16x8x128xf32>
    %30 = vector.extract_strided_slice %21 {offsets = [0, 0], sizes = [16, 128], strides = [1, 1]} : vector<16x384xf32> to vector<16x128xf32>
    %31 = vector.extract_strided_slice %21 {offsets = [0, 128], sizes = [16, 128], strides = [1, 1]} : vector<16x384xf32> to vector<16x128xf32>
    %32 = vector.extract_strided_slice %21 {offsets = [0, 256], sizes = [16, 128], strides = [1, 1]} : vector<16x384xf32> to vector<16x128xf32>
    %33 = vector.shape_cast %30 : vector<16x128xf32> to vector<16x1x128xf32>
    %34 = vector.broadcast %33 : vector<16x1x128xf32> to vector<16x8x128xf32>
    %35 = arith.mulf %23, %34 : vector<16x8x128xf32>
    %cst_21 = arith.constant dense<0.000000e+00> : vector<16x8xf32>
    %36 = vector.multi_reduction <add>, %35, %cst_21 [2] : vector<16x8x128xf32> to vector<16x8xf32>
    %cst_22 = arith.constant 0.0883883461 : f32
    %37 = vector.broadcast %cst_22 : f32 to vector<16x8xf32>
    %38 = arith.mulf %36, %37 : vector<16x8xf32>
    %cst_23 = arith.constant dense<0xFF800000> : vector<16xf32>
    %39 = vector.multi_reduction <maximumf>, %38, %cst_23 [1] : vector<16x8xf32> to vector<16xf32>
    %40 = vector.shape_cast %39 : vector<16xf32> to vector<16x1xf32>
    %41 = vector.broadcast %40 : vector<16x1xf32> to vector<16x8xf32>
    %42 = arith.subf %38, %41 : vector<16x8xf32>
    %43 = math.exp %42 : vector<16x8xf32>
    %cst_24 = arith.constant dense<0.000000e+00> : vector<16xf32>
    %44 = vector.multi_reduction <add>, %43, %cst_24 [1] : vector<16x8xf32> to vector<16xf32>
    %45 = vector.shape_cast %44 : vector<16xf32> to vector<16x1xf32>
    %46 = vector.broadcast %45 : vector<16x1xf32> to vector<16x8xf32>
    %47 = arith.divf %43, %46 : vector<16x8xf32>
    %48 = vector.shape_cast %47 : vector<16x8xf32> to vector<16x8x1xf32>
    %49 = vector.broadcast %48 : vector<16x8x1xf32> to vector<16x8x128xf32>
    %50 = arith.mulf %49, %25 : vector<16x8x128xf32>
    %cst_25 = arith.constant dense<0.000000e+00> : vector<16x128xf32>
    %51 = vector.multi_reduction <add>, %50, %cst_25 [1] : vector<16x8x128xf32> to vector<16x128xf32>
    %52 = vector.shape_cast %32 : vector<16x128xf32> to vector<16x1x128xf32>
    %53 = vector.broadcast %52 : vector<16x1x128xf32> to vector<16x8x128xf32>
    %54 = arith.mulf %27, %53 : vector<16x8x128xf32>
    %55 = vector.shape_cast %54 : vector<16x8x128xf32> to vector<128x128xf32>
    %56 = arith.truncf %55 : vector<128x128xf32> to vector<128x128xbf16>
    %c0_26 = arith.constant 0 : index
    %c0_27 = arith.constant 0 : index
    %57 = vector.load %arg13[%c0_26, %c0_27] : memref<128x8xbf16, #tpu.memory_space<vmem>>, vector<128x8xbf16>
    %cst_28 = arith.constant dense<0.000000e+00> : vector<128x8xf32>
    %58 = tpu.matmul %56, %57, %cst_28 {dimension_numbers = #tpu.dot_dimension_numbers<[1], [0], [0], [1], [0, 0, 1, 1], [], []>} : vector<128x128xbf16>, vector<128x8xbf16>, vector<128x8xf32> -> vector<128x8xf32>
    %59 = vector.shape_cast %58 : vector<128x8xf32> to vector<16x8x8xf32>
    %cst_29 = arith.constant 2.500000e-01 : f32
    %60 = vector.broadcast %cst_29 : f32 to vector<16x8x8xf32>
    %61 = arith.mulf %59, %60 : vector<16x8x8xf32>
    %cst_30 = arith.constant dense<0xFF800000> : vector<16x8xf32>
    %62 = vector.multi_reduction <maximumf>, %61, %cst_30 [1] : vector<16x8x8xf32> to vector<16x8xf32>
    %63 = vector.shape_cast %62 : vector<16x8xf32> to vector<16x1x8xf32>
    %64 = vector.broadcast %63 : vector<16x1x8xf32> to vector<16x8x8xf32>
    %65 = arith.subf %61, %64 : vector<16x8x8xf32>
    %66 = math.exp %65 : vector<16x8x8xf32>
    %cst_31 = arith.constant dense<0.000000e+00> : vector<16x8xf32>
    %67 = vector.multi_reduction <add>, %66, %cst_31 [1] : vector<16x8x8xf32> to vector<16x8xf32>
    %68 = vector.shape_cast %67 : vector<16x8xf32> to vector<16x1x8xf32>
    %69 = vector.broadcast %68 : vector<16x1x8xf32> to vector<16x8x8xf32>
    %70 = arith.divf %66, %69 : vector<16x8x8xf32>
    %71 = vector.shape_cast %70 : vector<16x8x8xf32> to vector<128x8xf32>
    %72 = arith.truncf %71 : vector<128x8xf32> to vector<128x8xbf16>
    %c0_32 = arith.constant 0 : index
    %c0_33 = arith.constant 0 : index
    %73 = vector.load %arg14[%c0_32, %c0_33] : memref<8x128xbf16, #tpu.memory_space<vmem>>, vector<8x128xbf16>
    %cst_34 = arith.constant dense<0.000000e+00> : vector<128x128xf32>
    %74 = tpu.matmul %72, %73, %cst_34 {dimension_numbers = #tpu.dot_dimension_numbers<[1], [0], [0], [1], [0, 0, 1, 1], [], []>} : vector<128x8xbf16>, vector<8x128xbf16>, vector<128x128xf32> -> vector<128x128xf32>
    %75 = vector.shape_cast %74 : vector<128x128xf32> to vector<16x8x128xf32>
    %76 = arith.mulf %75, %29 : vector<16x8x128xf32>
    %cst_35 = arith.constant dense<0.000000e+00> : vector<16x128xf32>
    %77 = vector.multi_reduction <add>, %76, %cst_35 [1] : vector<16x8x128xf32> to vector<16x128xf32>
    %78 = arith.truncf %77 : vector<16x128xf32> to vector<16x128xbf16>
    %c0_36 = arith.constant 0 : index
    %c0_37 = arith.constant 0 : index
    %79 = vector.load %arg7[%c0_36, %c0_37] : memref<128x128xbf16, #tpu.memory_space<vmem>>, vector<128x128xbf16>
    %cst_38 = arith.constant dense<0.000000e+00> : vector<16x128xf32>
    %80 = tpu.matmul %78, %79, %cst_38 {dimension_numbers = #tpu.dot_dimension_numbers<[1], [0], [0], [1], [0, 0, 1, 1], [], []>} : vector<16x128xbf16>, vector<128x128xbf16>, vector<16x128xf32> -> vector<16x128xf32>
    %81 = vector.broadcast %4 : vector<1x128xf32> to vector<16x128xf32>
    %82 = arith.addf %80, %81 : vector<16x128xf32>
    %83 = arith.addf %31, %82 : vector<16x128xf32>
    %cst_39 = arith.constant dense<0.000000e+00> : vector<16xf32>
    %84 = vector.multi_reduction <add>, %83, %cst_39 [1] : vector<16x128xf32> to vector<16xf32>
    %85 = vector.shape_cast %84 : vector<16xf32> to vector<16x1xf32>
    %cst_40 = arith.constant 1.280000e+02 : f32
    %86 = vector.broadcast %cst_40 : f32 to vector<16x1xf32>
    %87 = arith.divf %85, %86 : vector<16x1xf32>
    %88 = vector.broadcast %87 : vector<16x1xf32> to vector<16x128xf32>
    %89 = arith.subf %83, %88 : vector<16x128xf32>
    %90 = arith.mulf %89, %89 : vector<16x128xf32>
    %cst_41 = arith.constant dense<0.000000e+00> : vector<16xf32>
    %91 = vector.multi_reduction <add>, %90, %cst_41 [1] : vector<16x128xf32> to vector<16xf32>
    %92 = vector.shape_cast %91 : vector<16xf32> to vector<16x1xf32>
    %cst_42 = arith.constant 1.280000e+02 : f32
    %93 = vector.broadcast %cst_42 : f32 to vector<16x1xf32>
    %94 = arith.divf %92, %93 : vector<16x1xf32>
    %cst_43 = arith.constant 9.99999974E-6 : f32
    %95 = vector.broadcast %cst_43 : f32 to vector<16x1xf32>
    %96 = arith.addf %94, %95 : vector<16x1xf32>
    %97 = math.rsqrt %96 : vector<16x1xf32>
    %98 = vector.broadcast %97 : vector<16x1xf32> to vector<16x128xf32>
    %99 = arith.mulf %89, %98 : vector<16x128xf32>
    %100 = vector.broadcast %0 : vector<1x128xf32> to vector<16x128xf32>
    %101 = arith.mulf %99, %100 : vector<16x128xf32>
    %102 = vector.broadcast %1 : vector<1x128xf32> to vector<16x128xf32>
    %103 = arith.addf %101, %102 : vector<16x128xf32>
    %104 = arith.truncf %103 : vector<16x128xf32> to vector<16x128xbf16>
    %c0_44 = arith.constant 0 : index
    %c0_45 = arith.constant 0 : index
    %105 = vector.load %arg8[%c0_44, %c0_45] : memref<128x512xbf16, #tpu.memory_space<vmem>>, vector<128x512xbf16>
    %cst_46 = arith.constant dense<0.000000e+00> : vector<16x512xf32>
    %106 = tpu.matmul %104, %105, %cst_46 {dimension_numbers = #tpu.dot_dimension_numbers<[1], [0], [0], [1], [0, 0, 1, 1], [], []>} : vector<16x128xbf16>, vector<128x512xbf16>, vector<16x512xf32> -> vector<16x512xf32>
    %c0_47 = arith.constant 0 : index
    %c0_48 = arith.constant 0 : index
    %107 = vector.load %arg9[%c0_47, %c0_48] : memref<1x512xf32, #tpu.memory_space<vmem>>, vector<1x512xf32>
    %108 = vector.broadcast %107 : vector<1x512xf32> to vector<16x512xf32>
    %109 = arith.addf %106, %108 : vector<16x512xf32>
    %cst_49 = arith.constant 0.000000e+00 : f32
    %110 = vector.broadcast %cst_49 : f32 to vector<16x512xf32>
    %111 = arith.maximumf %109, %110 : vector<16x512xf32>
    %112 = arith.truncf %111 : vector<16x512xf32> to vector<16x512xbf16>
    %c0_50 = arith.constant 0 : index
    %c0_51 = arith.constant 0 : index
    %113 = vector.load %arg10[%c0_50, %c0_51] : memref<512x128xbf16, #tpu.memory_space<vmem>>, vector<512x128xbf16>
    %cst_52 = arith.constant dense<0.000000e+00> : vector<16x128xf32>
    %114 = tpu.matmul %112, %113, %cst_52 {dimension_numbers = #tpu.dot_dimension_numbers<[1], [0], [0], [1], [0, 0, 1, 1], [], []>} : vector<16x512xbf16>, vector<512x128xbf16>, vector<16x128xf32> -> vector<16x128xf32>
    %115 = vector.broadcast %5 : vector<1x128xf32> to vector<16x128xf32>
    %116 = arith.addf %114, %115 : vector<16x128xf32>
    %117 = arith.addf %103, %116 : vector<16x128xf32>
    %cst_53 = arith.constant dense<0.000000e+00> : vector<16xf32>
    %118 = vector.multi_reduction <add>, %117, %cst_53 [1] : vector<16x128xf32> to vector<16xf32>
    %119 = vector.shape_cast %118 : vector<16xf32> to vector<16x1xf32>
    %cst_54 = arith.constant 1.280000e+02 : f32
    %120 = vector.broadcast %cst_54 : f32 to vector<16x1xf32>
    %121 = arith.divf %119, %120 : vector<16x1xf32>
    %122 = vector.broadcast %121 : vector<16x1xf32> to vector<16x128xf32>
    %123 = arith.subf %117, %122 : vector<16x128xf32>
    %124 = arith.mulf %123, %123 : vector<16x128xf32>
    %cst_55 = arith.constant dense<0.000000e+00> : vector<16xf32>
    %125 = vector.multi_reduction <add>, %124, %cst_55 [1] : vector<16x128xf32> to vector<16xf32>
    %126 = vector.shape_cast %125 : vector<16xf32> to vector<16x1xf32>
    %cst_56 = arith.constant 1.280000e+02 : f32
    %127 = vector.broadcast %cst_56 : f32 to vector<16x1xf32>
    %128 = arith.divf %126, %127 : vector<16x1xf32>
    %cst_57 = arith.constant 9.99999974E-6 : f32
    %129 = vector.broadcast %cst_57 : f32 to vector<16x1xf32>
    %130 = arith.addf %128, %129 : vector<16x1xf32>
    %131 = math.rsqrt %130 : vector<16x1xf32>
    %132 = vector.broadcast %131 : vector<16x1xf32> to vector<16x128xf32>
    %133 = arith.mulf %123, %132 : vector<16x128xf32>
    %134 = vector.broadcast %2 : vector<1x128xf32> to vector<16x128xf32>
    %135 = arith.mulf %133, %134 : vector<16x128xf32>
    %136 = vector.broadcast %3 : vector<1x128xf32> to vector<16x128xf32>
    %137 = arith.addf %135, %136 : vector<16x128xf32>
    %138 = tpu.concatenate %137, %51 in 0 : vector<16x128xf32>, vector<16x128xf32> -> vector<32x128xf32>
    %139 = arith.truncf %138 : vector<32x128xf32> to vector<32x128xbf16>
    %c0_58 = arith.constant 0 : index
    %c0_59 = arith.constant 0 : index
    %140 = vector.load %arg11[%c0_58, %c0_59] : memref<128x128xbf16, #tpu.memory_space<vmem>>, vector<128x128xbf16>
    %cst_60 = arith.constant dense<0.000000e+00> : vector<32x128xf32>
    %141 = tpu.matmul %139, %140, %cst_60 {dimension_numbers = #tpu.dot_dimension_numbers<[1], [0], [0], [1], [0, 0, 1, 1], [], []>} : vector<32x128xbf16>, vector<128x128xbf16>, vector<32x128xf32> -> vector<32x128xf32>
    %142 = vector.broadcast %6 : vector<1x128xf32> to vector<32x128xf32>
    %143 = arith.addf %141, %142 : vector<32x128xf32>
    %144 = vector.extract_strided_slice %143 {offsets = [0, 0], sizes = [16, 128], strides = [1, 1]} : vector<32x128xf32> to vector<16x128xf32>
    %c0_61 = arith.constant 0 : index
    %c0_62 = arith.constant 0 : index
    %145 = vector.load %arg15[%c0_61, %c0_62] : memref<16x128xf32, #tpu.memory_space<vmem>>, vector<16x128xf32>
    tpu.vector_store %arg15[%c0_61, %c0_62], %144 {strides = array<i32>} : memref<16x128xf32, #tpu.memory_space<vmem>>, vector<16x128xf32>,
    %146 = vector.extract_strided_slice %143 {offsets = [16, 0], sizes = [16, 128], strides = [1, 1]} : vector<32x128xf32> to vector<16x128xf32>
    %c0_63 = arith.constant 0 : index
    %c0_64 = arith.constant 0 : index
    %147 = vector.load %arg16[%c0_63, %c0_64] : memref<16x128xf32, #tpu.memory_space<vmem>>, vector<16x128xf32>
    tpu.vector_store %arg16[%c0_63, %c0_64], %146 {strides = array<i32>} : memref<16x128xf32, #tpu.memory_space<vmem>>, vector<16x128xf32>,
    return
  }
  func.func @transform_0(%arg0: i32) -> (i32, i32, i32) {
    %c0_i32 = arith.constant 0 : i32
    %c0_i32_0 = arith.constant 0 : i32
    %c0_i32_1 = arith.constant 0 : i32
    return %arg0, %c0_i32, %c0_i32_0 : i32, i32, i32
  }
  func.func @transform_1(%arg0: i32) -> (i32, i32) {
    %c0_i32 = arith.constant 0 : i32
    %c0_i32_0 = arith.constant 0 : i32
    return %arg0, %c0_i32 : i32, i32
  }
  func.func @transform_2(%arg0: i32) -> (i32, i32) {
    %c0_i32 = arith.constant 0 : i32
    %c0_i32_0 = arith.constant 0 : i32
    %c0_i32_1 = arith.constant 0 : i32
    return %c0_i32, %c0_i32_0 : i32, i32
  }
  func.func @transform_3(%arg0: i32) -> (i32, i32) {
    %c0_i32 = arith.constant 0 : i32
    %c0_i32_0 = arith.constant 0 : i32
    %c0_i32_1 = arith.constant 0 : i32
    return %c0_i32, %c0_i32_0 : i32, i32
  }
  func.func @transform_4(%arg0: i32) -> (i32, i32) {
    %c0_i32 = arith.constant 0 : i32
    %c0_i32_0 = arith.constant 0 : i32
    %c0_i32_1 = arith.constant 0 : i32
    return %c0_i32, %c0_i32_0 : i32, i32
  }
  func.func @transform_5(%arg0: i32) -> (i32, i32) {
    %c0_i32 = arith.constant 0 : i32
    %c0_i32_0 = arith.constant 0 : i32
    %c0_i32_1 = arith.constant 0 : i32
    return %c0_i32, %c0_i32_0 : i32, i32
  }
  func.func @transform_6(%arg0: i32) -> (i32, i32) {
    %c0_i32 = arith.constant 0 : i32
    %c0_i32_0 = arith.constant 0 : i32
    %c0_i32_1 = arith.constant 0 : i32
    return %c0_i32, %c0_i32_0 : i32, i32
  }
  func.func @transform_7(%arg0: i32) -> (i32, i32) {
    %c0_i32 = arith.constant 0 : i32
    %c0_i32_0 = arith.constant 0 : i32
    %c0_i32_1 = arith.constant 0 : i32
    return %c0_i32, %c0_i32_0 : i32, i32
  }
  func.func @transform_8(%arg0: i32) -> (i32, i32) {
    %c0_i32 = arith.constant 0 : i32
    %c0_i32_0 = arith.constant 0 : i32
    %c0_i32_1 = arith.constant 0 : i32
    return %c0_i32, %c0_i32_0 : i32, i32
  }
  func.func @transform_9(%arg0: i32) -> (i32, i32) {
    %c0_i32 = arith.constant 0 : i32
    %c0_i32_0 = arith.constant 0 : i32
    %c0_i32_1 = arith.constant 0 : i32
    return %c0_i32, %c0_i32_0 : i32, i32
  }
  func.func @transform_10(%arg0: i32) -> (i32, i32) {
    %c0_i32 = arith.constant 0 : i32
    %c0_i32_0 = arith.constant 0 : i32
    %c0_i32_1 = arith.constant 0 : i32
    return %c0_i32, %c0_i32_0 : i32, i32
  }
  func.func @transform_11(%arg0: i32) -> (i32, i32) {
    %c0_i32 = arith.constant 0 : i32
    %c0_i32_0 = arith.constant 0 : i32
    %c0_i32_1 = arith.constant 0 : i32
    return %c0_i32, %c0_i32_0 : i32, i32
  }
  func.func @transform_12(%arg0: i32) -> (i32, i32) {
    %c0_i32 = arith.constant 0 : i32
    %c0_i32_0 = arith.constant 0 : i32
    %c0_i32_1 = arith.constant 0 : i32
    return %c0_i32, %c0_i32_0 : i32, i32
  }
  func.func @transform_13(%arg0: i32) -> (i32, i32) {
    %c0_i32 = arith.constant 0 : i32
    %c0_i32_0 = arith.constant 0 : i32
    %c0_i32_1 = arith.constant 0 : i32
    return %c0_i32, %c0_i32_0 : i32, i32
  }
  func.func @transform_14(%arg0: i32) -> (i32, i32) {
    %c0_i32 = arith.constant 0 : i32
    %c0_i32_0 = arith.constant 0 : i32
    return %arg0, %c0_i32 : i32, i32
  }
  func.func @transform_15(%arg0: i32) -> (i32, i32) {
    %c0_i32 = arith.constant 0 : i32
    %c0_i32_0 = arith.constant 0 : i32
    return %arg0, %c0_i32 : i32, i32
  }
}

</mosaic_0001>

<llo_original>
// kernel: cross_attention_forward.1
$region0: #{cross_attention_forward.1}
  #allocation0 [shape = 'u32[]', space=smem, size = 0x4, offset = 0x4, fixed_abs, tag = 'smem constant byte address 0x4 - core index']
  #allocation1 [shape = 'u32[144,128]{1,0:T(1,128)}', space=vmem, size = 0x12000, scoped, tag = 'internal scratch']
  %s0 = inlined_call_operand.hbm [shape: f32[16,8,128], index: 0, kind: input, shape index: {}]
  %s1 = inlined_call_operand.vmem [shape: f32[16,128], index: 1, kind: input, shape index: {}]
  %s2 = inlined_call_operand.hbm [shape: bf16[128,512], index: 2, kind: input, shape index: {}]
  %s3 = inlined_call_operand.vmem [shape: f32[1,512], index: 3, kind: input, shape index: {}]
  %s4 = inlined_call_operand.hbm [shape: bf16[128,384], index: 4, kind: input, shape index: {}]
  %s5 = inlined_call_operand.hbm [shape: f32[1,384], index: 5, kind: input, shape index: {}]
  %s6 = inlined_call_operand.vmem [shape: bf16[128,128], index: 6, kind: input, shape index: {}]
  %s7 = inlined_call_operand.hbm [shape: bf16[128,512], index: 7, kind: input, shape index: {}]
  %s8 = inlined_call_operand.vmem [shape: f32[1,512], index: 8, kind: input, shape index: {}]
  %s9 = inlined_call_operand.hbm [shape: bf16[512,128], index: 9, kind: input, shape index: {}]
  %s10 = inlined_call_operand.hbm [shape: bf16[128,128], index: 10, kind: input, shape index: {}]
  %s11 = inlined_call_operand.vmem [shape: f32[8,128], index: 11, kind: input, shape index: {}]
  %s12 = inlined_call_operand.vmem [shape: bf16[128,8], index: 12, kind: input, shape index: {}]
  %s13 = inlined_call_operand.hbm [shape: bf16[8,128], index: 13, kind: input, shape index: {}]
  %s14 = inlined_call_operand.hbm [shape: f32[16,128], index: 14, kind: output, shape index: {0}]
  %s15 = inlined_call_operand.hbm [shape: f32[16,128], index: 15, kind: output, shape index: {1}]
  %16 = xla_tuple %s14, %s15
  %s17 = sld [smem:[#allocation0]]
  $region106: #{cross_attention_forward.1} parent=0
    _
  %s19 = ssub.s32 1, %s17
  %s20 = scalar_select 0, %s19, %s17
  $region1: #{cross_attention_forward.1} parent=0
    #allocation2 [shape = 'u8[65536]{0}', space=vmem, size = 0x10000, scoped, tag = 'input window, operand 0, single buffered']
    #allocation3 [shape = 's32[1]{0}', space=sflag, size = 0x4, scoped, tag = 'scoped memory for cross_attention_forward.1']
    #allocation4 [shape = 's32[1]{0}', space=sflag, size = 0x4, scoped, tag = 'scoped memory for cross_attention_forward.1']
    #allocation5 [shape = 'u8[131072]{0}', space=vmem, size = 0x20000, scoped, tag = 'input window, operand 2, single buffered']
    #allocation6 [shape = 's32[1]{0}', space=sflag, size = 0x4, scoped, tag = 'scoped memory for cross_attention_forward.1']
    #allocation7 [shape = 'u8[98304]{0}', space=vmem, size = 0x18000, scoped, tag = 'input window, operand 4, single buffered']
    #allocation8 [shape = 'u8[1536]{0}', space=vmem, size = 0x800, scoped, tag = 'input window, operand 5, single buffered']
    #allocation9 [shape = 's32[1]{0}', space=sflag, size = 0x4, scoped, tag = 'scoped memory for cross_attention_forward.1']
    #allocation10 [shape = 'u8[131072]{0}', space=vmem, size = 0x20000, scoped, tag = 'input window, operand 7, single buffered']
    #allocation11 [shape = 'u8[131072]{0}', space=vmem, size = 0x20000, scoped, tag = 'input window, operand 9, single buffered']
    #allocation12 [shape = 's32[1]{0}', space=sflag, size = 0x4, scoped, tag = 'scoped memory for cross_attention_forward.1']
    #allocation13 [shape = 'u8[32768]{0}', space=vmem, size = 0x8000, scoped, tag = 'input window, operand 10, single buffered']
    #allocation14 [shape = 'u8[2048]{0}', space=vmem, size = 0x800, scoped, tag = 'input window, operand 13, single buffered']
    #allocation15 [shape = 's32[1]{0}', space=sflag, size = 0x4, scoped, tag = 'scoped memory for cross_attention_forward.1']
    #allocation16 [shape = 'u8[8192]{0}', space=vmem, size = 0x2000, scoped, tag = 'output window, operand 0, single buffered']
    #allocation17 [shape = 'u8[8192]{0}', space=vmem, size = 0x2000, scoped, tag = 'output window, operand 1, single buffered']
    #allocation18 [shape = 's32[1]{0}', space=sflag, size = 0x4, scoped, tag = 'scoped memory for cross_attention_forward.1']
    %21 = vsyncpa [#allocation3], 0
    %22 = vsyncpa [#allocation6], 0
    %23 = vsyncpa [#allocation9], 0
    %24 = vsyncpa [#allocation12], 0
    %25 = vsyncpa [#allocation15], 0
    %26 = vsyncpa [#allocation4], 0
    %27 = vsyncpa [#allocation18], 0
    // Predicated region
    $region2: #{cross_attention_forward.1} parent=1 // pred_check
      _
    $region3: #{cross_attention_forward.1} parent=1 // pred_check_branch
      %29 = sbr.rel (0) target = $region5
    $region4: #{cross_attention_forward.1} parent=1 // pred_region
      %s31 = ssub.s32 2048, 2048
      %32 = vsyncadd [#allocation3], %s31
      %s33 = sshll.u32 [#allocation2], 4
      %s34 = int_to_ptr.vmem [resolvable:$true] %s33
      %39 = dma.hbm_to_vmem [thread:$0]  %s0, 2048, %s34, [#allocation3], 128, 128, 8
    $region5: #{cross_attention_forward.1} parent=1 // pred_fallthru
      _
    // Predicated region
    $region6: #{cross_attention_forward.1} parent=1 // pred_check
      _
    $region7: #{cross_attention_forward.1} parent=1 // pred_check_branch
      %41 = sbr.rel (0) target = $region9
    $region8: #{cross_attention_forward.1} parent=1 // pred_region
      _
    $region9: #{cross_attention_forward.1} parent=1 // pred_fallthru
      _
    // Predicated region
    $region10: #{cross_attention_forward.1} parent=1 // pred_check
      _
    $region11: #{cross_attention_forward.1} parent=1 // pred_check_branch
      %43 = sbr.rel (0) target = $region13
    $region12: #{cross_attention_forward.1} parent=1 // pred_region
      %s45 = ssub.s32 4096, 4096
      %46 = vsyncadd [#allocation6], %s45
      %s47 = sshll.u32 [#allocation5], 4
      %s48 = int_to_ptr.vmem [resolvable:$true] %s47
      %53 = dma.hbm_to_vmem [thread:$0]  %s2, 4096, %s48, [#allocation6], 256, 256, 16
    $region13: #{cross_attention_forward.1} parent=1 // pred_fallthru
      _
    // Predicated region
    $region14: #{cross_attention_forward.1} parent=1 // pred_check
      _
    $region15: #{cross_attention_forward.1} parent=1 // pred_check_branch
      %55 = sbr.rel (0) target = $region17
    $region16: #{cross_attention_forward.1} parent=1 // pred_region
      _
    $region17: #{cross_attention_forward.1} parent=1 // pred_fallthru
      _
    // Predicated region
    $region18: #{cross_attention_forward.1} parent=1 // pred_check
      _
    $region19: #{cross_attention_forward.1} parent=1 // pred_check_branch
      %57 = sbr.rel (0) target = $region21
    $region20: #{cross_attention_forward.1} parent=1 // pred_region
      %s59 = ssub.s32 3072, 3072
      %60 = vsyncadd [#allocation6], %s59
      %s61 = sshll.u32 [#allocation7], 4
      %s62 = int_to_ptr.vmem [resolvable:$true] %s61
      %67 = dma.hbm_to_vmem [thread:$0]  %s4, 3072, %s62, [#allocation6], 192, 192, 12
    $region21: #{cross_attention_forward.1} parent=1 // pred_fallthru
      _
    // Predicated region
    $region22: #{cross_attention_forward.1} parent=1 // pred_check
      _
    $region23: #{cross_attention_forward.1} parent=1 // pred_check_branch
      %69 = sbr.rel (0) target = $region25
    $region24: #{cross_attention_forward.1} parent=1 // pred_region
      %s71 = ssub.s32 48, 48
      %72 = vsyncadd [#allocation9], %s71
      %s74 = sshll.u32 [#allocation8], 4
      %s75 = int_to_ptr.vmem [resolvable:$true] %s74
      %77 = dma.hbm_to_vmem [thread:$0]  %s5, 48, %s75, [#allocation9]
    $region25: #{cross_attention_forward.1} parent=1 // pred_fallthru
      _
    // Predicated region
    $region26: #{cross_attention_forward.1} parent=1 // pred_check
      _
    $region27: #{cross_attention_forward.1} parent=1 // pred_check_branch
      %79 = sbr.rel (0) target = $region29
    $region28: #{cross_attention_forward.1} parent=1 // pred_region
      _
    $region29: #{cross_attention_forward.1} parent=1 // pred_fallthru
      _
    // Predicated region
    $region30: #{cross_attention_forward.1} parent=1 // pred_check
      _
    $region31: #{cross_attention_forward.1} parent=1 // pred_check_branch
      %81 = sbr.rel (0) target = $region33
    $region32: #{cross_attention_forward.1} parent=1 // pred_region
      %s83 = ssub.s32 4096, 4096
      %84 = vsyncadd [#allocation9], %s83
      %s85 = sshll.u32 [#allocation10], 4
      %s86 = int_to_ptr.vmem [resolvable:$true] %s85
      %91 = dma.hbm_to_vmem [thread:$0]  %s7, 4096, %s86, [#allocation9], 256, 256, 16
    $region33: #{cross_attention_forward.1} parent=1 // pred_fallthru
      _
    // Predicated region
    $region34: #{cross_attention_forward.1} parent=1 // pred_check
      _
    $region35: #{cross_attention_forward.1} parent=1 // pred_check_branch
      %93 = sbr.rel (0) target = $region37
    $region36: #{cross_attention_forward.1} parent=1 // pred_region
      _
    $region37: #{cross_attention_forward.1} parent=1 // pred_fallthru
      _
    // Predicated region
    $region38: #{cross_attention_forward.1} parent=1 // pred_check
      _
    $region39: #{cross_attention_forward.1} parent=1 // pred_check_branch
      %95 = sbr.rel (0) target = $region41
    $region40: #{cross_attention_forward.1} parent=1 // pred_region
      %s97 = ssub.s32 4096, 4096
      %98 = vsyncadd [#allocation12], %s97
      %s99 = sshll.u32 [#allocation11], 4
      %s100 = int_to_ptr.vmem [resolvable:$true] %s99
      %105 = dma.hbm_to_vmem [thread:$0]  %s9, 4096, %s100, [#allocation12], 64, 64, 4
    $region41: #{cross_attention_forward.1} parent=1 // pred_fallthru
      _
    // Predicated region
    $region42: #{cross_attention_forward.1} parent=1 // pred_check
      _
    $region43: #{cross_attention_forward.1} parent=1 // pred_check_branch
      %107 = sbr.rel (0) target = $region45
    $region44: #{cross_attention_forward.1} parent=1 // pred_region
      %s109 = ssub.s32 1024, 1024
      %110 = vsyncadd [#allocation12], %s109
      %s111 = sshll.u32 [#allocation13], 4
      %s112 = int_to_ptr.vmem [resolvable:$true] %s111
      %117 = dma.hbm_to_vmem [thread:$0]  %s10, 1024, %s112, [#allocation12], 64, 64, 4
    $region45: #{cross_attention_forward.1} parent=1 // pred_fallthru
      _
    // Predicated region
    $region46: #{cross_attention_forward.1} parent=1 // pred_check
      _
    $region47: #{cross_attention_forward.1} parent=1 // pred_check_branch
      %119 = sbr.rel (0) target = $region49
    $region48: #{cross_attention_forward.1} parent=1 // pred_region
      _
    $region49: #{cross_attention_forward.1} parent=1 // pred_fallthru
      _
    // Predicated region
    $region50: #{cross_attention_forward.1} parent=1 // pred_check
      _
    $region51: #{cross_attention_forward.1} parent=1 // pred_check_branch
      %121 = sbr.rel (0) target = $region53
    $region52: #{cross_attention_forward.1} parent=1 // pred_region
      _
    $region53: #{cross_attention_forward.1} parent=1 // pred_fallthru
      _
    // Predicated region
    $region54: #{cross_attention_forward.1} parent=1 // pred_check
      _
    $region55: #{cross_attention_forward.1} parent=1 // pred_check_branch
      %123 = sbr.rel (0) target = $region57
    $region56: #{cross_attention_forward.1} parent=1 // pred_region
      %s125 = ssub.s32 64, 64
      %126 = vsyncadd [#allocation15], %s125
      %s128 = sshll.u32 [#allocation14], 4
      %s129 = int_to_ptr.vmem [resolvable:$true] %s128
      %131 = dma.hbm_to_vmem [thread:$0]  %s13, 64, %s129, [#allocation15]
    $region57: #{cross_attention_forward.1} parent=1 // pred_fallthru
      _
    // Predicated region
    $region58: #{cross_attention_forward.1} parent=1 // pred_check
      _
    $region59: #{cross_attention_forward.1} parent=1 // pred_check_branch
      %133 = sbr.rel (0) target = $region61
    $region60: #{cross_attention_forward.1} parent=1 // pred_region
      %134 = dma.done [#allocation3], 2048
    $region61: #{cross_attention_forward.1} parent=1 // pred_fallthru
      _
    // Predicated region
    $region62: #{cross_attention_forward.1} parent=1 // pred_check
      _
    $region63: #{cross_attention_forward.1} parent=1 // pred_check_branch
      %136 = sbr.rel (0) target = $region65
    $region64: #{cross_attention_forward.1} parent=1 // pred_region
      %137 = dma.done [#allocation6], 4096
    $region65: #{cross_attention_forward.1} parent=1 // pred_fallthru
      _
    // Predicated region
    $region66: #{cross_attention_forward.1} parent=1 // pred_check
      _
    $region67: #{cross_attention_forward.1} parent=1 // pred_check_branch
      %139 = sbr.rel (0) target = $region69
    $region68: #{cross_attention_forward.1} parent=1 // pred_region
      %140 = dma.done [#allocation6], 3072
    $region69: #{cross_attention_forward.1} parent=1 // pred_fallthru
      _
    // Predicated region
    $region70: #{cross_attention_forward.1} parent=1 // pred_check
      _
    $region71: #{cross_attention_forward.1} parent=1 // pred_check_branch
      %142 = sbr.rel (0) target = $region73
    $region72: #{cross_attention_forward.1} parent=1 // pred_region
      %143 = dma.done [#allocation9], 48
    $region73: #{cross_attention_forward.1} parent=1 // pred_fallthru
      _
    // Predicated region
    $region74: #{cross_attention_forward.1} parent=1 // pred_check
      _
    $region75: #{cross_attention_forward.1} parent=1 // pred_check_branch
      %145 = sbr.rel (0) target = $region77
    $region76: #{cross_attention_forward.1} parent=1 // pred_region
      %146 = dma.done [#allocation9], 4096
    $region77: #{cross_attention_forward.1} parent=1 // pred_fallthru
      _
    // Predicated region
    $region78: #{cross_attention_forward.1} parent=1 // pred_check
      _
    $region79: #{cross_attention_forward.1} parent=1 // pred_check_branch
      %148 = sbr.rel (0) target = $region81
    $region80: #{cross_attention_forward.1} parent=1 // pred_region
      %149 = dma.done [#allocation12], 4096
    $region81: #{cross_attention_forward.1} parent=1 // pred_fallthru
      _
    // Predicated region
    $region82: #{cross_attention_forward.1} parent=1 // pred_check
      _
    $region83: #{cross_attention_forward.1} parent=1 // pred_check_branch
      %151 = sbr.rel (0) target = $region85
    $region84: #{cross_attention_forward.1} parent=1 // pred_region
      %152 = dma.done [#allocation12], 1024
    $region85: #{cross_attention_forward.1} parent=1 // pred_fallthru
      _
    // Predicated region
    $region86: #{cross_attention_forward.1} parent=1 // pred_check
      _
    $region87: #{cross_attention_forward.1} parent=1 // pred_check_branch
      %154 = sbr.rel (0) target = $region89
    $region88: #{cross_attention_forward.1} parent=1 // pred_region
      %155 = dma.done [#allocation15], 64
    $region89: #{cross_attention_forward.1} parent=1 // pred_fallthru
      _
    %v157 = vld [vmem:[%s11] sm:$0x1]
    %v158 = vld [vmem:[%s11 + $0x1] sm:$0x1]
    %v159 = vld [vmem:[%s11 + $0x2] sm:$0x1]
    %v160 = vld [vmem:[%s11 + $0x3] sm:$0x1]
    %v161 = vld [vmem:[%s11 + $0x4] sm:$0x1]
    %v162 = vld [vmem:[%s11 + $0x5] sm:$0x1]
    %v163 = vld [vmem:[%s11 + $0x6] sm:$0x1]
    %v164 = vld [vmem:[#allocation2] sm:$0xff]
    %v165 = vld [vmem:[#allocation2 + $0x8] sm:$0xff]
    %v166 = vld [vmem:[#allocation2 + $0x10] sm:$0xff]
    %v167 = vld [vmem:[#allocation2 + $0x18] sm:$0xff]
    %v168 = vld [vmem:[#allocation2 + $0x20] sm:$0xff]
    %v169 = vld [vmem:[#allocation2 + $0x28] sm:$0xff]
    %v170 = vld [vmem:[#allocation2 + $0x30] sm:$0xff]
    %v171 = vld [vmem:[#allocation2 + $0x38] sm:$0xff]
    %v172 = vld [vmem:[#allocation2 + $0x40] sm:$0xff]
    %v173 = vld [vmem:[#allocation2 + $0x48] sm:$0xff]
    %v174 = vld [vmem:[#allocation2 + $0x50] sm:$0xff]
    %v175 = vld [vmem:[#allocation2 + $0x58] sm:$0xff]
    %v176 = vld [vmem:[#allocation2 + $0x60] sm:$0xff]
    %v177 = vld [vmem:[#allocation2 + $0x68] sm:$0xff]
    %v178 = vld [vmem:[#allocation2 + $0x70] sm:$0xff]
    %v179 = vld [vmem:[#allocation2 + $0x78] sm:$0xff]
    %v180 = vpack.c.bf16 %v165, %v164
    %v181 = vpack.c.bf16 %v167, %v166
    %v182 = vpack.c.bf16 %v169, %v168
    %v183 = vpack.c.bf16 %v171, %v170
    %v184 = vpack.c.bf16 %v173, %v172
    %v185 = vpack.c.bf16 %v175, %v174
    %v186 = vpack.c.bf16 %v177, %v176
    %v187 = vpack.c.bf16 %v179, %v178
    %v188 = vld [vmem:[%s1] sm:$0xff]
    %v189 = vld [vmem:[%s1 + $0x8] sm:$0xff]
    %v190 = vpack.c.bf16 %v189, %v188
    %v191 = vld [vmem:[#allocation5] sm:$0xff]
    %v192 = vld [vmem:[#allocation5 + $0x8] sm:$0xff]
    %v193 = vld [vmem:[#allocation5 + $0x10] sm:$0xff]
    %v194 = vld [vmem:[#allocation5 + $0x18] sm:$0xff]
    %v195 = vld [vmem:[#allocation5 + $0x20] sm:$0xff]
    %v196 = vld [vmem:[#allocation5 + $0x28] sm:$0xff]
    %v197 = vld [vmem:[#allocation5 + $0x30] sm:$0xff]
    %v198 = vld [vmem:[#allocation5 + $0x38] sm:$0xff]
    %v199 = vld [vmem:[#allocation5 + $0x40] sm:$0xff]
    %v200 = vld [vmem:[#allocation5 + $0x48] sm:$0xff]
    %v201 = vld [vmem:[#allocation5 + $0x50] sm:$0xff]
    %v202 = vld [vmem:[#allocation5 + $0x58] sm:$0xff]
    %v203 = vld [vmem:[#allocation5 + $0x60] sm:$0xff]
    %v204 = vld [vmem:[#allocation5 + $0x68] sm:$0xff]
    %v205 = vld [vmem:[#allocation5 + $0x70] sm:$0xff]
    %v206 = vld [vmem:[#allocation5 + $0x78] sm:$0xff]
    %v207 = vld [vmem:[#allocation5 + $0x80] sm:$0xff]
    %v208 = vld [vmem:[#allocation5 + $0x88] sm:$0xff]
    %v209 = vld [vmem:[#allocation5 + $0x90] sm:$0xff]
    %v210 = vld [vmem:[#allocation5 + $0x98] sm:$0xff]
    %v211 = vld [vmem:[#allocation5 + $0xa0] sm:$0xff]
    %v212 = vld [vmem:[#allocation5 + $0xa8] sm:$0xff]
    %v213 = vld [vmem:[#allocation5 + $0xb0] sm:$0xff]
    %v214 = vld [vmem:[#allocation5 + $0xb8] sm:$0xff]
    %v215 = vld [vmem:[#allocation5 + $0xc0] sm:$0xff]
    %v216 = vld [vmem:[#allocation5 + $0xc8] sm:$0xff]
    %v217 = vld [vmem:[#allocation5 + $0xd0] sm:$0xff]
    %v218 = vld [vmem:[#allocation5 + $0xd8] sm:$0xff]
    %v219 = vld [vmem:[#allocation5 + $0xe0] sm:$0xff]
    %v220 = vld [vmem:[#allocation5 + $0xe8] sm:$0xff]
    %v221 = vld [vmem:[#allocation5 + $0xf0] sm:$0xff]
    %v222 = vld [vmem:[#allocation5 + $0xf8] sm:$0xff]
    %v223 = vld [vmem:[%s3] sm:$0xf]
    %v225 = vlaneseq
    %v226 = vshrl.u32 %v225, 7
    %v227 = vsub.s32 0, %v226
    %v228 = vrot.slane %v223, %v227
    %v229 = vlaneseq
    %v230 = vshrl.u32 %v229, 7
    %v231 = vsub.s32 1, %v230
    %v232 = vrot.slane %v223, %v231
    %v233 = vlaneseq
    %v234 = vshrl.u32 %v233, 7
    %v235 = vsub.s32 2, %v234
    %v236 = vrot.slane %v223, %v235
    %v237 = vlaneseq
    %v238 = vshrl.u32 %v237, 7
    %v239 = vsub.s32 3, %v238
    %v240 = vrot.slane %v223, %v239
    %v277 = vunpack.c.l.b16 %v191
    %v278 = vunpack.c.h.b16 %v191
    %v279 = vunpack.c.l.b16 %v192
    %v280 = vunpack.c.h.b16 %v192
    %v281 = vunpack.c.l.b16 %v193
    %v282 = vunpack.c.h.b16 %v193
    %v283 = vunpack.c.l.b16 %v194
    %v284 = vunpack.c.h.b16 %v194
    %v285 = vunpack.c.l.b16 %v195
    %v286 = vunpack.c.h.b16 %v195
    %v287 = vunpack.c.l.b16 %v196
    %v288 = vunpack.c.h.b16 %v196
    %v289 = vunpack.c.l.b16 %v197
    %v290 = vunpack.c.h.b16 %v197
    %v291 = vunpack.c.l.b16 %v198
    %v292 = vunpack.c.h.b16 %v198
    %v293 = vunpack.c.l.b16 %v199
    %v294 = vunpack.c.h.b16 %v199
    %v295 = vunpack.c.l.b16 %v200
    %v296 = vunpack.c.h.b16 %v200
    %v297 = vunpack.c.l.b16 %v201
    %v298 = vunpack.c.h.b16 %v201
    %v299 = vunpack.c.l.b16 %v202
    %v300 = vunpack.c.h.b16 %v202
    %v301 = vunpack.c.l.b16 %v203
    %v302 = vunpack.c.h.b16 %v203
    %v303 = vunpack.c.l.b16 %v204
    %v304 = vunpack.c.h.b16 %v204
    %v305 = vunpack.c.l.b16 %v205
    %v306 = vunpack.c.h.b16 %v205
    %v307 = vunpack.c.l.b16 %v206
    %v308 = vunpack.c.h.b16 %v206
    %v309 = vunpack.c.l.b16 %v207
    %v310 = vunpack.c.h.b16 %v207
    %v311 = vunpack.c.l.b16 %v208
    %v312 = vunpack.c.h.b16 %v208
    %v313 = vunpack.c.l.b16 %v209
    %v314 = vunpack.c.h.b16 %v209
    %v315 = vunpack.c.l.b16 %v210
    %v316 = vunpack.c.h.b16 %v210
    %v317 = vunpack.c.l.b16 %v211
    %v318 = vunpack.c.h.b16 %v211
    %v319 = vunpack.c.l.b16 %v212
    %v320 = vunpack.c.h.b16 %v212
    %v321 = vunpack.c.l.b16 %v213
    %v322 = vunpack.c.h.b16 %v213
    %v323 = vunpack.c.l.b16 %v214
    %v324 = vunpack.c.h.b16 %v214
    %v325 = vunpack.c.l.b16 %v215
    %v326 = vunpack.c.h.b16 %v215
    %v327 = vunpack.c.l.b16 %v216
    %v328 = vunpack.c.h.b16 %v216
    %v329 = vunpack.c.l.b16 %v217
    %v330 = vunpack.c.h.b16 %v217
    %v331 = vunpack.c.l.b16 %v218
    %v332 = vunpack.c.h.b16 %v218
    %v333 = vunpack.c.l.b16 %v219
    %v334 = vunpack.c.h.b16 %v219
    %v335 = vunpack.c.l.b16 %v220
    %v336 = vunpack.c.h.b16 %v220
    %v337 = vunpack.c.l.b16 %v221
    %v338 = vunpack.c.h.b16 %v221
    %v339 = vunpack.c.l.b16 %v222
    %v340 = vunpack.c.h.b16 %v222
    %v341 = vpack.c.b16 %v281, %v277
    %v342 = vpack.c.b16 %v282, %v278
    %v343 = vpack.c.b16 %v283, %v279
    %v344 = vpack.c.b16 %v284, %v280
    %v345 = vpack.c.b16 %v289, %v285
    %v346 = vpack.c.b16 %v290, %v286
    %v347 = vpack.c.b16 %v291, %v287
    %v348 = vpack.c.b16 %v292, %v288
    %v349 = vpack.c.b16 %v297, %v293
    %v350 = vpack.c.b16 %v298, %v294
    %v351 = vpack.c.b16 %v299, %v295
    %v352 = vpack.c.b16 %v300, %v296
    %v353 = vpack.c.b16 %v305, %v301
    %v354 = vpack.c.b16 %v306, %v302
    %v355 = vpack.c.b16 %v307, %v303
    %v356 = vpack.c.b16 %v308, %v304
    %v357 = vpack.c.b16 %v313, %v309
    %v358 = vpack.c.b16 %v314, %v310
    %v359 = vpack.c.b16 %v315, %v311
    %v360 = vpack.c.b16 %v316, %v312
    %v361 = vpack.c.b16 %v321, %v317
    %v362 = vpack.c.b16 %v322, %v318
    %v363 = vpack.c.b16 %v323, %v319
    %v364 = vpack.c.b16 %v324, %v320
    %v365 = vpack.c.b16 %v329, %v325
    %v366 = vpack.c.b16 %v330, %v326
    %v367 = vpack.c.b16 %v331, %v327
    %v368 = vpack.c.b16 %v332, %v328
    %v369 = vpack.c.b16 %v337, %v333
    %v370 = vpack.c.b16 %v338, %v334
    %v371 = vpack.c.b16 %v339, %v335
    %v372 = vpack.c.b16 %v340, %v336
    %405 = vmatprep.subr.bf16.mxu0 %v342
    %406 = vmatpush1.bf16.msra.mxu0 %v341
    %407 = vmatprep.subr.bf16.mxu0 %v346
    %408 = vmatpush1.bf16.msra.mxu0 %v345
    %409 = vmatprep.subr.bf16.mxu0 %v350
    %410 = vmatpush1.bf16.msra.mxu0 %v349
    %411 = vmatprep.subr.bf16.mxu0 %v354
    %412 = vmatpush1.bf16.msra.mxu0 %v353
    %413 = vmatprep.subr.bf16.mxu0 %v358
    %414 = vmatpush1.bf16.msra.mxu0 %v357
    %415 = vmatprep.subr.bf16.mxu0 %v362
    %416 = vmatpush1.bf16.msra.mxu0 %v361
    %417 = vmatprep.subr.bf16.mxu0 %v366
    %418 = vmatpush1.bf16.msra.mxu0 %v365
    %419 = vmatprep.subr.bf16.mxu0 %v370
    %420 = vmatpush1.bf16.msra.mxu0 %v369
    %421 = vmatprep.subr.bf16.mxu0 0
    %422 = vmatpush1.bf16.msra.mxu0 0
    %423 = vmatprep.subr.bf16.mxu0 0
    %424 = vmatpush1.bf16.msra.mxu0 0
    %425 = vmatprep.subr.bf16.mxu0 0
    %426 = vmatpush1.bf16.msra.mxu0 0
    %427 = vmatprep.subr.bf16.mxu0 0
    %428 = vmatpush1.bf16.msra.mxu0 0
    %429 = vmatprep.subr.bf16.mxu0 0
    %430 = vmatpush1.bf16.msra.mxu0 0
    %431 = vmatprep.subr.bf16.mxu0 0
    %432 = vmatpush1.bf16.msra.mxu0 0
    %433 = vmatprep.subr.bf16.mxu0 0
    %434 = vmatpush1.bf16.msra.mxu0 0
    %435 = vmatprep.subr.bf16.mxu0 0
    %436 = vmatpush1.bf16.msra.mxu0 0
    %437 = vmatprep.mubr.bf16.mxu0 0
    %438 = vmatmul.mubr.bf16.gmra.mrb[0].mxu0 %v180
    %v439 = vpop.f32.mrb[0].mxu0
    %v440 = vadd.f32 %v228, %v439
    %v441 = vpop.f32.mrb[0].mxu0
    %v442 = vadd.f32 %v232, %v441
    %v443 = vpop.f32.mrb[0].mxu0
    %v444 = vadd.f32 %v228, %v443
    %v445 = vpop.f32.mrb[0].mxu0
    %v446 = vadd.f32 %v232, %v445
    %447 = vmatprep.mubr.bf16.mxu0 0
    %448 = vmatmul.mubr.bf16.gmra.mrb[0].mxu0 %v181
    %v449 = vpop.f32.mrb[0].mxu0
    %v450 = vadd.f32 %v228, %v449
    %v451 = vpop.f32.mrb[0].mxu0
    %v452 = vadd.f32 %v232, %v451
    %v453 = vpop.f32.mrb[0].mxu0
    %v454 = vadd.f32 %v228, %v453
    %v455 = vpop.f32.mrb[0].mxu0
    %v456 = vadd.f32 %v232, %v455
    %457 = vmatprep.mubr.bf16.mxu0 0
    %458 = vmatmul.mubr.bf16.gmra.mrb[0].mxu0 %v182
    %v459 = vpop.f32.mrb[0].mxu0
    %v460 = vadd.f32 %v228, %v459
    %v461 = vpop.f32.mrb[0].mxu0
    %v462 = vadd.f32 %v232, %v461
    %v463 = vpop.f32.mrb[0].mxu0
    %v464 = vadd.f32 %v228, %v463
    %v465 = vpop.f32.mrb[0].mxu0
    %v466 = vadd.f32 %v232, %v465
    %467 = vmatprep.mubr.bf16.mxu0 0
    %468 = vmatmul.mubr.bf16.gmra.mrb[0].mxu0 %v183
    %v469 = vpop.f32.mrb[0].mxu0
    %v470 = vadd.f32 %v228, %v469
    %v471 = vpop.f32.mrb[0].mxu0
    %v472 = vadd.f32 %v232, %v471
    %v473 = vpop.f32.mrb[0].mxu0
    %v474 = vadd.f32 %v228, %v473
    %v475 = vpop.f32.mrb[0].mxu0
    %v476 = vadd.f32 %v232, %v475
    %477 = vmatprep.mubr.bf16.mxu0 0
    %478 = vmatmul.mubr.bf16.gmra.mrb[0].mxu0 %v184
    %v479 = vpop.f32.mrb[0].mxu0
    %v480 = vadd.f32 %v228, %v479
    %v481 = vpop.f32.mrb[0].mxu0
    %v482 = vadd.f32 %v232, %v481
    %v483 = vpop.f32.mrb[0].mxu0
    %v484 = vadd.f32 %v228, %v483
    %v485 = vpop.f32.mrb[0].mxu0
    %v486 = vadd.f32 %v232, %v485
    %487 = vmatprep.mubr.bf16.mxu0 0
    %488 = vmatmul.mubr.bf16.gmra.mrb[0].mxu0 %v185
    %v489 = vpop.f32.mrb[0].mxu0
    %v490 = vadd.f32 %v228, %v489
    %v491 = vpop.f32.mrb[0].mxu0
    %v492 = vadd.f32 %v232, %v491
    %v493 = vpop.f32.mrb[0].mxu0
    %v494 = vadd.f32 %v228, %v493
    %v495 = vpop.f32.mrb[0].mxu0
    %v496 = vadd.f32 %v232, %v495
    %497 = vmatprep.mubr.bf16.mxu0 0
    %498 = vmatmul.mubr.bf16.gmra.mrb[0].mxu0 %v186
    %v499 = vpop.f32.mrb[0].mxu0
    %v500 = vadd.f32 %v228, %v499
    %v501 = vpop.f32.mrb[0].mxu0
    %v502 = vadd.f32 %v232, %v501
    %v503 = vpop.f32.mrb[0].mxu0
    %v504 = vadd.f32 %v228, %v503
    %v505 = vpop.f32.mrb[0].mxu0
    %v506 = vadd.f32 %v232, %v505
    %507 = vmatprep.mubr.bf16.mxu0 0
    %508 = vmatmul.mubr.bf16.gmra.mrb[0].mxu0 %v187
    %v509 = vpop.f32.mrb[0].mxu0
    %v510 = vadd.f32 %v228, %v509
    %v511 = vpop.f32.mrb[0].mxu0
    %v512 = vadd.f32 %v232, %v511
    %v513 = vpop.f32.mrb[0].mxu0
    %v514 = vadd.f32 %v228, %v513
    %v515 = vpop.f32.mrb[0].mxu0
    %v516 = vadd.f32 %v232, %v515
    %517 = vdwg.mxu0
    %518 = vmatprep.subr.bf16.mxu0 %v344
    %519 = vmatpush1.bf16.msra.mxu0 %v343
    %520 = vmatprep.subr.bf16.mxu0 %v348
    %521 = vmatpush1.bf16.msra.mxu0 %v347
    %522 = vmatprep.subr.bf16.mxu0 %v352
    %523 = vmatpush1.bf16.msra.mxu0 %v351
    %524 = vmatprep.subr.bf16.mxu0 %v356
    %525 = vmatpush1.bf16.msra.mxu0 %v355
    %526 = vmatprep.subr.bf16.mxu0 %v360
    %527 = vmatpush1.bf16.msra.mxu0 %v359
    %528 = vmatprep.subr.bf16.mxu0 %v364
    %529 = vmatpush1.bf16.msra.mxu0 %v363
    %530 = vmatprep.subr.bf16.mxu0 %v368
    %531 = vmatpush1.bf16.msra.mxu0 %v367
    %532 = vmatprep.subr.bf16.mxu0 %v372
    %533 = vmatpush1.bf16.msra.mxu0 %v371
    %534 = vmatprep.subr.bf16.mxu0 0
    %535 = vmatpush1.bf16.msra.mxu0 0
    %536 = vmatprep.subr.bf16.mxu0 0
    %537 = vmatpush1.bf16.msra.mxu0 0
    %538 = vmatprep.subr.bf16.mxu0 0
    %539 = vmatpush1.bf16.msra.mxu0 0
    %540 = vmatprep.subr.bf16.mxu0 0
    %541 = vmatpush1.bf16.msra.mxu0 0
    %542 = vmatprep.subr.bf16.mxu0 0
    %543 = vmatpush1.bf16.msra.mxu0 0
    %544 = vmatprep.subr.bf16.mxu0 0
    %545 = vmatpush1.bf16.msra.mxu0 0
    %546 = vmatprep.subr.bf16.mxu0 0
    %547 = vmatpush1.bf16.msra.mxu0 0
    %548 = vmatprep.subr.bf16.mxu0 0
    %549 = vmatpush1.bf16.msra.mxu0 0
    %550 = vmatprep.mubr.bf16.mxu0 0
    %551 = vmatmul.mubr.bf16.gmra.mrb[0].mxu0 %v180
    %v552 = vpop.f32.mrb[0].mxu0
    %v553 = vadd.f32 %v236, %v552
    %v554 = vpop.f32.mrb[0].mxu0
    %v555 = vadd.f32 %v240, %v554
    %v556 = vpop.f32.mrb[0].mxu0
    %v557 = vadd.f32 %v236, %v556
    %v558 = vpop.f32.mrb[0].mxu0
    %v559 = vadd.f32 %v240, %v558
    %560 = vmatprep.mubr.bf16.mxu0 0
    %561 = vmatmul.mubr.bf16.gmra.mrb[0].mxu0 %v181
    %v562 = vpop.f32.mrb[0].mxu0
    %v563 = vadd.f32 %v236, %v562
    %v564 = vpop.f32.mrb[0].mxu0
    %v565 = vadd.f32 %v240, %v564
    %v566 = vpop.f32.mrb[0].mxu0
    %v567 = vadd.f32 %v236, %v566
    %v568 = vpop.f32.mrb[0].mxu0
    %v569 = vadd.f32 %v240, %v568
    %570 = vmatprep.mubr.bf16.mxu0 0
    %571 = vmatmul.mubr.bf16.gmra.mrb[0].mxu0 %v182
    %v572 = vpop.f32.mrb[0].mxu0
    %v573 = vadd.f32 %v236, %v572
    %v574 = vpop.f32.mrb[0].mxu0
    %v575 = vadd.f32 %v240, %v574
    %v576 = vpop.f32.mrb[0].mxu0
    %v577 = vadd.f32 %v236, %v576
    %v578 = vpop.f32.mrb[0].mxu0
    %v579 = vadd.f32 %v240, %v578
    %580 = vmatprep.mubr.bf16.mxu0 0
    %581 = vmatmul.mubr.bf16.gmra.mrb[0].mxu0 %v183
    %v582 = vpop.f32.mrb[0].mxu0
    %v583 = vadd.f32 %v236, %v582
    %v584 = vpop.f32.mrb[0].mxu0
    %v585 = vadd.f32 %v240, %v584
    %v586 = vpop.f32.mrb[0].mxu0
    %v587 = vadd.f32 %v236, %v586
    %v588 = vpop.f32.mrb[0].mxu0
    %v589 = vadd.f32 %v240, %v588
    %590 = vmatprep.mubr.bf16.mxu0 0
    %591 = vmatmul.mubr.bf16.gmra.mrb[0].mxu0 %v184
    %v592 = vpop.f32.mrb[0].mxu0
    %v593 = vadd.f32 %v236, %v592
    %v594 = vpop.f32.mrb[0].mxu0
    %v595 = vadd.f32 %v240, %v594
    %v596 = vpop.f32.mrb[0].mxu0
    %v597 = vadd.f32 %v236, %v596
    %v598 = vpop.f32.mrb[0].mxu0
    %v599 = vadd.f32 %v240, %v598
    %600 = vmatprep.mubr.bf16.mxu0 0
    %601 = vmatmul.mubr.bf16.gmra.mrb[0].mxu0 %v185
    %v602 = vpop.f32.mrb[0].mxu0
    %v603 = vadd.f32 %v236, %v602
    %v604 = vpop.f32.mrb[0].mxu0
    %v605 = vadd.f32 %v240, %v604
    %v606 = vpop.f32.mrb[0].mxu0
    %v607 = vadd.f32 %v236, %v606
    %v608 = vpop.f32.mrb[0].mxu0
    %v609 = vadd.f32 %v240, %v608
    %610 = vmatprep.mubr.bf16.mxu0 0
    %611 = vmatmul.mubr.bf16.gmra.mrb[0].mxu0 %v186
    %v612 = vpop.f32.mrb[0].mxu0
    %v613 = vadd.f32 %v236, %v612
    %v614 = vpop.f32.mrb[0].mxu0
    %v615 = vadd.f32 %v240, %v614
    %v616 = vpop.f32.mrb[0].mxu0
    %v617 = vadd.f32 %v236, %v616
    %v618 = vpop.f32.mrb[0].mxu0
    %v619 = vadd.f32 %v240, %v618
    %620 = vmatprep.mubr.bf16.mxu0 0
    %621 = vmatmul.mubr.bf16.gmra.mrb[0].mxu0 %v187
    %v622 = vpop.f32.mrb[0].mxu0
    %v623 = vadd.f32 %v236, %v622
    %v624 = vpop.f32.mrb[0].mxu0
    %v625 = vadd.f32 %v240, %v624
    %v626 = vpop.f32.mrb[0].mxu0
    %v627 = vadd.f32 %v236, %v626
    %v628 = vpop.f32.mrb[0].mxu0
    %v629 = vadd.f32 %v240, %v628
    %630 = vdwg.mxu0
    %v631 = vld [vmem:[#allocation7] sm:$0xff]
    %v632 = vld [vmem:[#allocation7 + $0x8] sm:$0xf]
    %v633 = vld [vmem:[#allocation7 + $0xc] sm:$0xff]
    %v634 = vld [vmem:[#allocation7 + $0x14] sm:$0xf]
    %v635 = vld [vmem:[#allocation7 + $0x18] sm:$0xff]
    %v636 = vld [vmem:[#allocation7 + $0x20] sm:$0xf]
    %v637 = vld [vmem:[#allocation7 + $0x24] sm:$0xff]
    %v638 = vld [vmem:[#allocation7 + $0x2c] sm:$0xf]
    %v639 = vld [vmem:[#allocation7 + $0x30] sm:$0xff]
    %v640 = vld [vmem:[#allocation7 + $0x38] sm:$0xf]
    %v641 = vld [vmem:[#allocation7 + $0x3c] sm:$0xff]
    %v642 = vld [vmem:[#allocation7 + $0x44] sm:$0xf]
    %v643 = vld [vmem:[#allocation7 + $0x48] sm:$0xff]
    %v644 = vld [vmem:[#allocation7 + $0x50] sm:$0xf]
    %v645 = vld [vmem:[#allocation7 + $0x54] sm:$0xff]
    %v646 = vld [vmem:[#allocation7 + $0x5c] sm:$0xf]
    %v647 = vld [vmem:[#allocation7 + $0x60] sm:$0xff]
    %v648 = vld [vmem:[#allocation7 + $0x68] sm:$0xf]
    %v649 = vld [vmem:[#allocation7 + $0x6c] sm:$0xff]
    %v650 = vld [vmem:[#allocation7 + $0x74] sm:$0xf]
    %v651 = vld [vmem:[#allocation7 + $0x78] sm:$0xff]
    %v652 = vld [vmem:[#allocation7 + $0x80] sm:$0xf]
    %v653 = vld [vmem:[#allocation7 + $0x84] sm:$0xff]
    %v654 = vld [vmem:[#allocation7 + $0x8c] sm:$0xf]
    %v655 = vld [vmem:[#allocation7 + $0x90] sm:$0xff]
    %v656 = vld [vmem:[#allocation7 + $0x98] sm:$0xf]
    %v657 = vld [vmem:[#allocation7 + $0x9c] sm:$0xff]
    %v658 = vld [vmem:[#allocation7 + $0xa4] sm:$0xf]
    %v659 = vld [vmem:[#allocation7 + $0xa8] sm:$0xff]
    %v660 = vld [vmem:[#allocation7 + $0xb0] sm:$0xf]
    %v661 = vld [vmem:[#allocation7 + $0xb4] sm:$0xff]
    %v662 = vld [vmem:[#allocation7 + $0xbc] sm:$0xf]
    %v663 = vld [vmem:[#allocation8] sm:$0x7]
    %v665 = vlaneseq
    %v666 = vshrl.u32 %v665, 7
    %v667 = vsub.s32 0, %v666
    %v668 = vrot.slane %v663, %v667
    %v669 = vlaneseq
    %v670 = vshrl.u32 %v669, 7
    %v671 = vsub.s32 1, %v670
    %v672 = vrot.slane %v663, %v671
    %v673 = vlaneseq
    %v674 = vshrl.u32 %v673, 7
    %v675 = vsub.s32 2, %v674
    %v676 = vrot.slane %v663, %v675
    %v712 = vunpack.c.l.b16 %v631
    %v713 = vunpack.c.h.b16 %v631
    %v714 = vunpack.c.l.b16 %v632
    %v715 = vunpack.c.l.b16 %v633
    %v716 = vunpack.c.h.b16 %v633
    %v717 = vunpack.c.l.b16 %v634
    %v718 = vunpack.c.l.b16 %v635
    %v719 = vunpack.c.h.b16 %v635
    %v720 = vunpack.c.l.b16 %v636
    %v721 = vunpack.c.l.b16 %v637
    %v722 = vunpack.c.h.b16 %v637
    %v723 = vunpack.c.l.b16 %v638
    %v724 = vunpack.c.l.b16 %v639
    %v725 = vunpack.c.h.b16 %v639
    %v726 = vunpack.c.l.b16 %v640
    %v727 = vunpack.c.l.b16 %v641
    %v728 = vunpack.c.h.b16 %v641
    %v729 = vunpack.c.l.b16 %v642
    %v730 = vunpack.c.l.b16 %v643
    %v731 = vunpack.c.h.b16 %v643
    %v732 = vunpack.c.l.b16 %v644
    %v733 = vunpack.c.l.b16 %v645
    %v734 = vunpack.c.h.b16 %v645
    %v735 = vunpack.c.l.b16 %v646
    %v736 = vunpack.c.l.b16 %v647
    %v737 = vunpack.c.h.b16 %v647
    %v738 = vunpack.c.l.b16 %v648
    %v739 = vunpack.c.l.b16 %v649
    %v740 = vunpack.c.h.b16 %v649
    %v741 = vunpack.c.l.b16 %v650
    %v742 = vunpack.c.l.b16 %v651
    %v743 = vunpack.c.h.b16 %v651
    %v744 = vunpack.c.l.b16 %v652
    %v745 = vunpack.c.l.b16 %v653
    %v746 = vunpack.c.h.b16 %v653
    %v747 = vunpack.c.l.b16 %v654
    %v748 = vunpack.c.l.b16 %v655
    %v749 = vunpack.c.h.b16 %v655
    %v750 = vunpack.c.l.b16 %v656
    %v751 = vunpack.c.l.b16 %v657
    %v752 = vunpack.c.h.b16 %v657
    %v753 = vunpack.c.l.b16 %v658
    %v754 = vunpack.c.l.b16 %v659
    %v755 = vunpack.c.h.b16 %v659
    %v756 = vunpack.c.l.b16 %v660
    %v757 = vunpack.c.l.b16 %v661
    %v758 = vunpack.c.h.b16 %v661
    %v759 = vunpack.c.l.b16 %v662
    %v760 = vpack.c.b16 %v715, %v712
    %v761 = vpack.c.b16 %v716, %v713
    %v762 = vpack.c.b16 %v717, %v714
    %v763 = vpack.c.b16 %v721, %v718
    %v764 = vpack.c.b16 %v722, %v719
    %v765 = vpack.c.b16 %v723, %v720
    %v766 = vpack.c.b16 %v727, %v724
    %v767 = vpack.c.b16 %v728, %v725
    %v768 = vpack.c.b16 %v729, %v726
    %v769 = vpack.c.b16 %v733, %v730
    %v770 = vpack.c.b16 %v734, %v731
    %v771 = vpack.c.b16 %v735, %v732
    %v772 = vpack.c.b16 %v739, %v736
    %v773 = vpack.c.b16 %v740, %v737
    %v774 = vpack.c.b16 %v741, %v738
    %v775 = vpack.c.b16 %v745, %v742
    %v776 = vpack.c.b16 %v746, %v743
    %v777 = vpack.c.b16 %v747, %v744
    %v778 = vpack.c.b16 %v751, %v748
    %v779 = vpack.c.b16 %v752, %v749
    %v780 = vpack.c.b16 %v753, %v750
    %v781 = vpack.c.b16 %v757, %v754
    %v782 = vpack.c.b16 %v758, %v755
    %v783 = vpack.c.b16 %v759, %v756
    %808 = vmatprep.subr.bf16.mxu0 %v761
    %809 = vmatpush1.bf16.msra.mxu0 %v760
    %810 = vmatprep.subr.bf16.mxu0 %v764
    %811 = vmatpush1.bf16.msra.mxu0 %v763
    %812 = vmatprep.subr.bf16.mxu0 %v767
    %813 = vmatpush1.bf16.msra.mxu0 %v766
    %814 = vmatprep.subr.bf16.mxu0 %v770
    %815 = vmatpush1.bf16.msra.mxu0 %v769
    %816 = vmatprep.subr.bf16.mxu0 %v773
    %817 = vmatpush1.bf16.msra.mxu0 %v772
    %818 = vmatprep.subr.bf16.mxu0 %v776
    %819 = vmatpush1.bf16.msra.mxu0 %v775
    %820 = vmatprep.subr.bf16.mxu0 %v779
    %821 = vmatpush1.bf16.msra.mxu0 %v778
    %822 = vmatprep.subr.bf16.mxu0 %v782
    %823 = vmatpush1.bf16.msra.mxu0 %v781
    %824 = vmatprep.subr.bf16.mxu0 0
    %825 = vmatpush1.bf16.msra.mxu0 0
    %826 = vmatprep.subr.bf16.mxu0 0
    %827 = vmatpush1.bf16.msra.mxu0 0
    %828 = vmatprep.subr.bf16.mxu0 0
    %829 = vmatpush1.bf16.msra.mxu0 0
    %830 = vmatprep.subr.bf16.mxu0 0
    %831 = vmatpush1.bf16.msra.mxu0 0
    %832 = vmatprep.subr.bf16.mxu0 0
    %833 = vmatpush1.bf16.msra.mxu0 0
    %834 = vmatprep.subr.bf16.mxu0 0
    %835 = vmatpush1.bf16.msra.mxu0 0
    %836 = vmatprep.subr.bf16.mxu0 0
    %837 = vmatpush1.bf16.msra.mxu0 0
    %838 = vmatprep.subr.bf16.mxu0 0
    %839 = vmatpush1.bf16.msra.mxu0 0
    %840 = vmatprep.mubr.bf16.mxu0 0
    %841 = vmatmul.mubr.bf16.gmra.mrb[0].mxu0 %v190
    %v842 = vpop.f32.mrb[0].mxu0
    %v843 = vadd.f32 %v668, %v842
    %v844 = vpop.f32.mrb[0].mxu0
    %v845 = vadd.f32 %v672, %v844
    %v846 = vpop.f32.mrb[0].mxu0
    %v847 = vadd.f32 %v668, %v846
    %v848 = vpop.f32.mrb[0].mxu0
    %v849 = vadd.f32 %v672, %v848
    %850 = vdwg.mxu0
    %851 = vmatprep.subr.bf16.mxu0 0
    %852 = vmatpush1.bf16.msra.mxu0 %v762
    %853 = vmatprep.subr.bf16.mxu0 0
    %854 = vmatpush1.bf16.msra.mxu0 %v765
    %855 = vmatprep.subr.bf16.mxu0 0
    %856 = vmatpush1.bf16.msra.mxu0 %v768
    %857 = vmatprep.subr.bf16.mxu0 0
    %858 = vmatpush1.bf16.msra.mxu0 %v771
    %859 = vmatprep.subr.bf16.mxu0 0
    %860 = vmatpush1.bf16.msra.mxu0 %v774
    %861 = vmatprep.subr.bf16.mxu0 0
    %862 = vmatpush1.bf16.msra.mxu0 %v777
    %863 = vmatprep.subr.bf16.mxu0 0
    %864 = vmatpush1.bf16.msra.mxu0 %v780
    %865 = vmatprep.subr.bf16.mxu0 0
    %866 = vmatpush1.bf16.msra.mxu0 %v783
    %867 = vmatprep.subr.bf16.mxu0 0
    %868 = vmatpush1.bf16.msra.mxu0 0
    %869 = vmatprep.subr.bf16.mxu0 0
    %870 = vmatpush1.bf16.msra.mxu0 0
    %871 = vmatprep.subr.bf16.mxu0 0
    %872 = vmatpush1.bf16.msra.mxu0 0
    %873 = vmatprep.subr.bf16.mxu0 0
    %874 = vmatpush1.bf16.msra.mxu0 0
    %875 = vmatprep.subr.bf16.mxu0 0
    %876 = vmatpush1.bf16.msra.mxu0 0
    %877 = vmatprep.subr.bf16.mxu0 0
    %878 = vmatpush1.bf16.msra.mxu0 0
    %879 = vmatprep.subr.bf16.mxu0 0
    %880 = vmatpush1.bf16.msra.mxu0 0
    %881 = vmatprep.subr.bf16.mxu0 0
    %882 = vmatpush1.bf16.msra.mxu0 0
    %883 = vmatprep.mubr.bf16.mxu0 0
    %884 = vmatmul.mubr.bf16.gmra.mrb[0].mxu0 %v190
    %v885 = vpop.f32.mrb[0].mxu0
    %v886 = vadd.f32 %v676, %v885
    %v887 = vpop.f32.mrb[0].mxu0
    %v888 = vpop.f32.mrb[0].mxu0
    %v889 = vadd.f32 %v676, %v888
    %v890 = vpop.f32.mrb[0].mxu0
    %891 = vdwg.mxu0
    %v894 = vcombine.high %v843, %v843
    %v896 = vunpack.c.l.s4 1966171168
    %v897 = vunpack.c.0.s8 %v896
    %v898 = vlaneseq
    %v899 = vshrl.u32 %v898, 7
    %v900 = vsub.s32 %v897, %v899
    %v901 = vrot.slane %v843, %v900
    %v903 = vunpack.c.l.s4 1966171168
    %v904 = vunpack.c.0.s8 %v903
    %v905 = vlaneseq
    %v906 = vshrl.u32 %v905, 7
    %v907 = vsub.s32 %v904, %v906
    %v908 = vrot.slane %v894, %v907
    %v909 = vcombine.high %v901, %v901
    %v910 = vcombine.high %v908, %v908
    %v912 = vunpack.c.l.s4 1966171168
    %v913 = vunpack.c.0.s8 %v912
    %v914 = vlaneseq
    %v915 = vshrl.u32 %v914, 7
    %v916 = vsub.s32 %v913, %v915
    %v917 = vrot.slane %v901, %v916
    %v919 = vunpack.c.l.s4 1966171168
    %v920 = vunpack.c.0.s8 %v919
    %v921 = vlaneseq
    %v922 = vshrl.u32 %v921, 7
    %v923 = vsub.s32 %v920, %v922
    %v924 = vrot.slane %v908, %v923
    %v926 = vunpack.c.l.s4 1966171168
    %v927 = vunpack.c.0.s8 %v926
    %v928 = vlaneseq
    %v929 = vshrl.u32 %v928, 7
    %v930 = vsub.s32 %v927, %v929
    %v931 = vrot.slane %v909, %v930
    %v933 = vunpack.c.l.s4 1966171168
    %v934 = vunpack.c.0.s8 %v933
    %v935 = vlaneseq
    %v936 = vshrl.u32 %v935, 7
    %v937 = vsub.s32 %v934, %v936
    %v938 = vrot.slane %v910, %v937
    %v939 = vcombine.high %v917, %v917
    %v940 = vcombine.high %v924, %v924
    %v941 = vcombine.high %v931, %v931
    %v942 = vcombine.high %v938, %v938
    %v943 = vcombine.high %v847, %v847
    %v945 = vunpack.c.l.s4 1966171168
    %v946 = vunpack.c.0.s8 %v945
    %v947 = vlaneseq
    %v948 = vshrl.u32 %v947, 7
    %v949 = vsub.s32 %v946, %v948
    %v950 = vrot.slane %v847, %v949
    %v952 = vunpack.c.l.s4 1966171168
    %v953 = vunpack.c.0.s8 %v952
    %v954 = vlaneseq
    %v955 = vshrl.u32 %v954, 7
    %v956 = vsub.s32 %v953, %v955
    %v957 = vrot.slane %v943, %v956
    %v958 = vcombine.high %v950, %v950
    %v959 = vcombine.high %v957, %v957
    %v961 = vunpack.c.l.s4 1966171168
    %v962 = vunpack.c.0.s8 %v961
    %v963 = vlaneseq
    %v964 = vshrl.u32 %v963, 7
    %v965 = vsub.s32 %v962, %v964
    %v966 = vrot.slane %v950, %v965
    %v968 = vunpack.c.l.s4 1966171168
    %v969 = vunpack.c.0.s8 %v968
    %v970 = vlaneseq
    %v971 = vshrl.u32 %v970, 7
    %v972 = vsub.s32 %v969, %v971
    %v973 = vrot.slane %v957, %v972
    %v975 = vunpack.c.l.s4 1966171168
    %v976 = vunpack.c.0.s8 %v975
    %v977 = vlaneseq
    %v978 = vshrl.u32 %v977, 7
    %v979 = vsub.s32 %v976, %v978
    %v980 = vrot.slane %v958, %v979
    %v982 = vunpack.c.l.s4 1966171168
    %v983 = vunpack.c.0.s8 %v982
    %v984 = vlaneseq
    %v985 = vshrl.u32 %v984, 7
    %v986 = vsub.s32 %v983, %v985
    %v987 = vrot.slane %v959, %v986
    %v988 = vcombine.high %v966, %v966
    %v989 = vcombine.high %v973, %v973
    %v990 = vcombine.high %v980, %v980
    %v991 = vcombine.high %v987, %v987
    %v992 = vlaneseq
    %v993 = vshrl.u32 %v992, 7
    %v994 = vsub.s32 0, %v993
    %v995 = vrot.slane %v917, %v994
    %v996 = vlaneseq
    %v997 = vshrl.u32 %v996, 7
    %v998 = vsub.s32 0, %v997
    %v999 = vrot.slane %v931, %v998
    %v1000 = vlaneseq
    %v1001 = vshrl.u32 %v1000, 7
    %v1002 = vsub.s32 0, %v1001
    %v1003 = vrot.slane %v939, %v1002
    %v1004 = vlaneseq
    %v1005 = vshrl.u32 %v1004, 7
    %v1006 = vsub.s32 0, %v1005
    %v1007 = vrot.slane %v941, %v1006
    %v1008 = vlaneseq
    %v1009 = vshrl.u32 %v1008, 7
    %v1010 = vsub.s32 0, %v1009
    %v1011 = vrot.slane %v924, %v1010
    %v1012 = vlaneseq
    %v1013 = vshrl.u32 %v1012, 7
    %v1014 = vsub.s32 0, %v1013
    %v1015 = vrot.slane %v938, %v1014
    %v1016 = vlaneseq
    %v1017 = vshrl.u32 %v1016, 7
    %v1018 = vsub.s32 0, %v1017
    %v1019 = vrot.slane %v940, %v1018
    %v1020 = vlaneseq
    %v1021 = vshrl.u32 %v1020, 7
    %v1022 = vsub.s32 0, %v1021
    %v1023 = vrot.slane %v942, %v1022
    %v1024 = vlaneseq
    %v1025 = vshrl.u32 %v1024, 7
    %v1026 = vsub.s32 0, %v1025
    %v1027 = vrot.slane %v966, %v1026
    %v1028 = vlaneseq
    %v1029 = vshrl.u32 %v1028, 7
    %v1030 = vsub.s32 0, %v1029
    %v1031 = vrot.slane %v980, %v1030
    %v1032 = vlaneseq
    %v1033 = vshrl.u32 %v1032, 7
    %v1034 = vsub.s32 0, %v1033
    %v1035 = vrot.slane %v988, %v1034
    %v1036 = vlaneseq
    %v1037 = vshrl.u32 %v1036, 7
    %v1038 = vsub.s32 0, %v1037
    %v1039 = vrot.slane %v990, %v1038
    %v1040 = vlaneseq
    %v1041 = vshrl.u32 %v1040, 7
    %v1042 = vsub.s32 0, %v1041
    %v1043 = vrot.slane %v973, %v1042
    %v1044 = vlaneseq
    %v1045 = vshrl.u32 %v1044, 7
    %v1046 = vsub.s32 0, %v1045
    %v1047 = vrot.slane %v987, %v1046
    %v1048 = vlaneseq
    %v1049 = vshrl.u32 %v1048, 7
    %v1050 = vsub.s32 0, %v1049
    %v1051 = vrot.slane %v989, %v1050
    %v1052 = vlaneseq
    %v1053 = vshrl.u32 %v1052, 7
    %v1054 = vsub.s32 0, %v1053
    %v1055 = vrot.slane %v991, %v1054
    %v1072 = vmul.f32 %v440, %v995
    %v1073 = vmul.f32 %v444, %v999
    %v1074 = vmul.f32 %v450, %v1003
    %v1075 = vmul.f32 %v454, %v1007
    %v1076 = vmul.f32 %v460, %v1011
    %v1077 = vmul.f32 %v464, %v1015
    %v1078 = vmul.f32 %v470, %v1019
    %v1079 = vmul.f32 %v474, %v1023
    %v1080 = vmul.f32 %v480, %v1027
    %v1081 = vmul.f32 %v484, %v1031
    %v1082 = vmul.f32 %v490, %v1035
    %v1083 = vmul.f32 %v494, %v1039
    %v1084 = vmul.f32 %v500, %v1043
    %v1085 = vmul.f32 %v504, %v1047
    %v1086 = vmul.f32 %v510, %v1051
    %v1087 = vmul.f32 %v514, %v1055
    %1088 = vadd.xlane.f32.xlu0 %v1072
    %v1089 = vpop.xlane.xlu0 %1088
    %1090 = vadd.xlane.f32.xlu0 %v1073
    %v1091 = vpop.xlane.xlu0 %1090
    %1092 = vadd.xlane.f32.xlu0 %v1074
    %v1093 = vpop.xlane.xlu0 %1092
    %1094 = vadd.xlane.f32.xlu0 %v1075
    %v1095 = vpop.xlane.xlu0 %1094
    %1096 = vadd.xlane.f32.xlu0 %v1076
    %v1097 = vpop.xlane.xlu0 %1096
    %1098 = vadd.xlane.f32.xlu0 %v1077
    %v1099 = vpop.xlane.xlu0 %1098
    %1100 = vadd.xlane.f32.xlu0 %v1078
    %v1101 = vpop.xlane.xlu0 %1100
    %1102 = vadd.xlane.f32.xlu0 %v1079
    %v1103 = vpop.xlane.xlu0 %1102
    %1104 = vadd.xlane.f32.xlu0 %v1080
    %v1105 = vpop.xlane.xlu0 %1104
    %1106 = vadd.xlane.f32.xlu0 %v1081
    %v1107 = vpop.xlane.xlu0 %1106
    %1108 = vadd.xlane.f32.xlu0 %v1082
    %v1109 = vpop.xlane.xlu0 %1108
    %1110 = vadd.xlane.f32.xlu0 %v1083
    %v1111 = vpop.xlane.xlu0 %1110
    %1112 = vadd.xlane.f32.xlu0 %v1084
    %v1113 = vpop.xlane.xlu0 %1112
    %1114 = vadd.xlane.f32.xlu0 %v1085
    %v1115 = vpop.xlane.xlu0 %1114
    %1116 = vadd.xlane.f32.xlu0 %v1086
    %v1117 = vpop.xlane.xlu0 %1116
    %1118 = vadd.xlane.f32.xlu0 %v1087
    %v1119 = vpop.xlane.xlu0 %1118
    %v1120 = vmul.f32 %v1089, 0.088388346
    %v1121 = vmul.f32 %v1091, 0.088388346
    %v1122 = vmul.f32 %v1093, 0.088388346
    %v1123 = vmul.f32 %v1095, 0.088388346
    %v1124 = vmul.f32 %v1097, 0.088388346
    %v1125 = vmul.f32 %v1099, 0.088388346
    %v1126 = vmul.f32 %v1101, 0.088388346
    %v1127 = vmul.f32 %v1103, 0.088388346
    %v1128 = vmul.f32 %v1105, 0.088388346
    %v1129 = vmul.f32 %v1107, 0.088388346
    %v1130 = vmul.f32 %v1109, 0.088388346
    %v1131 = vmul.f32 %v1111, 0.088388346
    %v1132 = vmul.f32 %v1113, 0.088388346
    %v1133 = vmul.f32 %v1115, 0.088388346
    %v1134 = vmul.f32 %v1117, 0.088388346
    %v1135 = vmul.f32 %v1119, 0.088388346
    %v1152 = vlaneseq
    %v1153 = vand.u32 %v1152, 127
    %v1154 = vlaneseq
    %v1155 = vshrl.u32 %v1154, 7
    %v1156 = vsub.s32 %v1153, %v1155
    %v1157 = vrot.slane %v1120, %v1156
    %v1158 = vlaneseq
    %v1159 = vshrl.u32 %v1158, 7
    %v1160 = vsub.s32 %v1153, %v1159
    %v1161 = vrot.slane %v1121, %v1160
    %v1162 = vlaneseq
    %v1163 = vshrl.u32 %v1162, 7
    %v1164 = vsub.s32 %v1153, %v1163
    %v1165 = vrot.slane %v1122, %v1164
    %v1166 = vlaneseq
    %v1167 = vshrl.u32 %v1166, 7
    %v1168 = vsub.s32 %v1153, %v1167
    %v1169 = vrot.slane %v1123, %v1168
    %v1170 = vlaneseq
    %v1171 = vshrl.u32 %v1170, 7
    %v1172 = vsub.s32 %v1153, %v1171
    %v1173 = vrot.slane %v1124, %v1172
    %v1174 = vlaneseq
    %v1175 = vshrl.u32 %v1174, 7
    %v1176 = vsub.s32 %v1153, %v1175
    %v1177 = vrot.slane %v1125, %v1176
    %v1178 = vlaneseq
    %v1179 = vshrl.u32 %v1178, 7
    %v1180 = vsub.s32 %v1153, %v1179
    %v1181 = vrot.slane %v1126, %v1180
    %v1182 = vlaneseq
    %v1183 = vshrl.u32 %v1182, 7
    %v1184 = vsub.s32 %v1153, %v1183
    %v1185 = vrot.slane %v1127, %v1184
    %v1186 = vlaneseq
    %v1187 = vshrl.u32 %v1186, 7
    %v1188 = vsub.s32 %v1153, %v1187
    %v1189 = vrot.slane %v1128, %v1188
    %v1190 = vlaneseq
    %v1191 = vshrl.u32 %v1190, 7
    %v1192 = vsub.s32 %v1153, %v1191
    %v1193 = vrot.slane %v1129, %v1192
    %v1194 = vlaneseq
    %v1195 = vshrl.u32 %v1194, 7
    %v1196 = vsub.s32 %v1153, %v1195
    %v1197 = vrot.slane %v1130, %v1196
    %v1198 = vlaneseq
    %v1199 = vshrl.u32 %v1198, 7
    %v1200 = vsub.s32 %v1153, %v1199
    %v1201 = vrot.slane %v1131, %v1200
    %v1202 = vlaneseq
    %v1203 = vshrl.u32 %v1202, 7
    %v1204 = vsub.s32 %v1153, %v1203
    %v1205 = vrot.slane %v1132, %v1204
    %v1206 = vlaneseq
    %v1207 = vshrl.u32 %v1206, 7
    %v1208 = vsub.s32 %v1153, %v1207
    %v1209 = vrot.slane %v1133, %v1208
    %v1210 = vlaneseq
    %v1211 = vshrl.u32 %v1210, 7
    %v1212 = vsub.s32 %v1153, %v1211
    %v1213 = vrot.slane %v1134, %v1212
    %v1214 = vlaneseq
    %v1215 = vshrl.u32 %v1214, 7
    %v1216 = vsub.s32 %v1153, %v1215
    %v1217 = vrot.slane %v1135, %v1216
    %vm1218 = vcmask 1041409
    %v1219 = vsel %vm1218, %v1161, %v1157
    %vm1220 = vcmask 1042434
    %v1221 = vsel %vm1220, %v1165, %v1219
    %vm1222 = vcmask 1043459
    %v1223 = vsel %vm1222, %v1169, %v1221
    %vm1224 = vcmask 1044484
    %v1225 = vsel %vm1224, %v1173, %v1223
    %vm1226 = vcmask 1045509
    %v1227 = vsel %vm1226, %v1177, %v1225
    %vm1228 = vcmask 1046534
    %v1229 = vsel %vm1228, %v1181, %v1227
    %vm1230 = vcmask 1047559
    %v1231 = vsel %vm1230, %v1185, %v1229
    %v1232 = vsel %vm1218, %v1193, %v1189
    %v1233 = vsel %vm1220, %v1197, %v1232
    %v1234 = vsel %vm1222, %v1201, %v1233
    %v1235 = vsel %vm1224, %v1205, %v1234
    %v1236 = vsel %vm1226, %v1209, %v1235
    %v1237 = vsel %vm1228, %v1213, %v1236
    %v1238 = vsel %vm1230, %v1217, %v1237
    %vm1241 = vcmask 64512
    %v1242 = vsel %vm1241, %v1231, -inf
    %1243 = vmax.xlane.f32.xlu0 %v1242
    %v1244 = vpop.xlane.xlu0 %1243
    %v1245 = vsel %vm1241, %v1238, -inf
    %1246 = vmax.xlane.f32.xlu0 %v1245
    %v1247 = vpop.xlane.xlu0 %1246
    %v1250 = vlaneseq
    %v1251 = vshrl.u32 %v1250, 7
    %v1252 = vsub.s32 0, %v1251
    %v1253 = vrot.slane %v1244, %v1252
    %v1254 = vlaneseq
    %v1255 = vshrl.u32 %v1254, 7
    %v1256 = vsub.s32 1, %v1255
    %v1257 = vrot.slane %v1244, %v1256
    %v1258 = vlaneseq
    %v1259 = vshrl.u32 %v1258, 7
    %v1260 = vsub.s32 2, %v1259
    %v1261 = vrot.slane %v1244, %v1260
    %v1262 = vlaneseq
    %v1263 = vshrl.u32 %v1262, 7
    %v1264 = vsub.s32 3, %v1263
    %v1265 = vrot.slane %v1244, %v1264
    %v1266 = vlaneseq
    %v1267 = vshrl.u32 %v1266, 7
    %v1268 = vsub.s32 4, %v1267
    %v1269 = vrot.slane %v1244, %v1268
    %v1270 = vlaneseq
    %v1271 = vshrl.u32 %v1270, 7
    %v1272 = vsub.s32 5, %v1271
    %v1273 = vrot.slane %v1244, %v1272
    %v1274 = vlaneseq
    %v1275 = vshrl.u32 %v1274, 7
    %v1276 = vsub.s32 6, %v1275
    %v1277 = vrot.slane %v1244, %v1276
    %v1278 = vlaneseq
    %v1279 = vshrl.u32 %v1278, 7
    %v1280 = vsub.s32 7, %v1279
    %v1281 = vrot.slane %v1244, %v1280
    %v1282 = vlaneseq
    %v1283 = vshrl.u32 %v1282, 7
    %v1284 = vsub.s32 0, %v1283
    %v1285 = vrot.slane %v1247, %v1284
    %v1286 = vlaneseq
    %v1287 = vshrl.u32 %v1286, 7
    %v1288 = vsub.s32 1, %v1287
    %v1289 = vrot.slane %v1247, %v1288
    %v1290 = vlaneseq
    %v1291 = vshrl.u32 %v1290, 7
    %v1292 = vsub.s32 2, %v1291
    %v1293 = vrot.slane %v1247, %v1292
    %v1294 = vlaneseq
    %v1295 = vshrl.u32 %v1294, 7
    %v1296 = vsub.s32 3, %v1295
    %v1297 = vrot.slane %v1247, %v1296
    %v1298 = vlaneseq
    %v1299 = vshrl.u32 %v1298, 7
    %v1300 = vsub.s32 4, %v1299
    %v1301 = vrot.slane %v1247, %v1300
    %v1302 = vlaneseq
    %v1303 = vshrl.u32 %v1302, 7
    %v1304 = vsub.s32 5, %v1303
    %v1305 = vrot.slane %v1247, %v1304
    %v1306 = vlaneseq
    %v1307 = vshrl.u32 %v1306, 7
    %v1308 = vsub.s32 6, %v1307
    %v1309 = vrot.slane %v1247, %v1308
    %v1310 = vlaneseq
    %v1311 = vshrl.u32 %v1310, 7
    %v1312 = vsub.s32 7, %v1311
    %v1313 = vrot.slane %v1247, %v1312
    %v1330 = vsub.f32 %v1120, %v1253
    %v1331 = vsub.f32 %v1121, %v1257
    %v1332 = vsub.f32 %v1122, %v1261
    %v1333 = vsub.f32 %v1123, %v1265
    %v1334 = vsub.f32 %v1124, %v1269
    %v1335 = vsub.f32 %v1125, %v1273
    %v1336 = vsub.f32 %v1126, %v1277
    %v1337 = vsub.f32 %v1127, %v1281
    %v1338 = vsub.f32 %v1128, %v1285
    %v1339 = vsub.f32 %v1129, %v1289
    %v1340 = vsub.f32 %v1130, %v1293
    %v1341 = vsub.f32 %v1131, %v1297
    %v1342 = vsub.f32 %v1132, %v1301
    %v1343 = vsub.f32 %v1133, %v1305
    %v1344 = vsub.f32 %v1134, %v1309
    %v1345 = vsub.f32 %v1135, %v1313
    %v1346 = vmul.f32 %v1330, 1.442695
    %v1347 = vpow.pop %v1346
    %v1348 = vmul.f32 %v1331, 1.442695
    %v1349 = vpow.pop %v1348
    %v1350 = vmul.f32 %v1332, 1.442695
    %v1351 = vpow.pop %v1350
    %v1352 = vmul.f32 %v1333, 1.442695
    %v1353 = vpow.pop %v1352
    %v1354 = vmul.f32 %v1334, 1.442695
    %v1355 = vpow.pop %v1354
    %v1356 = vmul.f32 %v1335, 1.442695
    %v1357 = vpow.pop %v1356
    %v1358 = vmul.f32 %v1336, 1.442695
    %v1359 = vpow.pop %v1358
    %v1360 = vmul.f32 %v1337, 1.442695
    %v1361 = vpow.pop %v1360
    %v1362 = vmul.f32 %v1338, 1.442695
    %v1363 = vpow.pop %v1362
    %v1364 = vmul.f32 %v1339, 1.442695
    %v1365 = vpow.pop %v1364
    %v1366 = vmul.f32 %v1340, 1.442695
    %v1367 = vpow.pop %v1366
    %v1368 = vmul.f32 %v1341, 1.442695
    %v1369 = vpow.pop %v1368
    %v1370 = vmul.f32 %v1342, 1.442695
    %v1371 = vpow.pop %v1370
    %v1372 = vmul.f32 %v1343, 1.442695
    %v1373 = vpow.pop %v1372
    %v1374 = vmul.f32 %v1344, 1.442695
    %v1375 = vpow.pop %v1374
    %v1376 = vmul.f32 %v1345, 1.442695
    %v1377 = vpow.pop %v1376
    %1394 = vset.pattern.permute.xlu0 0
    %1395 = vperm.xlu0 %1394, %v1347
    %v1396 = vpop.permute.xlu0 %1395
    %1397 = vset.pattern.permute.xlu0 0
    %1398 = vperm.xlu0 %1397, %v1349
    %v1399 = vpop.permute.xlu0 %1398
    %1400 = vset.pattern.permute.xlu0 0
    %1401 = vperm.xlu0 %1400, %v1351
    %v1402 = vpop.permute.xlu0 %1401
    %1403 = vset.pattern.permute.xlu0 0
    %1404 = vperm.xlu0 %1403, %v1353
    %v1405 = vpop.permute.xlu0 %1404
    %1406 = vset.pattern.permute.xlu0 0
    %1407 = vperm.xlu0 %1406, %v1355
    %v1408 = vpop.permute.xlu0 %1407
    %1409 = vset.pattern.permute.xlu0 0
    %1410 = vperm.xlu0 %1409, %v1357
    %v1411 = vpop.permute.xlu0 %1410
    %1412 = vset.pattern.permute.xlu0 0
    %1413 = vperm.xlu0 %1412, %v1359
    %v1414 = vpop.permute.xlu0 %1413
    %1415 = vset.pattern.permute.xlu0 0
    %1416 = vperm.xlu0 %1415, %v1361
    %v1417 = vpop.permute.xlu0 %1416
    %1418 = vset.pattern.permute.xlu0 0
    %1419 = vperm.xlu0 %1418, %v1363
    %v1420 = vpop.permute.xlu0 %1419
    %1421 = vset.pattern.permute.xlu0 0
    %1422 = vperm.xlu0 %1421, %v1365
    %v1423 = vpop.permute.xlu0 %1422
    %1424 = vset.pattern.permute.xlu0 0
    %1425 = vperm.xlu0 %1424, %v1367
    %v1426 = vpop.permute.xlu0 %1425
    %1427 = vset.pattern.permute.xlu0 0
    %1428 = vperm.xlu0 %1427, %v1369
    %v1429 = vpop.permute.xlu0 %1428
    %1430 = vset.pattern.permute.xlu0 0
    %1431 = vperm.xlu0 %1430, %v1371
    %v1432 = vpop.permute.xlu0 %1431
    %1433 = vset.pattern.permute.xlu0 0
    %1434 = vperm.xlu0 %1433, %v1373
    %v1435 = vpop.permute.xlu0 %1434
    %1436 = vset.pattern.permute.xlu0 0
    %1437 = vperm.xlu0 %1436, %v1375
    %v1438 = vpop.permute.xlu0 %1437
    %1439 = vset.pattern.permute.xlu0 0
    %1440 = vperm.xlu0 %1439, %v1377
    %v1441 = vpop.permute.xlu0 %1440
    %v1442 = vlaneseq
    %v1443 = vshrl.u32 %v1442, 7
    %v1444 = vsub.s32 %v1153, %v1443
    %v1445 = vrot.slane %v1396, %v1444
    %v1446 = vlaneseq
    %v1447 = vshrl.u32 %v1446, 7
    %v1448 = vsub.s32 %v1153, %v1447
    %v1449 = vrot.slane %v1399, %v1448
    %v1450 = vlaneseq
    %v1451 = vshrl.u32 %v1450, 7
    %v1452 = vsub.s32 %v1153, %v1451
    %v1453 = vrot.slane %v1402, %v1452
    %v1454 = vlaneseq
    %v1455 = vshrl.u32 %v1454, 7
    %v1456 = vsub.s32 %v1153, %v1455
    %v1457 = vrot.slane %v1405, %v1456
    %v1458 = vlaneseq
    %v1459 = vshrl.u32 %v1458, 7
    %v1460 = vsub.s32 %v1153, %v1459
    %v1461 = vrot.slane %v1408, %v1460
    %v1462 = vlaneseq
    %v1463 = vshrl.u32 %v1462, 7
    %v1464 = vsub.s32 %v1153, %v1463
    %v1465 = vrot.slane %v1411, %v1464
    %v1466 = vlaneseq
    %v1467 = vshrl.u32 %v1466, 7
    %v1468 = vsub.s32 %v1153, %v1467
    %v1469 = vrot.slane %v1414, %v1468
    %v1470 = vlaneseq
    %v1471 = vshrl.u32 %v1470, 7
    %v1472 = vsub.s32 %v1153, %v1471
    %v1473 = vrot.slane %v1417, %v1472
    %v1474 = vlaneseq
    %v1475 = vshrl.u32 %v1474, 7
    %v1476 = vsub.s32 %v1153, %v1475
    %v1477 = vrot.slane %v1420, %v1476
    %v1478 = vlaneseq
    %v1479 = vshrl.u32 %v1478, 7
    %v1480 = vsub.s32 %v1153, %v1479
    %v1481 = vrot.slane %v1423, %v1480
    %v1482 = vlaneseq
    %v1483 = vshrl.u32 %v1482, 7
    %v1484 = vsub.s32 %v1153, %v1483
    %v1485 = vrot.slane %v1426, %v1484
    %v1486 = vlaneseq
    %v1487 = vshrl.u32 %v1486, 7
    %v1488 = vsub.s32 %v1153, %v1487
    %v1489 = vrot.slane %v1429, %v1488
    %v1490 = vlaneseq
    %v1491 = vshrl.u32 %v1490, 7
    %v1492 = vsub.s32 %v1153, %v1491
    %v1493 = vrot.slane %v1432, %v1492
    %v1494 = vlaneseq
    %v1495 = vshrl.u32 %v1494, 7
    %v1496 = vsub.s32 %v1153, %v1495
    %v1497 = vrot.slane %v1435, %v1496
    %v1498 = vlaneseq
    %v1499 = vshrl.u32 %v1498, 7
    %v1500 = vsub.s32 %v1153, %v1499
    %v1501 = vrot.slane %v1438, %v1500
    %v1502 = vlaneseq
    %v1503 = vshrl.u32 %v1502, 7
    %v1504 = vsub.s32 %v1153, %v1503
    %v1505 = vrot.slane %v1441, %v1504
    %v1506 = vsel %vm1218, %v1449, %v1445
    %v1507 = vsel %vm1220, %v1453, %v1506
    %v1508 = vsel %vm1222, %v1457, %v1507
    %v1509 = vsel %vm1224, %v1461, %v1508
    %v1510 = vsel %vm1226, %v1465, %v1509
    %v1511 = vsel %vm1228, %v1469, %v1510
    %v1512 = vsel %vm1230, %v1473, %v1511
    %v1513 = vsel %vm1218, %v1481, %v1477
    %v1514 = vsel %vm1220, %v1485, %v1513
    %v1515 = vsel %vm1222, %v1489, %v1514
    %v1516 = vsel %vm1224, %v1493, %v1515
    %v1517 = vsel %vm1226, %v1497, %v1516
    %v1518 = vsel %vm1228, %v1501, %v1517
    %v1519 = vsel %vm1230, %v1505, %v1518
    %v1522 = vsel %vm1241, %v1512, 0.0
    %1523 = vadd.xlane.f32.xlu0 %v1522
    %v1524 = vpop.xlane.xlu0 %1523
    %v1525 = vsel %vm1241, %v1519, 0.0
    %1526 = vadd.xlane.f32.xlu0 %v1525
    %v1527 = vpop.xlane.xlu0 %1526
    %v1530 = vlaneseq
    %v1531 = vshrl.u32 %v1530, 7
    %v1532 = vsub.s32 0, %v1531
    %v1533 = vrot.slane %v1524, %v1532
    %v1534 = vlaneseq
    %v1535 = vshrl.u32 %v1534, 7
    %v1536 = vsub.s32 1, %v1535
    %v1537 = vrot.slane %v1524, %v1536
    %v1538 = vlaneseq
    %v1539 = vshrl.u32 %v1538, 7
    %v1540 = vsub.s32 2, %v1539
    %v1541 = vrot.slane %v1524, %v1540
    %v1542 = vlaneseq
    %v1543 = vshrl.u32 %v1542, 7
    %v1544 = vsub.s32 3, %v1543
    %v1545 = vrot.slane %v1524, %v1544
    %v1546 = vlaneseq
    %v1547 = vshrl.u32 %v1546, 7
    %v1548 = vsub.s32 4, %v1547
    %v1549 = vrot.slane %v1524, %v1548
    %v1550 = vlaneseq
    %v1551 = vshrl.u32 %v1550, 7
    %v1552 = vsub.s32 5, %v1551
    %v1553 = vrot.slane %v1524, %v1552
    %v1554 = vlaneseq
    %v1555 = vshrl.u32 %v1554, 7
    %v1556 = vsub.s32 6, %v1555
    %v1557 = vrot.slane %v1524, %v1556
    %v1558 = vlaneseq
    %v1559 = vshrl.u32 %v1558, 7
    %v1560 = vsub.s32 7, %v1559
    %v1561 = vrot.slane %v1524, %v1560
    %v1562 = vlaneseq
    %v1563 = vshrl.u32 %v1562, 7
    %v1564 = vsub.s32 0, %v1563
    %v1565 = vrot.slane %v1527, %v1564
    %v1566 = vlaneseq
    %v1567 = vshrl.u32 %v1566, 7
    %v1568 = vsub.s32 1, %v1567
    %v1569 = vrot.slane %v1527, %v1568
    %v1570 = vlaneseq
    %v1571 = vshrl.u32 %v1570, 7
    %v1572 = vsub.s32 2, %v1571
    %v1573 = vrot.slane %v1527, %v1572
    %v1574 = vlaneseq
    %v1575 = vshrl.u32 %v1574, 7
    %v1576 = vsub.s32 3, %v1575
    %v1577 = vrot.slane %v1527, %v1576
    %v1578 = vlaneseq
    %v1579 = vshrl.u32 %v1578, 7
    %v1580 = vsub.s32 4, %v1579
    %v1581 = vrot.slane %v1527, %v1580
    %v1582 = vlaneseq
    %v1583 = vshrl.u32 %v1582, 7
    %v1584 = vsub.s32 5, %v1583
    %v1585 = vrot.slane %v1527, %v1584
    %v1586 = vlaneseq
    %v1587 = vshrl.u32 %v1586, 7
    %v1588 = vsub.s32 6, %v1587
    %v1589 = vrot.slane %v1527, %v1588
    %v1590 = vlaneseq
    %v1591 = vshrl.u32 %v1590, 7
    %v1592 = vsub.s32 7, %v1591
    %v1593 = vrot.slane %v1527, %v1592
    %v1610 = vrcp.pop %v1533
    %v1611 = vmul.f32 %v1347, %v1610
    %v1612 = vrcp.pop %v1537
    %v1613 = vmul.f32 %v1349, %v1612
    %v1614 = vrcp.pop %v1541
    %v1615 = vmul.f32 %v1351, %v1614
    %v1616 = vrcp.pop %v1545
    %v1617 = vmul.f32 %v1353, %v1616
    %v1618 = vrcp.pop %v1549
    %v1619 = vmul.f32 %v1355, %v1618
    %v1620 = vrcp.pop %v1553
    %v1621 = vmul.f32 %v1357, %v1620
    %v1622 = vrcp.pop %v1557
    %v1623 = vmul.f32 %v1359, %v1622
    %v1624 = vrcp.pop %v1561
    %v1625 = vmul.f32 %v1361, %v1624
    %v1626 = vrcp.pop %v1565
    %v1627 = vmul.f32 %v1363, %v1626
    %v1628 = vrcp.pop %v1569
    %v1629 = vmul.f32 %v1365, %v1628
    %v1630 = vrcp.pop %v1573
    %v1631 = vmul.f32 %v1367, %v1630
    %v1632 = vrcp.pop %v1577
    %v1633 = vmul.f32 %v1369, %v1632
    %v1634 = vrcp.pop %v1581
    %v1635 = vmul.f32 %v1371, %v1634
    %v1636 = vrcp.pop %v1585
    %v1637 = vmul.f32 %v1373, %v1636
    %v1638 = vrcp.pop %v1589
    %v1639 = vmul.f32 %v1375, %v1638
    %v1640 = vrcp.pop %v1593
    %v1641 = vmul.f32 %v1377, %v1640
    %1643 = vset.pattern.permute.xlu0 0
    %1644 = vperm.xlu0 %1643, %v1611
    %v1645 = vpop.permute.xlu0 %1644
    %1648 = vset.pattern.permute.xlu0 0
    %1649 = vperm.xlu0 %1648, %v1613
    %v1650 = vpop.permute.xlu0 %1649
    %1653 = vset.pattern.permute.xlu0 0
    %1654 = vperm.xlu0 %1653, %v1615
    %v1655 = vpop.permute.xlu0 %1654
    %1658 = vset.pattern.permute.xlu0 0
    %1659 = vperm.xlu0 %1658, %v1617
    %v1660 = vpop.permute.xlu0 %1659
    %1663 = vset.pattern.permute.xlu0 0
    %1664 = vperm.xlu0 %1663, %v1619
    %v1665 = vpop.permute.xlu0 %1664
    %1668 = vset.pattern.permute.xlu0 0
    %1669 = vperm.xlu0 %1668, %v1621
    %v1670 = vpop.permute.xlu0 %1669
    %1673 = vset.pattern.permute.xlu0 0
    %1674 = vperm.xlu0 %1673, %v1623
    %v1675 = vpop.permute.xlu0 %1674
    %1678 = vset.pattern.permute.xlu0 0
    %1679 = vperm.xlu0 %1678, %v1625
    %v1680 = vpop.permute.xlu0 %1679
    %1683 = vset.pattern.permute.xlu0 0
    %1684 = vperm.xlu0 %1683, %v1627
    %v1685 = vpop.permute.xlu0 %1684
    %1688 = vset.pattern.permute.xlu0 0
    %1689 = vperm.xlu0 %1688, %v1629
    %v1690 = vpop.permute.xlu0 %1689
    %1693 = vset.pattern.permute.xlu0 0
    %1694 = vperm.xlu0 %1693, %v1631
    %v1695 = vpop.permute.xlu0 %1694
    %1698 = vset.pattern.permute.xlu0 0
    %1699 = vperm.xlu0 %1698, %v1633
    %v1700 = vpop.permute.xlu0 %1699
    %1703 = vset.pattern.permute.xlu0 0
    %1704 = vperm.xlu0 %1703, %v1635
    %v1705 = vpop.permute.xlu0 %1704
    %1708 = vset.pattern.permute.xlu0 0
    %1709 = vperm.xlu0 %1708, %v1637
    %v1710 = vpop.permute.xlu0 %1709
    %1713 = vset.pattern.permute.xlu0 0
    %1714 = vperm.xlu0 %1713, %v1639
    %v1715 = vpop.permute.xlu0 %1714
    %1718 = vset.pattern.permute.xlu0 0
    %1719 = vperm.xlu0 %1718, %v1641
    %v1720 = vpop.permute.xlu0 %1719
    %v1722 = vmul.f32 %v1645, %v442
    %v1723 = vmul.f32 %v1650, %v446
    %v1724 = vmul.f32 %v1655, %v452
    %v1725 = vmul.f32 %v1660, %v456
    %v1726 = vmul.f32 %v1665, %v462
    %v1727 = vmul.f32 %v1670, %v466
    %v1728 = vmul.f32 %v1675, %v472
    %v1729 = vmul.f32 %v1680, %v476
    %v1730 = vmul.f32 %v1685, %v482
    %v1731 = vmul.f32 %v1690, %v486
    %v1732 = vmul.f32 %v1695, %v492
    %v1733 = vmul.f32 %v1700, %v496
    %v1734 = vmul.f32 %v1705, %v502
    %v1735 = vmul.f32 %v1710, %v506
    %v1736 = vmul.f32 %v1715, %v512
    %v1737 = vmul.f32 %v1720, %v516
    %v1738 = vrot.slane %v1722, 4
    %v1739 = vadd.f32 %v1722, %v1738
    %v1740 = vrot.slane %v1739, 2
    %v1741 = vadd.f32 %v1739, %v1740
    %v1742 = vrot.slane %v1741, 1
    %v1743 = vadd.f32 %v1741, %v1742
    %v1744 = vrot.slane %v1723, 4
    %v1745 = vadd.f32 %v1723, %v1744
    %v1746 = vrot.slane %v1745, 2
    %v1747 = vadd.f32 %v1745, %v1746
    %v1748 = vrot.slane %v1747, 1
    %v1749 = vadd.f32 %v1747, %v1748
    %v1750 = vrot.slane %v1724, 4
    %v1751 = vadd.f32 %v1724, %v1750
    %v1752 = vrot.slane %v1751, 2
    %v1753 = vadd.f32 %v1751, %v1752
    %v1754 = vrot.slane %v1753, 1
    %v1755 = vadd.f32 %v1753, %v1754
    %v1756 = vrot.slane %v1725, 4
    %v1757 = vadd.f32 %v1725, %v1756
    %v1758 = vrot.slane %v1757, 2
    %v1759 = vadd.f32 %v1757, %v1758
    %v1760 = vrot.slane %v1759, 1
    %v1761 = vadd.f32 %v1759, %v1760
    %v1762 = vrot.slane %v1726, 4
    %v1763 = vadd.f32 %v1726, %v1762
    %v1764 = vrot.slane %v1763, 2
    %v1765 = vadd.f32 %v1763, %v1764
    %v1766 = vrot.slane %v1765, 1
    %v1767 = vadd.f32 %v1765, %v1766
    %v1768 = vrot.slane %v1727, 4
    %v1769 = vadd.f32 %v1727, %v1768
    %v1770 = vrot.slane %v1769, 2
    %v1771 = vadd.f32 %v1769, %v1770
    %v1772 = vrot.slane %v1771, 1
    %v1773 = vadd.f32 %v1771, %v1772
    %v1774 = vrot.slane %v1728, 4
    %v1775 = vadd.f32 %v1728, %v1774
    %v1776 = vrot.slane %v1775, 2
    %v1777 = vadd.f32 %v1775, %v1776
    %v1778 = vrot.slane %v1777, 1
    %v1779 = vadd.f32 %v1777, %v1778
    %v1780 = vrot.slane %v1729, 4
    %v1781 = vadd.f32 %v1729, %v1780
    %v1782 = vrot.slane %v1781, 2
    %v1783 = vadd.f32 %v1781, %v1782
    %v1784 = vrot.slane %v1783, 1
    %v1785 = vadd.f32 %v1783, %v1784
    %v1786 = vrot.slane %v1730, 4
    %v1787 = vadd.f32 %v1730, %v1786
    %v1788 = vrot.slane %v1787, 2
    %v1789 = vadd.f32 %v1787, %v1788
    %v1790 = vrot.slane %v1789, 1
    %v1791 = vadd.f32 %v1789, %v1790
    %v1792 = vrot.slane %v1731, 4
    %v1793 = vadd.f32 %v1731, %v1792
    %v1794 = vrot.slane %v1793, 2
    %v1795 = vadd.f32 %v1793, %v1794
    %v1796 = vrot.slane %v1795, 1
    %v1797 = vadd.f32 %v1795, %v1796
    %v1798 = vrot.slane %v1732, 4
    %v1799 = vadd.f32 %v1732, %v1798
    %v1800 = vrot.slane %v1799, 2
    %v1801 = vadd.f32 %v1799, %v1800
    %v1802 = vrot.slane %v1801, 1
    %v1803 = vadd.f32 %v1801, %v1802
    %v1804 = vrot.slane %v1733, 4
    %v1805 = vadd.f32 %v1733, %v1804
    %v1806 = vrot.slane %v1805, 2
    %v1807 = vadd.f32 %v1805, %v1806
    %v1808 = vrot.slane %v1807, 1
    %v1809 = vadd.f32 %v1807, %v1808
    %v1810 = vrot.slane %v1734, 4
    %v1811 = vadd.f32 %v1734, %v1810
    %v1812 = vrot.slane %v1811, 2
    %v1813 = vadd.f32 %v1811, %v1812
    %v1814 = vrot.slane %v1813, 1
    %v1815 = vadd.f32 %v1813, %v1814
    %v1816 = vrot.slane %v1735, 4
    %v1817 = vadd.f32 %v1735, %v1816
    %v1818 = vrot.slane %v1817, 2
    %v1819 = vadd.f32 %v1817, %v1818
    %v1820 = vrot.slane %v1819, 1
    %v1821 = vadd.f32 %v1819, %v1820
    %v1822 = vrot.slane %v1736, 4
    %v1823 = vadd.f32 %v1736, %v1822
    %v1824 = vrot.slane %v1823, 2
    %v1825 = vadd.f32 %v1823, %v1824
    %v1826 = vrot.slane %v1825, 1
    %v1827 = vadd.f32 %v1825, %v1826
    %v1828 = vrot.slane %v1737, 4
    %v1829 = vadd.f32 %v1737, %v1828
    %v1830 = vrot.slane %v1829, 2
    %v1831 = vadd.f32 %v1829, %v1830
    %v1832 = vrot.slane %v1831, 1
    %v1833 = vadd.f32 %v1831, %v1832
    %v1836 = vcombine.high %v886, %v886
    %v1838 = vunpack.c.l.s4 1966171168
    %v1839 = vunpack.c.0.s8 %v1838
    %v1840 = vlaneseq
    %v1841 = vshrl.u32 %v1840, 7
    %v1842 = vsub.s32 %v1839, %v1841
    %v1843 = vrot.slane %v886, %v1842
    %v1845 = vunpack.c.l.s4 1966171168
    %v1846 = vunpack.c.0.s8 %v1845
    %v1847 = vlaneseq
    %v1848 = vshrl.u32 %v1847, 7
    %v1849 = vsub.s32 %v1846, %v1848
    %v1850 = vrot.slane %v1836, %v1849
    %v1851 = vcombine.high %v1843, %v1843
    %v1852 = vcombine.high %v1850, %v1850
    %v1854 = vunpack.c.l.s4 1966171168
    %v1855 = vunpack.c.0.s8 %v1854
    %v1856 = vlaneseq
    %v1857 = vshrl.u32 %v1856, 7
    %v1858 = vsub.s32 %v1855, %v1857
    %v1859 = vrot.slane %v1843, %v1858
    %v1861 = vunpack.c.l.s4 1966171168
    %v1862 = vunpack.c.0.s8 %v1861
    %v1863 = vlaneseq
    %v1864 = vshrl.u32 %v1863, 7
    %v1865 = vsub.s32 %v1862, %v1864
    %v1866 = vrot.slane %v1850, %v1865
    %v1868 = vunpack.c.l.s4 1966171168
    %v1869 = vunpack.c.0.s8 %v1868
    %v1870 = vlaneseq
    %v1871 = vshrl.u32 %v1870, 7
    %v1872 = vsub.s32 %v1869, %v1871
    %v1873 = vrot.slane %v1851, %v1872
    %v1875 = vunpack.c.l.s4 1966171168
    %v1876 = vunpack.c.0.s8 %v1875
    %v1877 = vlaneseq
    %v1878 = vshrl.u32 %v1877, 7
    %v1879 = vsub.s32 %v1876, %v1878
    %v1880 = vrot.slane %v1852, %v1879
    %v1881 = vcombine.high %v1859, %v1859
    %v1882 = vcombine.high %v1866, %v1866
    %v1883 = vcombine.high %v1873, %v1873
    %v1884 = vcombine.high %v1880, %v1880
    %v1885 = vcombine.high %v889, %v889
    %v1887 = vunpack.c.l.s4 1966171168
    %v1888 = vunpack.c.0.s8 %v1887
    %v1889 = vlaneseq
    %v1890 = vshrl.u32 %v1889, 7
    %v1891 = vsub.s32 %v1888, %v1890
    %v1892 = vrot.slane %v889, %v1891
    %v1894 = vunpack.c.l.s4 1966171168
    %v1895 = vunpack.c.0.s8 %v1894
    %v1896 = vlaneseq
    %v1897 = vshrl.u32 %v1896, 7
    %v1898 = vsub.s32 %v1895, %v1897
    %v1899 = vrot.slane %v1885, %v1898
    %v1900 = vcombine.high %v1892, %v1892
    %v1901 = vcombine.high %v1899, %v1899
    %v1903 = vunpack.c.l.s4 1966171168
    %v1904 = vunpack.c.0.s8 %v1903
    %v1905 = vlaneseq
    %v1906 = vshrl.u32 %v1905, 7
    %v1907 = vsub.s32 %v1904, %v1906
    %v1908 = vrot.slane %v1892, %v1907
    %v1910 = vunpack.c.l.s4 1966171168
    %v1911 = vunpack.c.0.s8 %v1910
    %v1912 = vlaneseq
    %v1913 = vshrl.u32 %v1912, 7
    %v1914 = vsub.s32 %v1911, %v1913
    %v1915 = vrot.slane %v1899, %v1914
    %v1917 = vunpack.c.l.s4 1966171168
    %v1918 = vunpack.c.0.s8 %v1917
    %v1919 = vlaneseq
    %v1920 = vshrl.u32 %v1919, 7
    %v1921 = vsub.s32 %v1918, %v1920
    %v1922 = vrot.slane %v1900, %v1921
    %v1924 = vunpack.c.l.s4 1966171168
    %v1925 = vunpack.c.0.s8 %v1924
    %v1926 = vlaneseq
    %v1927 = vshrl.u32 %v1926, 7
    %v1928 = vsub.s32 %v1925, %v1927
    %v1929 = vrot.slane %v1901, %v1928
    %v1930 = vcombine.high %v1908, %v1908
    %v1931 = vcombine.high %v1915, %v1915
    %v1932 = vcombine.high %v1922, %v1922
    %v1933 = vcombine.high %v1929, %v1929
    %v1934 = vlaneseq
    %v1935 = vshrl.u32 %v1934, 7
    %v1936 = vsub.s32 0, %v1935
    %v1937 = vrot.slane %v1859, %v1936
    %v1938 = vlaneseq
    %v1939 = vshrl.u32 %v1938, 7
    %v1940 = vsub.s32 0, %v1939
    %v1941 = vrot.slane %v1873, %v1940
    %v1942 = vlaneseq
    %v1943 = vshrl.u32 %v1942, 7
    %v1944 = vsub.s32 0, %v1943
    %v1945 = vrot.slane %v1881, %v1944
    %v1946 = vlaneseq
    %v1947 = vshrl.u32 %v1946, 7
    %v1948 = vsub.s32 0, %v1947
    %v1949 = vrot.slane %v1883, %v1948
    %v1950 = vlaneseq
    %v1951 = vshrl.u32 %v1950, 7
    %v1952 = vsub.s32 0, %v1951
    %v1953 = vrot.slane %v1866, %v1952
    %v1954 = vlaneseq
    %v1955 = vshrl.u32 %v1954, 7
    %v1956 = vsub.s32 0, %v1955
    %v1957 = vrot.slane %v1880, %v1956
    %v1958 = vlaneseq
    %v1959 = vshrl.u32 %v1958, 7
    %v1960 = vsub.s32 0, %v1959
    %v1961 = vrot.slane %v1882, %v1960
    %v1962 = vlaneseq
    %v1963 = vshrl.u32 %v1962, 7
    %v1964 = vsub.s32 0, %v1963
    %v1965 = vrot.slane %v1884, %v1964
    %v1966 = vlaneseq
    %v1967 = vshrl.u32 %v1966, 7
    %v1968 = vsub.s32 0, %v1967
    %v1969 = vrot.slane %v1908, %v1968
    %v1970 = vlaneseq
    %v1971 = vshrl.u32 %v1970, 7
    %v1972 = vsub.s32 0, %v1971
    %v1973 = vrot.slane %v1922, %v1972
    %v1974 = vlaneseq
    %v1975 = vshrl.u32 %v1974, 7
    %v1976 = vsub.s32 0, %v1975
    %v1977 = vrot.slane %v1930, %v1976
    %v1978 = vlaneseq
    %v1979 = vshrl.u32 %v1978, 7
    %v1980 = vsub.s32 0, %v1979
    %v1981 = vrot.slane %v1932, %v1980
    %v1982 = vlaneseq
    %v1983 = vshrl.u32 %v1982, 7
    %v1984 = vsub.s32 0, %v1983
    %v1985 = vrot.slane %v1915, %v1984
    %v1986 = vlaneseq
    %v1987 = vshrl.u32 %v1986, 7
    %v1988 = vsub.s32 0, %v1987
    %v1989 = vrot.slane %v1929, %v1988
    %v1990 = vlaneseq
    %v1991 = vshrl.u32 %v1990, 7
    %v1992 = vsub.s32 0, %v1991
    %v1993 = vrot.slane %v1931, %v1992
    %v1994 = vlaneseq
    %v1995 = vshrl.u32 %v1994, 7
    %v1996 = vsub.s32 0, %v1995
    %v1997 = vrot.slane %v1933, %v1996
    %v2014 = vmul.f32 %v553, %v1937
    %v2015 = vmul.f32 %v557, %v1941
    %v2016 = vmul.f32 %v563, %v1945
    %v2017 = vmul.f32 %v567, %v1949
    %v2018 = vmul.f32 %v573, %v1953
    %v2019 = vmul.f32 %v577, %v1957
    %v2020 = vmul.f32 %v583, %v1961
    %v2021 = vmul.f32 %v587, %v1965
    %v2022 = vmul.f32 %v593, %v1969
    %v2023 = vmul.f32 %v597, %v1973
    %v2024 = vmul.f32 %v603, %v1977
    %v2025 = vmul.f32 %v607, %v1981
    %v2026 = vmul.f32 %v613, %v1985
    %v2027 = vmul.f32 %v617, %v1989
    %v2028 = vmul.f32 %v623, %v1993
    %v2029 = vmul.f32 %v627, %v1997
    %v2030 = vpack.c.bf16 %v2015, %v2014
    %v2031 = vpack.c.bf16 %v2017, %v2016
    %v2032 = vpack.c.bf16 %v2019, %v2018
    %v2033 = vpack.c.bf16 %v2021, %v2020
    %v2034 = vpack.c.bf16 %v2023, %v2022
    %v2035 = vpack.c.bf16 %v2025, %v2024
    %v2036 = vpack.c.bf16 %v2027, %v2026
    %v2037 = vpack.c.bf16 %v2029, %v2028
    %v2038 = vld [vmem:[%s12] sm:$0xf]
    %v2039 = vld [vmem:[%s12 + $0x4] sm:$0xf]
    %v2040 = vld [vmem:[%s12 + $0x8] sm:$0xf]
    %v2041 = vld [vmem:[%s12 + $0xc] sm:$0xf]
    %v2042 = vld [vmem:[%s12 + $0x10] sm:$0xf]
    %v2043 = vld [vmem:[%s12 + $0x14] sm:$0xf]
    %v2044 = vld [vmem:[%s12 + $0x18] sm:$0xf]
    %v2045 = vld [vmem:[%s12 + $0x1c] sm:$0xf]
    %v2046 = vld [vmem:[%s12 + $0x20] sm:$0xf]
    %v2047 = vld [vmem:[%s12 + $0x24] sm:$0xf]
    %v2048 = vld [vmem:[%s12 + $0x28] sm:$0xf]
    %v2049 = vld [vmem:[%s12 + $0x2c] sm:$0xf]
    %v2050 = vld [vmem:[%s12 + $0x30] sm:$0xf]
    %v2051 = vld [vmem:[%s12 + $0x34] sm:$0xf]
    %v2052 = vld [vmem:[%s12 + $0x38] sm:$0xf]
    %v2053 = vld [vmem:[%s12 + $0x3c] sm:$0xf]
    %v2070 = vunpack.c.l.b16 %v2038
    %v2071 = vunpack.c.l.b16 %v2039
    %v2072 = vunpack.c.l.b16 %v2040
    %v2073 = vunpack.c.l.b16 %v2041
    %v2074 = vunpack.c.l.b16 %v2042
    %v2075 = vunpack.c.l.b16 %v2043
    %v2076 = vunpack.c.l.b16 %v2044
    %v2077 = vunpack.c.l.b16 %v2045
    %v2078 = vunpack.c.l.b16 %v2046
    %v2079 = vunpack.c.l.b16 %v2047
    %v2080 = vunpack.c.l.b16 %v2048
    %v2081 = vunpack.c.l.b16 %v2049
    %v2082 = vunpack.c.l.b16 %v2050
    %v2083 = vunpack.c.l.b16 %v2051
    %v2084 = vunpack.c.l.b16 %v2052
    %v2085 = vunpack.c.l.b16 %v2053
    %v2086 = vpack.c.b16 %v2071, %v2070
    %v2087 = vpack.c.b16 %v2073, %v2072
    %v2088 = vpack.c.b16 %v2075, %v2074
    %v2089 = vpack.c.b16 %v2077, %v2076
    %v2090 = vpack.c.b16 %v2079, %v2078
    %v2091 = vpack.c.b16 %v2081, %v2080
    %v2092 = vpack.c.b16 %v2083, %v2082
    %v2093 = vpack.c.b16 %v2085, %v2084
    %2102 = vmatprep.subr.bf16.mxu0 0
    %2103 = vmatpush1.bf16.msra.mxu0 %v2086
    %2104 = vmatprep.subr.bf16.mxu0 0
    %2105 = vmatpush1.bf16.msra.mxu0 %v2087
    %2106 = vmatprep.subr.bf16.mxu0 0
    %2107 = vmatpush1.bf16.msra.mxu0 %v2088
    %2108 = vmatprep.subr.bf16.mxu0 0
    %2109 = vmatpush1.bf16.msra.mxu0 %v2089
    %2110 = vmatprep.subr.bf16.mxu0 0
    %2111 = vmatpush1.bf16.msra.mxu0 %v2090
    %2112 = vmatprep.subr.bf16.mxu0 0
    %2113 = vmatpush1.bf16.msra.mxu0 %v2091
    %2114 = vmatprep.subr.bf16.mxu0 0
    %2115 = vmatpush1.bf16.msra.mxu0 %v2092
    %2116 = vmatprep.subr.bf16.mxu0 0
    %2117 = vmatpush1.bf16.msra.mxu0 %v2093
    %2118 = vmatprep.subr.bf16.mxu0 0
    %2119 = vmatpush1.bf16.msra.mxu0 0
    %2120 = vmatprep.subr.bf16.mxu0 0
    %2121 = vmatpush1.bf16.msra.mxu0 0
    %2122 = vmatprep.subr.bf16.mxu0 0
    %2123 = vmatpush1.bf16.msra.mxu0 0
    %2124 = vmatprep.subr.bf16.mxu0 0
    %2125 = vmatpush1.bf16.msra.mxu0 0
    %2126 = vmatprep.subr.bf16.mxu0 0
    %2127 = vmatpush1.bf16.msra.mxu0 0
    %2128 = vmatprep.subr.bf16.mxu0 0
    %2129 = vmatpush1.bf16.msra.mxu0 0
    %2130 = vmatprep.subr.bf16.mxu0 0
    %2131 = vmatpush1.bf16.msra.mxu0 0
    %2132 = vmatprep.subr.bf16.mxu0 0
    %2133 = vmatpush1.bf16.msra.mxu0 0
    %2134 = vmatprep.mubr.bf16.mxu0 0
    %2135 = vmatmul.mubr.bf16.gmra.mrb[0].mxu0 %v2030
    %v2136 = vpop.f32.mrb[0].mxu0
    %v2137 = vadd.f32 0.0, %v2136
    %v2138 = vpop.f32.mrb[0].mxu0
    %v2139 = vpop.f32.mrb[0].mxu0
    %v2140 = vadd.f32 0.0, %v2139
    %v2141 = vpop.f32.mrb[0].mxu0
    %2142 = vmatprep.mubr.bf16.mxu0 0
    %2143 = vmatmul.mubr.bf16.gmra.mrb[0].mxu0 %v2031
    %v2144 = vpop.f32.mrb[0].mxu0
    %v2145 = vadd.f32 0.0, %v2144
    %v2146 = vpop.f32.mrb[0].mxu0
    %v2147 = vpop.f32.mrb[0].mxu0
    %v2148 = vadd.f32 0.0, %v2147
    %v2149 = vpop.f32.mrb[0].mxu0
    %2150 = vmatprep.mubr.bf16.mxu0 0
    %2151 = vmatmul.mubr.bf16.gmra.mrb[0].mxu0 %v2032
    %v2152 = vpop.f32.mrb[0].mxu0
    %v2153 = vadd.f32 0.0, %v2152
    %v2154 = vpop.f32.mrb[0].mxu0
    %v2155 = vpop.f32.mrb[0].mxu0
    %v2156 = vadd.f32 0.0, %v2155
    %v2157 = vpop.f32.mrb[0].mxu0
    %2158 = vmatprep.mubr.bf16.mxu0 0
    %2159 = vmatmul.mubr.bf16.gmra.mrb[0].mxu0 %v2033
    %v2160 = vpop.f32.mrb[0].mxu0
    %v2161 = vadd.f32 0.0, %v2160
    %v2162 = vpop.f32.mrb[0].mxu0
    %v2163 = vpop.f32.mrb[0].mxu0
    %v2164 = vadd.f32 0.0, %v2163
    %v2165 = vpop.f32.mrb[0].mxu0
    %2166 = vmatprep.mubr.bf16.mxu0 0
    %2167 = vmatmul.mubr.bf16.gmra.mrb[0].mxu0 %v2034
    %v2168 = vpop.f32.mrb[0].mxu0
    %v2169 = vadd.f32 0.0, %v2168
    %v2170 = vpop.f32.mrb[0].mxu0
    %v2171 = vpop.f32.mrb[0].mxu0
    %v2172 = vadd.f32 0.0, %v2171
    %v2173 = vpop.f32.mrb[0].mxu0
    %2174 = vmatprep.mubr.bf16.mxu0 0
    %2175 = vmatmul.mubr.bf16.gmra.mrb[0].mxu0 %v2035
    %v2176 = vpop.f32.mrb[0].mxu0
    %v2177 = vadd.f32 0.0, %v2176
    %v2178 = vpop.f32.mrb[0].mxu0
    %v2179 = vpop.f32.mrb[0].mxu0
    %v2180 = vadd.f32 0.0, %v2179
    %v2181 = vpop.f32.mrb[0].mxu0
    %2182 = vmatprep.mubr.bf16.mxu0 0
    %2183 = vmatmul.mubr.bf16.gmra.mrb[0].mxu0 %v2036
    %v2184 = vpop.f32.mrb[0].mxu0
    %v2185 = vadd.f32 0.0, %v2184
    %v2186 = vpop.f32.mrb[0].mxu0
    %v2187 = vpop.f32.mrb[0].mxu0
    %v2188 = vadd.f32 0.0, %v2187
    %v2189 = vpop.f32.mrb[0].mxu0
    %2190 = vmatprep.mubr.bf16.mxu0 0
    %2191 = vmatmul.mubr.bf16.gmra.mrb[0].mxu0 %v2037
    %v2192 = vpop.f32.mrb[0].mxu0
    %v2193 = vadd.f32 0.0, %v2192
    %v2194 = vpop.f32.mrb[0].mxu0
    %v2195 = vpop.f32.mrb[0].mxu0
    %v2196 = vadd.f32 0.0, %v2195
    %v2197 = vpop.f32.mrb[0].mxu0
    %2198 = vdwg.mxu0
    %v2199 = vmul.f32 %v2137, 0.25
    %v2200 = vmul.f32 %v2140, 0.25
    %v2201 = vmul.f32 %v2145, 0.25
    %v2202 = vmul.f32 %v2148, 0.25
    %v2203 = vmul.f32 %v2153, 0.25
    %v2204 = vmul.f32 %v2156, 0.25
    %v2205 = vmul.f32 %v2161, 0.25
    %v2206 = vmul.f32 %v2164, 0.25
    %v2207 = vmul.f32 %v2169, 0.25
    %v2208 = vmul.f32 %v2172, 0.25
    %v2209 = vmul.f32 %v2177, 0.25
    %v2210 = vmul.f32 %v2180, 0.25
    %v2211 = vmul.f32 %v2185, 0.25
    %v2212 = vmul.f32 %v2188, 0.25
    %v2213 = vmul.f32 %v2193, 0.25
    %v2214 = vmul.f32 %v2196, 0.25
    %v2215 = vsel %vm1241, %v2199, -inf
    %v2216 = vrot.slane %v2215, 4
    %v2217 = vmax.f32 %v2215, %v2216
    %v2218 = vrot.slane %v2217, 2
    %v2219 = vmax.f32 %v2217, %v2218
    %v2220 = vrot.slane %v2219, 1
    %v2221 = vmax.f32 %v2219, %v2220
    %v2222 = vsel %vm1241, %v2200, -inf
    %v2223 = vrot.slane %v2222, 4
    %v2224 = vmax.f32 %v2222, %v2223
    %v2225 = vrot.slane %v2224, 2
    %v2226 = vmax.f32 %v2224, %v2225
    %v2227 = vrot.slane %v2226, 1
    %v2228 = vmax.f32 %v2226, %v2227
    %v2229 = vsel %vm1241, %v2201, -inf
    %v2230 = vrot.slane %v2229, 4
    %v2231 = vmax.f32 %v2229, %v2230
    %v2232 = vrot.slane %v2231, 2
    %v2233 = vmax.f32 %v2231, %v2232
    %v2234 = vrot.slane %v2233, 1
    %v2235 = vmax.f32 %v2233, %v2234
    %v2236 = vsel %vm1241, %v2202, -inf
    %v2237 = vrot.slane %v2236, 4
    %v2238 = vmax.f32 %v2236, %v2237
    %v2239 = vrot.slane %v2238, 2
    %v2240 = vmax.f32 %v2238, %v2239
    %v2241 = vrot.slane %v2240, 1
    %v2242 = vmax.f32 %v2240, %v2241
    %v2243 = vsel %vm1241, %v2203, -inf
    %v2244 = vrot.slane %v2243, 4
    %v2245 = vmax.f32 %v2243, %v2244
    %v2246 = vrot.slane %v2245, 2
    %v2247 = vmax.f32 %v2245, %v2246
    %v2248 = vrot.slane %v2247, 1
    %v2249 = vmax.f32 %v2247, %v2248
    %v2250 = vsel %vm1241, %v2204, -inf
    %v2251 = vrot.slane %v2250, 4
    %v2252 = vmax.f32 %v2250, %v2251
    %v2253 = vrot.slane %v2252, 2
    %v2254 = vmax.f32 %v2252, %v2253
    %v2255 = vrot.slane %v2254, 1
    %v2256 = vmax.f32 %v2254, %v2255
    %v2257 = vsel %vm1241, %v2205, -inf
    %v2258 = vrot.slane %v2257, 4
    %v2259 = vmax.f32 %v2257, %v2258
    %v2260 = vrot.slane %v2259, 2
    %v2261 = vmax.f32 %v2259, %v2260
    %v2262 = vrot.slane %v2261, 1
    %v2263 = vmax.f32 %v2261, %v2262
    %v2264 = vsel %vm1241, %v2206, -inf
    %v2265 = vrot.slane %v2264, 4
    %v2266 = vmax.f32 %v2264, %v2265
    %v2267 = vrot.slane %v2266, 2
    %v2268 = vmax.f32 %v2266, %v2267
    %v2269 = vrot.slane %v2268, 1
    %v2270 = vmax.f32 %v2268, %v2269
    %v2271 = vsel %vm1241, %v2207, -inf
    %v2272 = vrot.slane %v2271, 4
    %v2273 = vmax.f32 %v2271, %v2272
    %v2274 = vrot.slane %v2273, 2
    %v2275 = vmax.f32 %v2273, %v2274
    %v2276 = vrot.slane %v2275, 1
    %v2277 = vmax.f32 %v2275, %v2276
    %v2278 = vsel %vm1241, %v2208, -inf
    %v2279 = vrot.slane %v2278, 4
    %v2280 = vmax.f32 %v2278, %v2279
    %v2281 = vrot.slane %v2280, 2
    %v2282 = vmax.f32 %v2280, %v2281
    %v2283 = vrot.slane %v2282, 1
    %v2284 = vmax.f32 %v2282, %v2283
    %v2285 = vsel %vm1241, %v2209, -inf
    %v2286 = vrot.slane %v2285, 4
    %v2287 = vmax.f32 %v2285, %v2286
    %v2288 = vrot.slane %v2287, 2
    %v2289 = vmax.f32 %v2287, %v2288
    %v2290 = vrot.slane %v2289, 1
    %v2291 = vmax.f32 %v2289, %v2290
    %v2292 = vsel %vm1241, %v2210, -inf
    %v2293 = vrot.slane %v2292, 4
    %v2294 = vmax.f32 %v2292, %v2293
    %v2295 = vrot.slane %v2294, 2
    %v2296 = vmax.f32 %v2294, %v2295
    %v2297 = vrot.slane %v2296, 1
    %v2298 = vmax.f32 %v2296, %v2297
    %v2299 = vsel %vm1241, %v2211, -inf
    %v2300 = vrot.slane %v2299, 4
    %v2301 = vmax.f32 %v2299, %v2300
    %v2302 = vrot.slane %v2301, 2
    %v2303 = vmax.f32 %v2301, %v2302
    %v2304 = vrot.slane %v2303, 1
    %v2305 = vmax.f32 %v2303, %v2304
    %v2306 = vsel %vm1241, %v2212, -inf
    %v2307 = vrot.slane %v2306, 4
    %v2308 = vmax.f32 %v2306, %v2307
    %v2309 = vrot.slane %v2308, 2
    %v2310 = vmax.f32 %v2308, %v2309
    %v2311 = vrot.slane %v2310, 1
    %v2312 = vmax.f32 %v2310, %v2311
    %v2313 = vsel %vm1241, %v2213, -inf
    %v2314 = vrot.slane %v2313, 4
    %v2315 = vmax.f32 %v2313, %v2314
    %v2316 = vrot.slane %v2315, 2
    %v2317 = vmax.f32 %v2315, %v2316
    %v2318 = vrot.slane %v2317, 1
    %v2319 = vmax.f32 %v2317, %v2318
    %v2320 = vsel %vm1241, %v2214, -inf
    %v2321 = vrot.slane %v2320, 4
    %v2322 = vmax.f32 %v2320, %v2321
    %v2323 = vrot.slane %v2322, 2
    %v2324 = vmax.f32 %v2322, %v2323
    %v2325 = vrot.slane %v2324, 1
    %v2326 = vmax.f32 %v2324, %v2325
    %v2327 = vsub.f32 %v2199, %v2221
    %v2328 = vsub.f32 %v2200, %v2228
    %v2329 = vsub.f32 %v2201, %v2235
    %v2330 = vsub.f32 %v2202, %v2242
    %v2331 = vsub.f32 %v2203, %v2249
    %v2332 = vsub.f32 %v2204, %v2256
    %v2333 = vsub.f32 %v2205, %v2263
    %v2334 = vsub.f32 %v2206, %v2270
    %v2335 = vsub.f32 %v2207, %v2277
    %v2336 = vsub.f32 %v2208, %v2284
    %v2337 = vsub.f32 %v2209, %v2291
    %v2338 = vsub.f32 %v2210, %v2298
    %v2339 = vsub.f32 %v2211, %v2305
    %v2340 = vsub.f32 %v2212, %v2312
    %v2341 = vsub.f32 %v2213, %v2319
    %v2342 = vsub.f32 %v2214, %v2326
    %v2343 = vmul.f32 %v2327, 1.442695
    %v2344 = vpow.pop %v2343
    %v2345 = vmul.f32 %v2328, 1.442695
    %v2346 = vpow.pop %v2345
    %v2347 = vmul.f32 %v2329, 1.442695
    %v2348 = vpow.pop %v2347
    %v2349 = vmul.f32 %v2330, 1.442695
    %v2350 = vpow.pop %v2349
    %v2351 = vmul.f32 %v2331, 1.442695
    %v2352 = vpow.pop %v2351
    %v2353 = vmul.f32 %v2332, 1.442695
    %v2354 = vpow.pop %v2353
    %v2355 = vmul.f32 %v2333, 1.442695
    %v2356 = vpow.pop %v2355
    %v2357 = vmul.f32 %v2334, 1.442695
    %v2358 = vpow.pop %v2357
    %v2359 = vmul.f32 %v2335, 1.442695
    %v2360 = vpow.pop %v2359
    %v2361 = vmul.f32 %v2336, 1.442695
    %v2362 = vpow.pop %v2361
    %v2363 = vmul.f32 %v2337, 1.442695
    %v2364 = vpow.pop %v2363
    %v2365 = vmul.f32 %v2338, 1.442695
    %v2366 = vpow.pop %v2365
    %v2367 = vmul.f32 %v2339, 1.442695
    %v2368 = vpow.pop %v2367
    %v2369 = vmul.f32 %v2340, 1.442695
    %v2370 = vpow.pop %v2369
    %v2371 = vmul.f32 %v2341, 1.442695
    %v2372 = vpow.pop %v2371
    %v2373 = vmul.f32 %v2342, 1.442695
    %v2374 = vpow.pop %v2373
    %v2375 = vsel %vm1241, %v2344, 0.0
    %v2376 = vrot.slane %v2375, 4
    %v2377 = vadd.f32 %v2375, %v2376
    %v2378 = vrot.slane %v2377, 2
    %v2379 = vadd.f32 %v2377, %v2378
    %v2380 = vrot.slane %v2379, 1
    %v2381 = vadd.f32 %v2379, %v2380
    %v2382 = vsel %vm1241, %v2346, 0.0
    %v2383 = vrot.slane %v2382, 4
    %v2384 = vadd.f32 %v2382, %v2383
    %v2385 = vrot.slane %v2384, 2
    %v2386 = vadd.f32 %v2384, %v2385
    %v2387 = vrot.slane %v2386, 1
    %v2388 = vadd.f32 %v2386, %v2387
    %v2389 = vsel %vm1241, %v2348, 0.0
    %v2390 = vrot.slane %v2389, 4
    %v2391 = vadd.f32 %v2389, %v2390
    %v2392 = vrot.slane %v2391, 2
    %v2393 = vadd.f32 %v2391, %v2392
    %v2394 = vrot.slane %v2393, 1
    %v2395 = vadd.f32 %v2393, %v2394
    %v2396 = vsel %vm1241, %v2350, 0.0
    %v2397 = vrot.slane %v2396, 4
    %v2398 = vadd.f32 %v2396, %v2397
    %v2399 = vrot.slane %v2398, 2
    %v2400 = vadd.f32 %v2398, %v2399
    %v2401 = vrot.slane %v2400, 1
    %v2402 = vadd.f32 %v2400, %v2401
    %v2403 = vsel %vm1241, %v2352, 0.0
    %v2404 = vrot.slane %v2403, 4
    %v2405 = vadd.f32 %v2403, %v2404
    %v2406 = vrot.slane %v2405, 2
    %v2407 = vadd.f32 %v2405, %v2406
    %v2408 = vrot.slane %v2407, 1
    %v2409 = vadd.f32 %v2407, %v2408
    %v2410 = vsel %vm1241, %v2354, 0.0
    %v2411 = vrot.slane %v2410, 4
    %v2412 = vadd.f32 %v2410, %v2411
    %v2413 = vrot.slane %v2412, 2
    %v2414 = vadd.f32 %v2412, %v2413
    %v2415 = vrot.slane %v2414, 1
    %v2416 = vadd.f32 %v2414, %v2415
    %v2417 = vsel %vm1241, %v2356, 0.0
    %v2418 = vrot.slane %v2417, 4
    %v2419 = vadd.f32 %v2417, %v2418
    %v2420 = vrot.slane %v2419, 2
    %v2421 = vadd.f32 %v2419, %v2420
    %v2422 = vrot.slane %v2421, 1
    %v2423 = vadd.f32 %v2421, %v2422
    %v2424 = vsel %vm1241, %v2358, 0.0
    %v2425 = vrot.slane %v2424, 4
    %v2426 = vadd.f32 %v2424, %v2425
    %v2427 = vrot.slane %v2426, 2
    %v2428 = vadd.f32 %v2426, %v2427
    %v2429 = vrot.slane %v2428, 1
    %v2430 = vadd.f32 %v2428, %v2429
    %v2431 = vsel %vm1241, %v2360, 0.0
    %v2432 = vrot.slane %v2431, 4
    %v2433 = vadd.f32 %v2431, %v2432
    %v2434 = vrot.slane %v2433, 2
    %v2435 = vadd.f32 %v2433, %v2434
    %v2436 = vrot.slane %v2435, 1
    %v2437 = vadd.f32 %v2435, %v2436
    %v2438 = vsel %vm1241, %v2362, 0.0
    %v2439 = vrot.slane %v2438, 4
    %v2440 = vadd.f32 %v2438, %v2439
    %v2441 = vrot.slane %v2440, 2
    %v2442 = vadd.f32 %v2440, %v2441
    %v2443 = vrot.slane %v2442, 1
    %v2444 = vadd.f32 %v2442, %v2443
    %v2445 = vsel %vm1241, %v2364, 0.0
    %v2446 = vrot.slane %v2445, 4
    %v2447 = vadd.f32 %v2445, %v2446
    %v2448 = vrot.slane %v2447, 2
    %v2449 = vadd.f32 %v2447, %v2448
    %v2450 = vrot.slane %v2449, 1
    %v2451 = vadd.f32 %v2449, %v2450
    %v2452 = vsel %vm1241, %v2366, 0.0
    %v2453 = vrot.slane %v2452, 4
    %v2454 = vadd.f32 %v2452, %v2453
    %v2455 = vrot.slane %v2454, 2
    %v2456 = vadd.f32 %v2454, %v2455
    %v2457 = vrot.slane %v2456, 1
    %v2458 = vadd.f32 %v2456, %v2457
    %v2459 = vsel %vm1241, %v2368, 0.0
    %v2460 = vrot.slane %v2459, 4
    %v2461 = vadd.f32 %v2459, %v2460
    %v2462 = vrot.slane %v2461, 2
    %v2463 = vadd.f32 %v2461, %v2462
    %v2464 = vrot.slane %v2463, 1
    %v2465 = vadd.f32 %v2463, %v2464
    %v2466 = vsel %vm1241, %v2370, 0.0
    %v2467 = vrot.slane %v2466, 4
    %v2468 = vadd.f32 %v2466, %v2467
    %v2469 = vrot.slane %v2468, 2
    %v2470 = vadd.f32 %v2468, %v2469
    %v2471 = vrot.slane %v2470, 1
    %v2472 = vadd.f32 %v2470, %v2471
    %v2473 = vsel %vm1241, %v2372, 0.0
    %v2474 = vrot.slane %v2473, 4
    %v2475 = vadd.f32 %v2473, %v2474
    %v2476 = vrot.slane %v2475, 2
    %v2477 = vadd.f32 %v2475, %v2476
    %v2478 = vrot.slane %v2477, 1
    %v2479 = vadd.f32 %v2477, %v2478
    %v2480 = vsel %vm1241, %v2374, 0.0
    %v2481 = vrot.slane %v2480, 4
    %v2482 = vadd.f32 %v2480, %v2481
    %v2483 = vrot.slane %v2482, 2
    %v2484 = vadd.f32 %v2482, %v2483
    %v2485 = vrot.slane %v2484, 1
    %v2486 = vadd.f32 %v2484, %v2485
    %v2487 = vrcp.pop %v2381
    %v2488 = vmul.f32 %v2344, %v2487
    %v2489 = vrcp.pop %v2388
    %v2490 = vmul.f32 %v2346, %v2489
    %v2491 = vrcp.pop %v2395
    %v2492 = vmul.f32 %v2348, %v2491
    %v2493 = vrcp.pop %v2402
    %v2494 = vmul.f32 %v2350, %v2493
    %v2495 = vrcp.pop %v2409
    %v2496 = vmul.f32 %v2352, %v2495
    %v2497 = vrcp.pop %v2416
    %v2498 = vmul.f32 %v2354, %v2497
    %v2499 = vrcp.pop %v2423
    %v2500 = vmul.f32 %v2356, %v2499
    %v2501 = vrcp.pop %v2430
    %v2502 = vmul.f32 %v2358, %v2501
    %v2503 = vrcp.pop %v2437
    %v2504 = vmul.f32 %v2360, %v2503
    %v2505 = vrcp.pop %v2444
    %v2506 = vmul.f32 %v2362, %v2505
    %v2507 = vrcp.pop %v2451
    %v2508 = vmul.f32 %v2364, %v2507
    %v2509 = vrcp.pop %v2458
    %v2510 = vmul.f32 %v2366, %v2509
    %v2511 = vrcp.pop %v2465
    %v2512 = vmul.f32 %v2368, %v2511
    %v2513 = vrcp.pop %v2472
    %v2514 = vmul.f32 %v2370, %v2513
    %v2515 = vrcp.pop %v2479
    %v2516 = vmul.f32 %v2372, %v2515
    %v2517 = vrcp.pop %v2486
    %v2518 = vmul.f32 %v2374, %v2517
    %v2519 = vpack.c.bf16 %v2490, %v2488
    %v2520 = vpack.c.bf16 %v2494, %v2492
    %v2521 = vpack.c.bf16 %v2498, %v2496
    %v2522 = vpack.c.bf16 %v2502, %v2500
    %v2523 = vpack.c.bf16 %v2506, %v2504
    %v2524 = vpack.c.bf16 %v2510, %v2508
    %v2525 = vpack.c.bf16 %v2514, %v2512
    %v2526 = vpack.c.bf16 %v2518, %v2516
    %v2527 = vld [vmem:[#allocation14] sm:$0xf]
    %v2529 = vsel %vm1241, %v2519, 0
    %v2532 = vsel %vm1241, %v2520, 0
    %v2535 = vsel %vm1241, %v2521, 0
    %v2538 = vsel %vm1241, %v2522, 0
    %v2541 = vsel %vm1241, %v2523, 0
    %v2544 = vsel %vm1241, %v2524, 0
    %v2547 = vsel %vm1241, %v2525, 0
    %v2550 = vsel %vm1241, %v2526, 0
    %vm2552 = vcmask 1043456
    %v2554 = vsel %vm2552, %v2527, 0
    %2556 = vmatprep.subr.bf16.mxu0 0
    %2557 = vmatpush1.bf16.msra.mxu0 %v2554
    %2558 = vmatprep.subr.bf16.mxu0 0
    %2559 = vmatpush1.bf16.msra.mxu0 0
    %2560 = vmatprep.subr.bf16.mxu0 0
    %2561 = vmatpush1.bf16.msra.mxu0 0
    %2562 = vmatprep.subr.bf16.mxu0 0
    %2563 = vmatpush1.bf16.msra.mxu0 0
    %2564 = vmatprep.subr.bf16.mxu0 0
    %2565 = vmatpush1.bf16.msra.mxu0 0
    %2566 = vmatprep.subr.bf16.mxu0 0
    %2567 = vmatpush1.bf16.msra.mxu0 0
    %2568 = vmatprep.subr.bf16.mxu0 0
    %2569 = vmatpush1.bf16.msra.mxu0 0
    %2570 = vmatprep.subr.bf16.mxu0 0
    %2571 = vmatpush1.bf16.msra.mxu0 0
    %2572 = vmatprep.subr.bf16.mxu0 0
    %2573 = vmatpush1.bf16.msra.mxu0 0
    %2574 = vmatprep.subr.bf16.mxu0 0
    %2575 = vmatpush1.bf16.msra.mxu0 0
    %2576 = vmatprep.subr.bf16.mxu0 0
    %2577 = vmatpush1.bf16.msra.mxu0 0
    %2578 = vmatprep.subr.bf16.mxu0 0
    %2579 = vmatpush1.bf16.msra.mxu0 0
    %2580 = vmatprep.subr.bf16.mxu0 0
    %2581 = vmatpush1.bf16.msra.mxu0 0
    %2582 = vmatprep.subr.bf16.mxu0 0
    %2583 = vmatpush1.bf16.msra.mxu0 0
    %2584 = vmatprep.subr.bf16.mxu0 0
    %2585 = vmatpush1.bf16.msra.mxu0 0
    %2586 = vmatprep.subr.bf16.mxu0 0
    %2587 = vmatpush1.bf16.msra.mxu0 0
    %2588 = vmatprep.mubr.bf16.mxu0 0
    %2589 = vmatmul.mubr.bf16.gmra.mrb[0].mxu0 %v2529
    %v2590 = vpop.f32.mrb[0].mxu0
    %v2591 = vadd.f32 0.0, %v2590
    %v2592 = vpop.f32.mrb[0].mxu0
    %v2593 = vpop.f32.mrb[0].mxu0
    %v2594 = vadd.f32 0.0, %v2593
    %v2595 = vpop.f32.mrb[0].mxu0
    %2596 = vmatprep.mubr.bf16.mxu0 0
    %2597 = vmatmul.mubr.bf16.gmra.mrb[0].mxu0 %v2532
    %v2598 = vpop.f32.mrb[0].mxu0
    %v2599 = vadd.f32 0.0, %v2598
    %v2600 = vpop.f32.mrb[0].mxu0
    %v2601 = vpop.f32.mrb[0].mxu0
    %v2602 = vadd.f32 0.0, %v2601
    %v2603 = vpop.f32.mrb[0].mxu0
    %2604 = vmatprep.mubr.bf16.mxu0 0
    %2605 = vmatmul.mubr.bf16.gmra.mrb[0].mxu0 %v2535
    %v2606 = vpop.f32.mrb[0].mxu0
    %v2607 = vadd.f32 0.0, %v2606
    %v2608 = vpop.f32.mrb[0].mxu0
    %v2609 = vpop.f32.mrb[0].mxu0
    %v2610 = vadd.f32 0.0, %v2609
    %v2611 = vpop.f32.mrb[0].mxu0
    %2612 = vmatprep.mubr.bf16.mxu0 0
    %2613 = vmatmul.mubr.bf16.gmra.mrb[0].mxu0 %v2538
    %v2614 = vpop.f32.mrb[0].mxu0
    %v2615 = vadd.f32 0.0, %v2614
    %v2616 = vpop.f32.mrb[0].mxu0
    %v2617 = vpop.f32.mrb[0].mxu0
    %v2618 = vadd.f32 0.0, %v2617
    %v2619 = vpop.f32.mrb[0].mxu0
    %2620 = vmatprep.mubr.bf16.mxu0 0
    %2621 = vmatmul.mubr.bf16.gmra.mrb[0].mxu0 %v2541
    %v2622 = vpop.f32.mrb[0].mxu0
    %v2623 = vadd.f32 0.0, %v2622
    %v2624 = vpop.f32.mrb[0].mxu0
    %v2625 = vpop.f32.mrb[0].mxu0
    %v2626 = vadd.f32 0.0, %v2625
    %v2627 = vpop.f32.mrb[0].mxu0
    %2628 = vmatprep.mubr.bf16.mxu0 0
    %2629 = vmatmul.mubr.bf16.gmra.mrb[0].mxu0 %v2544
    %v2630 = vpop.f32.mrb[0].mxu0
    %v2631 = vadd.f32 0.0, %v2630
    %v2632 = vpop.f32.mrb[0].mxu0
    %v2633 = vpop.f32.mrb[0].mxu0
    %v2634 = vadd.f32 0.0, %v2633
    %v2635 = vpop.f32.mrb[0].mxu0
    %2636 = vmatprep.mubr.bf16.mxu0 0
    %2637 = vmatmul.mubr.bf16.gmra.mrb[0].mxu0 %v2547
    %v2638 = vpop.f32.mrb[0].mxu0
    %v2639 = vadd.f32 0.0, %v2638
    %v2640 = vpop.f32.mrb[0].mxu0
    %v2641 = vpop.f32.mrb[0].mxu0
    %v2642 = vadd.f32 0.0, %v2641
    %v2643 = vpop.f32.mrb[0].mxu0
    %2644 = vmatprep.mubr.bf16.mxu0 0
    %2645 = vmatmul.mubr.bf16.gmra.mrb[0].mxu0 %v2550
    %v2646 = vpop.f32.mrb[0].mxu0
    %v2647 = vadd.f32 0.0, %v2646
    %v2648 = vpop.f32.mrb[0].mxu0
    %v2649 = vpop.f32.mrb[0].mxu0
    %v2650 = vadd.f32 0.0, %v2649
    %v2651 = vpop.f32.mrb[0].mxu0
    %2652 = vdwg.mxu0
    %v2653 = vmul.f32 %v2591, %v555
    %v2654 = vmul.f32 %v2594, %v559
    %v2655 = vmul.f32 %v2599, %v565
    %v2656 = vmul.f32 %v2602, %v569
    %v2657 = vmul.f32 %v2607, %v575
    %v2658 = vmul.f32 %v2610, %v579
    %v2659 = vmul.f32 %v2615, %v585
    %v2660 = vmul.f32 %v2618, %v589
    %v2661 = vmul.f32 %v2623, %v595
    %v2662 = vmul.f32 %v2626, %v599
    %v2663 = vmul.f32 %v2631, %v605
    %v2664 = vmul.f32 %v2634, %v609
    %v2665 = vmul.f32 %v2639, %v615
    %v2666 = vmul.f32 %v2642, %v619
    %v2667 = vmul.f32 %v2647, %v625
    %v2668 = vmul.f32 %v2650, %v629
    %v2669 = vrot.slane %v2653, 4
    %v2670 = vadd.f32 %v2653, %v2669
    %v2671 = vrot.slane %v2670, 2
    %v2672 = vadd.f32 %v2670, %v2671
    %v2673 = vrot.slane %v2672, 1
    %v2674 = vadd.f32 %v2672, %v2673
    %v2675 = vrot.slane %v2654, 4
    %v2676 = vadd.f32 %v2654, %v2675
    %v2677 = vrot.slane %v2676, 2
    %v2678 = vadd.f32 %v2676, %v2677
    %v2679 = vrot.slane %v2678, 1
    %v2680 = vadd.f32 %v2678, %v2679
    %v2681 = vrot.slane %v2655, 4
    %v2682 = vadd.f32 %v2655, %v2681
    %v2683 = vrot.slane %v2682, 2
    %v2684 = vadd.f32 %v2682, %v2683
    %v2685 = vrot.slane %v2684, 1
    %v2686 = vadd.f32 %v2684, %v2685
    %v2687 = vrot.slane %v2656, 4
    %v2688 = vadd.f32 %v2656, %v2687
    %v2689 = vrot.slane %v2688, 2
    %v2690 = vadd.f32 %v2688, %v2689
    %v2691 = vrot.slane %v2690, 1
    %v2692 = vadd.f32 %v2690, %v2691
    %v2693 = vrot.slane %v2657, 4
    %v2694 = vadd.f32 %v2657, %v2693
    %v2695 = vrot.slane %v2694, 2
    %v2696 = vadd.f32 %v2694, %v2695
    %v2697 = vrot.slane %v2696, 1
    %v2698 = vadd.f32 %v2696, %v2697
    %v2699 = vrot.slane %v2658, 4
    %v2700 = vadd.f32 %v2658, %v2699
    %v2701 = vrot.slane %v2700, 2
    %v2702 = vadd.f32 %v2700, %v2701
    %v2703 = vrot.slane %v2702, 1
    %v2704 = vadd.f32 %v2702, %v2703
    %v2705 = vrot.slane %v2659, 4
    %v2706 = vadd.f32 %v2659, %v2705
    %v2707 = vrot.slane %v2706, 2
    %v2708 = vadd.f32 %v2706, %v2707
    %v2709 = vrot.slane %v2708, 1
    %v2710 = vadd.f32 %v2708, %v2709
    %v2711 = vrot.slane %v2660, 4
    %v2712 = vadd.f32 %v2660, %v2711
    %v2713 = vrot.slane %v2712, 2
    %v2714 = vadd.f32 %v2712, %v2713
    %v2715 = vrot.slane %v2714, 1
    %v2716 = vadd.f32 %v2714, %v2715
    %v2717 = vrot.slane %v2661, 4
    %v2718 = vadd.f32 %v2661, %v2717
    %v2719 = vrot.slane %v2718, 2
    %v2720 = vadd.f32 %v2718, %v2719
    %v2721 = vrot.slane %v2720, 1
    %v2722 = vadd.f32 %v2720, %v2721
    %v2723 = vrot.slane %v2662, 4
    %v2724 = vadd.f32 %v2662, %v2723
    %v2725 = vrot.slane %v2724, 2
    %v2726 = vadd.f32 %v2724, %v2725
    %v2727 = vrot.slane %v2726, 1
    %v2728 = vadd.f32 %v2726, %v2727
    %v2729 = vrot.slane %v2663, 4
    %v2730 = vadd.f32 %v2663, %v2729
    %v2731 = vrot.slane %v2730, 2
    %v2732 = vadd.f32 %v2730, %v2731
    %v2733 = vrot.slane %v2732, 1
    %v2734 = vadd.f32 %v2732, %v2733
    %v2735 = vrot.slane %v2664, 4
    %v2736 = vadd.f32 %v2664, %v2735
    %v2737 = vrot.slane %v2736, 2
    %v2738 = vadd.f32 %v2736, %v2737
    %v2739 = vrot.slane %v2738, 1
    %v2740 = vadd.f32 %v2738, %v2739
    %v2741 = vrot.slane %v2665, 4
    %v2742 = vadd.f32 %v2665, %v2741
    %v2743 = vrot.slane %v2742, 2
    %v2744 = vadd.f32 %v2742, %v2743
    %v2745 = vrot.slane %v2744, 1
    %v2746 = vadd.f32 %v2744, %v2745
    %v2747 = vrot.slane %v2666, 4
    %v2748 = vadd.f32 %v2666, %v2747
    %v2749 = vrot.slane %v2748, 2
    %v2750 = vadd.f32 %v2748, %v2749
    %v2751 = vrot.slane %v2750, 1
    %v2752 = vadd.f32 %v2750, %v2751
    %v2753 = vrot.slane %v2667, 4
    %v2754 = vadd.f32 %v2667, %v2753
    %v2755 = vrot.slane %v2754, 2
    %v2756 = vadd.f32 %v2754, %v2755
    %v2757 = vrot.slane %v2756, 1
    %v2758 = vadd.f32 %v2756, %v2757
    %v2759 = vrot.slane %v2668, 4
    %v2760 = vadd.f32 %v2668, %v2759
    %v2761 = vrot.slane %v2760, 2
    %v2762 = vadd.f32 %v2760, %v2761
    %v2763 = vrot.slane %v2762, 1
    %v2764 = vadd.f32 %v2762, %v2763
    %v2765 = vpack.c.bf16 %v2674, %v2674
    %v2766 = vpack.c.bf16 %v2680, %v2680
    %v2767 = vpack.c.bf16 %v2686, %v2686
    %v2768 = vpack.c.bf16 %v2692, %v2692
    %v2769 = vpack.c.bf16 %v2698, %v2698
    %v2770 = vpack.c.bf16 %v2704, %v2704
    %v2771 = vpack.c.bf16 %v2710, %v2710
    %v2772 = vpack.c.bf16 %v2716, %v2716
    %v2773 = vpack.c.bf16 %v2722, %v2722
    %v2774 = vpack.c.bf16 %v2728, %v2728
    %v2775 = vpack.c.bf16 %v2734, %v2734
    %v2776 = vpack.c.bf16 %v2740, %v2740
    %v2777 = vpack.c.bf16 %v2746, %v2746
    %v2778 = vpack.c.bf16 %v2752, %v2752
    %v2779 = vpack.c.bf16 %v2758, %v2758
    %v2780 = vpack.c.bf16 %v2764, %v2764
    %v2781 = vld [vmem:[%s6] sm:$0xf]
    %v2782 = vld [vmem:[%s6 + $0x4] sm:$0xf]
    %v2783 = vld [vmem:[%s6 + $0x8] sm:$0xf]
    %v2784 = vld [vmem:[%s6 + $0xc] sm:$0xf]
    %v2785 = vld [vmem:[%s6 + $0x10] sm:$0xf]
    %v2786 = vld [vmem:[%s6 + $0x14] sm:$0xf]
    %v2787 = vld [vmem:[%s6 + $0x18] sm:$0xf]
    %v2788 = vld [vmem:[%s6 + $0x1c] sm:$0xf]
    %v2789 = vld [vmem:[%s6 + $0x20] sm:$0xf]
    %v2790 = vld [vmem:[%s6 + $0x24] sm:$0xf]
    %v2791 = vld [vmem:[%s6 + $0x28] sm:$0xf]
    %v2792 = vld [vmem:[%s6 + $0x2c] sm:$0xf]
    %v2793 = vld [vmem:[%s6 + $0x30] sm:$0xf]
    %v2794 = vld [vmem:[%s6 + $0x34] sm:$0xf]
    %v2795 = vld [vmem:[%s6 + $0x38] sm:$0xf]
    %v2796 = vld [vmem:[%s6 + $0x3c] sm:$0xf]
    %v2797 = vlaneseq
    %v2798 = vshrl.u32 %v2797, 7
    %v2799 = vsub.s32 0, %v2798
    %v2800 = vrot.slane %v161, %v2799
    %v2817 = vunpack.c.l.b16 %v2765
    %v2818 = vunpack.c.l.b16 %v2766
    %v2819 = vunpack.c.l.b16 %v2767
    %v2820 = vunpack.c.l.b16 %v2768
    %v2821 = vunpack.c.l.b16 %v2769
    %v2822 = vunpack.c.l.b16 %v2770
    %v2823 = vunpack.c.l.b16 %v2771
    %v2824 = vunpack.c.l.b16 %v2772
    %v2825 = vunpack.c.l.b16 %v2773
    %v2826 = vunpack.c.l.b16 %v2774
    %v2827 = vunpack.c.l.b16 %v2775
    %v2828 = vunpack.c.l.b16 %v2776
    %v2829 = vunpack.c.l.b16 %v2777
    %v2830 = vunpack.c.l.b16 %v2778
    %v2831 = vunpack.c.l.b16 %v2779
    %v2832 = vunpack.c.l.b16 %v2780
    %v2833 = vsel %vm1218, %v2818, %v2817
    %v2834 = vsel %vm1220, %v2819, %v2833
    %v2835 = vsel %vm1222, %v2820, %v2834
    %v2836 = vsel %vm1224, %v2821, %v2835
    %v2837 = vsel %vm1226, %v2822, %v2836
    %v2838 = vsel %vm1228, %v2823, %v2837
    %v2839 = vsel %vm1230, %v2824, %v2838
    %v2840 = vsel %vm1218, %v2826, %v2825
    %v2841 = vsel %vm1220, %v2827, %v2840
    %v2842 = vsel %vm1222, %v2828, %v2841
    %v2843 = vsel %vm1224, %v2829, %v2842
    %v2844 = vsel %vm1226, %v2830, %v2843
    %v2845 = vsel %vm1228, %v2831, %v2844
    %v2846 = vsel %vm1230, %v2832, %v2845
    %v2847 = vpack.c.b16 %v2846, %v2839
    %v2865 = vunpack.c.l.b16 %v2781
    %v2866 = vunpack.c.l.b16 %v2782
    %v2867 = vunpack.c.l.b16 %v2783
    %v2868 = vunpack.c.l.b16 %v2784
    %v2869 = vunpack.c.l.b16 %v2785
    %v2870 = vunpack.c.l.b16 %v2786
    %v2871 = vunpack.c.l.b16 %v2787
    %v2872 = vunpack.c.l.b16 %v2788
    %v2873 = vunpack.c.l.b16 %v2789
    %v2874 = vunpack.c.l.b16 %v2790
    %v2875 = vunpack.c.l.b16 %v2791
    %v2876 = vunpack.c.l.b16 %v2792
    %v2877 = vunpack.c.l.b16 %v2793
    %v2878 = vunpack.c.l.b16 %v2794
    %v2879 = vunpack.c.l.b16 %v2795
    %v2880 = vunpack.c.l.b16 %v2796
    %v2881 = vpack.c.b16 %v2866, %v2865
    %v2882 = vpack.c.b16 %v2868, %v2867
    %v2883 = vpack.c.b16 %v2870, %v2869
    %v2884 = vpack.c.b16 %v2872, %v2871
    %v2885 = vpack.c.b16 %v2874, %v2873
    %v2886 = vpack.c.b16 %v2876, %v2875
    %v2887 = vpack.c.b16 %v2878, %v2877
    %v2888 = vpack.c.b16 %v2880, %v2879
    %2897 = vmatprep.subr.bf16.mxu0 0
    %2898 = vmatpush1.bf16.msra.mxu0 %v2881
    %2899 = vmatprep.subr.bf16.mxu0 0
    %2900 = vmatpush1.bf16.msra.mxu0 %v2882
    %2901 = vmatprep.subr.bf16.mxu0 0
    %2902 = vmatpush1.bf16.msra.mxu0 %v2883
    %2903 = vmatprep.subr.bf16.mxu0 0
    %2904 = vmatpush1.bf16.msra.mxu0 %v2884
    %2905 = vmatprep.subr.bf16.mxu0 0
    %2906 = vmatpush1.bf16.msra.mxu0 %v2885
    %2907 = vmatprep.subr.bf16.mxu0 0
    %2908 = vmatpush1.bf16.msra.mxu0 %v2886
    %2909 = vmatprep.subr.bf16.mxu0 0
    %2910 = vmatpush1.bf16.msra.mxu0 %v2887
    %2911 = vmatprep.subr.bf16.mxu0 0
    %2912 = vmatpush1.bf16.msra.mxu0 %v2888
    %2913 = vmatprep.subr.bf16.mxu0 0
    %2914 = vmatpush1.bf16.msra.mxu0 0
    %2915 = vmatprep.subr.bf16.mxu0 0
    %2916 = vmatpush1.bf16.msra.mxu0 0
    %2917 = vmatprep.subr.bf16.mxu0 0
    %2918 = vmatpush1.bf16.msra.mxu0 0
    %2919 = vmatprep.subr.bf16.mxu0 0
    %2920 = vmatpush1.bf16.msra.mxu0 0
    %2921 = vmatprep.subr.bf16.mxu0 0
    %2922 = vmatpush1.bf16.msra.mxu0 0
    %2923 = vmatprep.subr.bf16.mxu0 0
    %2924 = vmatpush1.bf16.msra.mxu0 0
    %2925 = vmatprep.subr.bf16.mxu0 0
    %2926 = vmatpush1.bf16.msra.mxu0 0
    %2927 = vmatprep.subr.bf16.mxu0 0
    %2928 = vmatpush1.bf16.msra.mxu0 0
    %2929 = vmatprep.mubr.bf16.mxu0 0
    %2930 = vmatmul.mubr.bf16.gmra.mrb[0].mxu0 %v2847
    %v2931 = vpop.f32.mrb[0].mxu0
    %v2932 = vadd.f32 %v2800, %v2931
    %v2933 = vpop.f32.mrb[0].mxu0
    %v2934 = vpop.f32.mrb[0].mxu0
    %v2935 = vadd.f32 %v2800, %v2934
    %v2936 = vpop.f32.mrb[0].mxu0
    %2937 = vdwg.mxu0
    %v2938 = vadd.f32 %v845, %v2932
    %v2939 = vadd.f32 %v849, %v2935
    %2940 = vadd.xlane.f32.xlu0 %v2938
    %v2941 = vpop.xlane.xlu0 %2940
    %2942 = vadd.xlane.f32.xlu0 %v2939
    %v2943 = vpop.xlane.xlu0 %2942
    %v2944 = vrcp.pop 128.0
    %v2945 = vmul.f32 %v2941, %v2944
    %v2946 = vmul.f32 %v2943, %v2944
    %v2947 = vsub.f32 %v2938, %v2945
    %v2948 = vsub.f32 %v2939, %v2946
    %v2949 = vmul.f32 %v2947, %v2947
    %v2950 = vmul.f32 %v2948, %v2948
    %2951 = vadd.xlane.f32.xlu0 %v2949
    %v2952 = vpop.xlane.xlu0 %2951
    %2953 = vadd.xlane.f32.xlu0 %v2950
    %v2954 = vpop.xlane.xlu0 %2953
    %v2955 = vmul.f32 %v2952, %v2944
    %v2956 = vmul.f32 %v2954, %v2944
    %v2957 = vadd.f32 %v2955, 1e-05
    %v2958 = vadd.f32 %v2956, 1e-05
    %v2959 = vrsqrt.pop %v2957
    %v2960 = vrsqrt.pop %v2958
    %v2961 = vmul.f32 %v2947, %v2959
    %v2962 = vmul.f32 %v2948, %v2960
    %v2963 = vlaneseq
    %v2964 = vshrl.u32 %v2963, 7
    %v2965 = vsub.s32 0, %v2964
    %v2966 = vrot.slane %v157, %v2965
    %v2967 = vmul.f32 %v2961, %v2966
    %v2968 = vmul.f32 %v2962, %v2966
    %v2969 = vlaneseq
    %v2970 = vshrl.u32 %v2969, 7
    %v2971 = vsub.s32 0, %v2970
    %v2972 = vrot.slane %v158, %v2971
    %v2973 = vadd.f32 %v2967, %v2972
    %v2974 = vadd.f32 %v2968, %v2972
    %v2975 = vpack.c.bf16 %v2974, %v2973
    %v2976 = vld [vmem:[#allocation10] sm:$0xff]
    %v2977 = vld [vmem:[#allocation10 + $0x8] sm:$0xff]
    %v2978 = vld [vmem:[#allocation10 + $0x10] sm:$0xff]
    %v2979 = vld [vmem:[#allocation10 + $0x18] sm:$0xff]
    %v2980 = vld [vmem:[#allocation10 + $0x20] sm:$0xff]
    %v2981 = vld [vmem:[#allocation10 + $0x28] sm:$0xff]
    %v2982 = vld [vmem:[#allocation10 + $0x30] sm:$0xff]
    %v2983 = vld [vmem:[#allocation10 + $0x38] sm:$0xff]
    %v2984 = vld [vmem:[#allocation10 + $0x40] sm:$0xff]
    %v2985 = vld [vmem:[#allocation10 + $0x48] sm:$0xff]
    %v2986 = vld [vmem:[#allocation10 + $0x50] sm:$0xff]
    %v2987 = vld [vmem:[#allocation10 + $0x58] sm:$0xff]
    %v2988 = vld [vmem:[#allocation10 + $0x60] sm:$0xff]
    %v2989 = vld [vmem:[#allocation10 + $0x68] sm:$0xff]
    %v2990 = vld [vmem:[#allocation10 + $0x70] sm:$0xff]
    %v2991 = vld [vmem:[#allocation10 + $0x78] sm:$0xff]
    %v2992 = vld [vmem:[#allocation10 + $0x80] sm:$0xff]
    %v2993 = vld [vmem:[#allocation10 + $0x88] sm:$0xff]
    %v2994 = vld [vmem:[#allocation10 + $0x90] sm:$0xff]
    %v2995 = vld [vmem:[#allocation10 + $0x98] sm:$0xff]
    %v2996 = vld [vmem:[#allocation10 + $0xa0] sm:$0xff]
    %v2997 = vld [vmem:[#allocation10 + $0xa8] sm:$0xff]
    %v2998 = vld [vmem:[#allocation10 + $0xb0] sm:$0xff]
    %v2999 = vld [vmem:[#allocation10 + $0xb8] sm:$0xff]
    %v3000 = vld [vmem:[#allocation10 + $0xc0] sm:$0xff]
    %v3001 = vld [vmem:[#allocation10 + $0xc8] sm:$0xff]
    %v3002 = vld [vmem:[#allocation10 + $0xd0] sm:$0xff]
    %v3003 = vld [vmem:[#allocation10 + $0xd8] sm:$0xff]
    %v3004 = vld [vmem:[#allocation10 + $0xe0] sm:$0xff]
    %v3005 = vld [vmem:[#allocation10 + $0xe8] sm:$0xff]
    %v3006 = vld [vmem:[#allocation10 + $0xf0] sm:$0xff]
    %v3007 = vld [vmem:[#allocation10 + $0xf8] sm:$0xff]
    %v3008 = vld [vmem:[%s8] sm:$0xf]
    %v3010 = vlaneseq
    %v3011 = vshrl.u32 %v3010, 7
    %v3012 = vsub.s32 0, %v3011
    %v3013 = vrot.slane %v3008, %v3012
    %v3014 = vlaneseq
    %v3015 = vshrl.u32 %v3014, 7
    %v3016 = vsub.s32 1, %v3015
    %v3017 = vrot.slane %v3008, %v3016
    %v3018 = vlaneseq
    %v3019 = vshrl.u32 %v3018, 7
    %v3020 = vsub.s32 2, %v3019
    %v3021 = vrot.slane %v3008, %v3020
    %v3022 = vlaneseq
    %v3023 = vshrl.u32 %v3022, 7
    %v3024 = vsub.s32 3, %v3023
    %v3025 = vrot.slane %v3008, %v3024
    %v3062 = vunpack.c.l.b16 %v2976
    %v3063 = vunpack.c.h.b16 %v2976
    %v3064 = vunpack.c.l.b16 %v2977
    %v3065 = vunpack.c.h.b16 %v2977
    %v3066 = vunpack.c.l.b16 %v2978
    %v3067 = vunpack.c.h.b16 %v2978
    %v3068 = vunpack.c.l.b16 %v2979
    %v3069 = vunpack.c.h.b16 %v2979
    %v3070 = vunpack.c.l.b16 %v2980
    %v3071 = vunpack.c.h.b16 %v2980
    %v3072 = vunpack.c.l.b16 %v2981
    %v3073 = vunpack.c.h.b16 %v2981
    %v3074 = vunpack.c.l.b16 %v2982
    %v3075 = vunpack.c.h.b16 %v2982
    %v3076 = vunpack.c.l.b16 %v2983
    %v3077 = vunpack.c.h.b16 %v2983
    %v3078 = vunpack.c.l.b16 %v2984
    %v3079 = vunpack.c.h.b16 %v2984
    %v3080 = vunpack.c.l.b16 %v2985
    %v3081 = vunpack.c.h.b16 %v2985
    %v3082 = vunpack.c.l.b16 %v2986
    %v3083 = vunpack.c.h.b16 %v2986
    %v3084 = vunpack.c.l.b16 %v2987
    %v3085 = vunpack.c.h.b16 %v2987
    %v3086 = vunpack.c.l.b16 %v2988
    %v3087 = vunpack.c.h.b16 %v2988
    %v3088 = vunpack.c.l.b16 %v2989
    %v3089 = vunpack.c.h.b16 %v2989
    %v3090 = vunpack.c.l.b16 %v2990
    %v3091 = vunpack.c.h.b16 %v2990
    %v3092 = vunpack.c.l.b16 %v2991
    %v3093 = vunpack.c.h.b16 %v2991
    %v3094 = vunpack.c.l.b16 %v2992
    %v3095 = vunpack.c.h.b16 %v2992
    %v3096 = vunpack.c.l.b16 %v2993
    %v3097 = vunpack.c.h.b16 %v2993
    %v3098 = vunpack.c.l.b16 %v2994
    %v3099 = vunpack.c.h.b16 %v2994
    %v3100 = vunpack.c.l.b16 %v2995
    %v3101 = vunpack.c.h.b16 %v2995
    %v3102 = vunpack.c.l.b16 %v2996
    %v3103 = vunpack.c.h.b16 %v2996
    %v3104 = vunpack.c.l.b16 %v2997
    %v3105 = vunpack.c.h.b16 %v2997
    %v3106 = vunpack.c.l.b16 %v2998
    %v3107 = vunpack.c.h.b16 %v2998
    %v3108 = vunpack.c.l.b16 %v2999
    %v3109 = vunpack.c.h.b16 %v2999
    %v3110 = vunpack.c.l.b16 %v3000
    %v3111 = vunpack.c.h.b16 %v3000
    %v3112 = vunpack.c.l.b16 %v3001
    %v3113 = vunpack.c.h.b16 %v3001
    %v3114 = vunpack.c.l.b16 %v3002
    %v3115 = vunpack.c.h.b16 %v3002
    %v3116 = vunpack.c.l.b16 %v3003
    %v3117 = vunpack.c.h.b16 %v3003
    %v3118 = vunpack.c.l.b16 %v3004
    %v3119 = vunpack.c.h.b16 %v3004
    %v3120 = vunpack.c.l.b16 %v3005
    %v3121 = vunpack.c.h.b16 %v3005
    %v3122 = vunpack.c.l.b16 %v3006
    %v3123 = vunpack.c.h.b16 %v3006
    %v3124 = vunpack.c.l.b16 %v3007
    %v3125 = vunpack.c.h.b16 %v3007
    %v3126 = vpack.c.b16 %v3066, %v3062
    %v3127 = vpack.c.b16 %v3067, %v3063
    %v3128 = vpack.c.b16 %v3068, %v3064
    %v3129 = vpack.c.b16 %v3069, %v3065
    %v3130 = vpack.c.b16 %v3074, %v3070
    %v3131 = vpack.c.b16 %v3075, %v3071
    %v3132 = vpack.c.b16 %v3076, %v3072
    %v3133 = vpack.c.b16 %v3077, %v3073
    %v3134 = vpack.c.b16 %v3082, %v3078
    %v3135 = vpack.c.b16 %v3083, %v3079
    %v3136 = vpack.c.b16 %v3084, %v3080
    %v3137 = vpack.c.b16 %v3085, %v3081
    %v3138 = vpack.c.b16 %v3090, %v3086
    %v3139 = vpack.c.b16 %v3091, %v3087
    %v3140 = vpack.c.b16 %v3092, %v3088
    %v3141 = vpack.c.b16 %v3093, %v3089
    %v3142 = vpack.c.b16 %v3098, %v3094
    %v3143 = vpack.c.b16 %v3099, %v3095
    %v3144 = vpack.c.b16 %v3100, %v3096
    %v3145 = vpack.c.b16 %v3101, %v3097
    %v3146 = vpack.c.b16 %v3106, %v3102
    %v3147 = vpack.c.b16 %v3107, %v3103
    %v3148 = vpack.c.b16 %v3108, %v3104
    %v3149 = vpack.c.b16 %v3109, %v3105
    %v3150 = vpack.c.b16 %v3114, %v3110
    %v3151 = vpack.c.b16 %v3115, %v3111
    %v3152 = vpack.c.b16 %v3116, %v3112
    %v3153 = vpack.c.b16 %v3117, %v3113
    %v3154 = vpack.c.b16 %v3122, %v3118
    %v3155 = vpack.c.b16 %v3123, %v3119
    %v3156 = vpack.c.b16 %v3124, %v3120
    %v3157 = vpack.c.b16 %v3125, %v3121
    %3190 = vmatprep.subr.bf16.mxu0 %v3127
    %3191 = vmatpush1.bf16.msra.mxu0 %v3126
    %3192 = vmatprep.subr.bf16.mxu0 %v3131
    %3193 = vmatpush1.bf16.msra.mxu0 %v3130
    %3194 = vmatprep.subr.bf16.mxu0 %v3135
    %3195 = vmatpush1.bf16.msra.mxu0 %v3134
    %3196 = vmatprep.subr.bf16.mxu0 %v3139
    %3197 = vmatpush1.bf16.msra.mxu0 %v3138
    %3198 = vmatprep.subr.bf16.mxu0 %v3143
    %3199 = vmatpush1.bf16.msra.mxu0 %v3142
    %3200 = vmatprep.subr.bf16.mxu0 %v3147
    %3201 = vmatpush1.bf16.msra.mxu0 %v3146
    %3202 = vmatprep.subr.bf16.mxu0 %v3151
    %3203 = vmatpush1.bf16.msra.mxu0 %v3150
    %3204 = vmatprep.subr.bf16.mxu0 %v3155
    %3205 = vmatpush1.bf16.msra.mxu0 %v3154
    %3206 = vmatprep.subr.bf16.mxu0 0
    %3207 = vmatpush1.bf16.msra.mxu0 0
    %3208 = vmatprep.subr.bf16.mxu0 0
    %3209 = vmatpush1.bf16.msra.mxu0 0
    %3210 = vmatprep.subr.bf16.mxu0 0
    %3211 = vmatpush1.bf16.msra.mxu0 0
    %3212 = vmatprep.subr.bf16.mxu0 0
    %3213 = vmatpush1.bf16.msra.mxu0 0
    %3214 = vmatprep.subr.bf16.mxu0 0
    %3215 = vmatpush1.bf16.msra.mxu0 0
    %3216 = vmatprep.subr.bf16.mxu0 0
    %3217 = vmatpush1.bf16.msra.mxu0 0
    %3218 = vmatprep.subr.bf16.mxu0 0
    %3219 = vmatpush1.bf16.msra.mxu0 0
    %3220 = vmatprep.subr.bf16.mxu0 0
    %3221 = vmatpush1.bf16.msra.mxu0 0
    %3222 = vmatprep.mubr.bf16.mxu0 0
    %3223 = vmatmul.mubr.bf16.gmra.mrb[0].mxu0 %v2975
    %v3224 = vpop.f32.mrb[0].mxu0
    %v3225 = vadd.f32 %v3013, %v3224
    %v3226 = vpop.f32.mrb[0].mxu0
    %v3227 = vadd.f32 %v3017, %v3226
    %v3228 = vpop.f32.mrb[0].mxu0
    %v3229 = vadd.f32 %v3013, %v3228
    %v3230 = vpop.f32.mrb[0].mxu0
    %v3231 = vadd.f32 %v3017, %v3230
    %3232 = vdwg.mxu0
    %3233 = vmatprep.subr.bf16.mxu0 %v3129
    %3234 = vmatpush1.bf16.msra.mxu0 %v3128
    %3235 = vmatprep.subr.bf16.mxu0 %v3133
    %3236 = vmatpush1.bf16.msra.mxu0 %v3132
    %3237 = vmatprep.subr.bf16.mxu0 %v3137
    %3238 = vmatpush1.bf16.msra.mxu0 %v3136
    %3239 = vmatprep.subr.bf16.mxu0 %v3141
    %3240 = vmatpush1.bf16.msra.mxu0 %v3140
    %3241 = vmatprep.subr.bf16.mxu0 %v3145
    %3242 = vmatpush1.bf16.msra.mxu0 %v3144
    %3243 = vmatprep.subr.bf16.mxu0 %v3149
    %3244 = vmatpush1.bf16.msra.mxu0 %v3148
    %3245 = vmatprep.subr.bf16.mxu0 %v3153
    %3246 = vmatpush1.bf16.msra.mxu0 %v3152
    %3247 = vmatprep.subr.bf16.mxu0 %v3157
    %3248 = vmatpush1.bf16.msra.mxu0 %v3156
    %3249 = vmatprep.subr.bf16.mxu0 0
    %3250 = vmatpush1.bf16.msra.mxu0 0
    %3251 = vmatprep.subr.bf16.mxu0 0
    %3252 = vmatpush1.bf16.msra.mxu0 0
    %3253 = vmatprep.subr.bf16.mxu0 0
    %3254 = vmatpush1.bf16.msra.mxu0 0
    %3255 = vmatprep.subr.bf16.mxu0 0
    %3256 = vmatpush1.bf16.msra.mxu0 0
    %3257 = vmatprep.subr.bf16.mxu0 0
    %3258 = vmatpush1.bf16.msra.mxu0 0
    %3259 = vmatprep.subr.bf16.mxu0 0
    %3260 = vmatpush1.bf16.msra.mxu0 0
    %3261 = vmatprep.subr.bf16.mxu0 0
    %3262 = vmatpush1.bf16.msra.mxu0 0
    %3263 = vmatprep.subr.bf16.mxu0 0
    %3264 = vmatpush1.bf16.msra.mxu0 0
    %3265 = vmatprep.mubr.bf16.mxu0 0
    %3266 = vmatmul.mubr.bf16.gmra.mrb[0].mxu0 %v2975
    %v3267 = vpop.f32.mrb[0].mxu0
    %v3268 = vadd.f32 %v3021, %v3267
    %v3269 = vpop.f32.mrb[0].mxu0
    %v3270 = vadd.f32 %v3025, %v3269
    %v3271 = vpop.f32.mrb[0].mxu0
    %v3272 = vadd.f32 %v3021, %v3271
    %v3273 = vpop.f32.mrb[0].mxu0
    %v3274 = vadd.f32 %v3025, %v3273
    %3275 = vdwg.mxu0
    %v3276 = vmax.f32 %v3225, 0.0
    %v3277 = vmax.f32 %v3227, 0.0
    %v3278 = vmax.f32 %v3268, 0.0
    %v3279 = vmax.f32 %v3270, 0.0
    %v3280 = vmax.f32 %v3229, 0.0
    %v3281 = vmax.f32 %v3231, 0.0
    %v3282 = vmax.f32 %v3272, 0.0
    %v3283 = vmax.f32 %v3274, 0.0
    %v3284 = vpack.c.bf16 %v3280, %v3276
    %v3285 = vpack.c.bf16 %v3281, %v3277
    %v3286 = vpack.c.bf16 %v3282, %v3278
    %v3287 = vpack.c.bf16 %v3283, %v3279
    %v3288 = vld [vmem:[#allocation11] sm:$0xf]
    %v3289 = vld [vmem:[#allocation11 + $0x4] sm:$0xf]
    %v3290 = vld [vmem:[#allocation11 + $0x8] sm:$0xf]
    %v3291 = vld [vmem:[#allocation11 + $0xc] sm:$0xf]
    %v3292 = vld [vmem:[#allocation11 + $0x10] sm:$0xf]
    %v3293 = vld [vmem:[#allocation11 + $0x14] sm:$0xf]
    %v3294 = vld [vmem:[#allocation11 + $0x18] sm:$0xf]
    %v3295 = vld [vmem:[#allocation11 + $0x1c] sm:$0xf]
    %v3296 = vld [vmem:[#allocation11 + $0x20] sm:$0xf]
    %v3297 = vld [vmem:[#allocation11 + $0x24] sm:$0xf]
    %v3298 = vld [vmem:[#allocation11 + $0x28] sm:$0xf]
    %v3299 = vld [vmem:[#allocation11 + $0x2c] sm:$0xf]
    %v3300 = vld [vmem:[#allocation11 + $0x30] sm:$0xf]
    %v3301 = vld [vmem:[#allocation11 + $0x34] sm:$0xf]
    %v3302 = vld [vmem:[#allocation11 + $0x38] sm:$0xf]
    %v3303 = vld [vmem:[#allocation11 + $0x3c] sm:$0xf]
    %v3304 = vld [vmem:[#allocation11 + $0x40] sm:$0xf]
    %v3305 = vld [vmem:[#allocation11 + $0x44] sm:$0xf]
    %v3306 = vld [vmem:[#allocation11 + $0x48] sm:$0xf]
    %v3307 = vld [vmem:[#allocation11 + $0x4c] sm:$0xf]
    %v3308 = vld [vmem:[#allocation11 + $0x50] sm:$0xf]
    %v3309 = vld [vmem:[#allocation11 + $0x54] sm:$0xf]
    %v3310 = vld [vmem:[#allocation11 + $0x58] sm:$0xf]
    %v3311 = vld [vmem:[#allocation11 + $0x5c] sm:$0xf]
    %v3312 = vld [vmem:[#allocation11 + $0x60] sm:$0xf]
    %v3313 = vld [vmem:[#allocation11 + $0x64] sm:$0xf]
    %v3314 = vld [vmem:[#allocation11 + $0x68] sm:$0xf]
    %v3315 = vld [vmem:[#allocation11 + $0x6c] sm:$0xf]
    %v3316 = vld [vmem:[#allocation11 + $0x70] sm:$0xf]
    %v3317 = vld [vmem:[#allocation11 + $0x74] sm:$0xf]
    %v3318 = vld [vmem:[#allocation11 + $0x78] sm:$0xf]
    %v3319 = vld [vmem:[#allocation11 + $0x7c] sm:$0xf]
    %v3320 = vld [vmem:[#allocation11 + $0x80] sm:$0xf]
    %v3321 = vld [vmem:[#allocation11 + $0x84] sm:$0xf]
    %v3322 = vld [vmem:[#allocation11 + $0x88] sm:$0xf]
    %v3323 = vld [vmem:[#allocation11 + $0x8c] sm:$0xf]
    %v3324 = vld [vmem:[#allocation11 + $0x90] sm:$0xf]
    %v3325 = vld [vmem:[#allocation11 + $0x94] sm:$0xf]
    %v3326 = vld [vmem:[#allocation11 + $0x98] sm:$0xf]
    %v3327 = vld [vmem:[#allocation11 + $0x9c] sm:$0xf]
    %v3328 = vld [vmem:[#allocation11 + $0xa0] sm:$0xf]
    %v3329 = vld [vmem:[#allocation11 + $0xa4] sm:$0xf]
    %v3330 = vld [vmem:[#allocation11 + $0xa8] sm:$0xf]
    %v3331 = vld [vmem:[#allocation11 + $0xac] sm:$0xf]
    %v3332 = vld [vmem:[#allocation11 + $0xb0] sm:$0xf]
    %v3333 = vld [vmem:[#allocation11 + $0xb4] sm:$0xf]
    %v3334 = vld [vmem:[#allocation11 + $0xb8] sm:$0xf]
    %v3335 = vld [vmem:[#allocation11 + $0xbc] sm:$0xf]
    %v3336 = vld [vmem:[#allocation11 + $0xc0] sm:$0xf]
    %v3337 = vld [vmem:[#allocation11 + $0xc4] sm:$0xf]
    %v3338 = vld [vmem:[#allocation11 + $0xc8] sm:$0xf]
    %v3339 = vld [vmem:[#allocation11 + $0xcc] sm:$0xf]
    %v3340 = vld [vmem:[#allocation11 + $0xd0] sm:$0xf]
    %v3341 = vld [vmem:[#allocation11 + $0xd4] sm:$0xf]
    %v3342 = vld [vmem:[#allocation11 + $0xd8] sm:$0xf]
    %v3343 = vld [vmem:[#allocation11 + $0xdc] sm:$0xf]
    %v3344 = vld [vmem:[#allocation11 + $0xe0] sm:$0xf]
    %v3345 = vld [vmem:[#allocation11 + $0xe4] sm:$0xf]
    %v3346 = vld [vmem:[#allocation11 + $0xe8] sm:$0xf]
    %v3347 = vld [vmem:[#allocation11 + $0xec] sm:$0xf]
    %v3348 = vld [vmem:[#allocation11 + $0xf0] sm:$0xf]
    %v3349 = vld [vmem:[#allocation11 + $0xf4] sm:$0xf]
    %v3350 = vld [vmem:[#allocation11 + $0xf8] sm:$0xf]
    %v3351 = vld [vmem:[#allocation11 + $0xfc] sm:$0xf]
    %v3352 = vlaneseq
    %v3353 = vshrl.u32 %v3352, 7
    %v3354 = vsub.s32 0, %v3353
    %v3355 = vrot.slane %v162, %v3354
    %v3420 = vunpack.c.l.b16 %v3288
    %v3421 = vunpack.c.l.b16 %v3289
    %v3422 = vunpack.c.l.b16 %v3290
    %v3423 = vunpack.c.l.b16 %v3291
    %v3424 = vunpack.c.l.b16 %v3292
    %v3425 = vunpack.c.l.b16 %v3293
    %v3426 = vunpack.c.l.b16 %v3294
    %v3427 = vunpack.c.l.b16 %v3295
    %v3428 = vunpack.c.l.b16 %v3296
    %v3429 = vunpack.c.l.b16 %v3297
    %v3430 = vunpack.c.l.b16 %v3298
    %v3431 = vunpack.c.l.b16 %v3299
    %v3432 = vunpack.c.l.b16 %v3300
    %v3433 = vunpack.c.l.b16 %v3301
    %v3434 = vunpack.c.l.b16 %v3302
    %v3435 = vunpack.c.l.b16 %v3303
    %v3436 = vunpack.c.l.b16 %v3304
    %v3437 = vunpack.c.l.b16 %v3305
    %v3438 = vunpack.c.l.b16 %v3306
    %v3439 = vunpack.c.l.b16 %v3307
    %v3440 = vunpack.c.l.b16 %v3308
    %v3441 = vunpack.c.l.b16 %v3309
    %v3442 = vunpack.c.l.b16 %v3310
    %v3443 = vunpack.c.l.b16 %v3311
    %v3444 = vunpack.c.l.b16 %v3312
    %v3445 = vunpack.c.l.b16 %v3313
    %v3446 = vunpack.c.l.b16 %v3314
    %v3447 = vunpack.c.l.b16 %v3315
    %v3448 = vunpack.c.l.b16 %v3316
    %v3449 = vunpack.c.l.b16 %v3317
    %v3450 = vunpack.c.l.b16 %v3318
    %v3451 = vunpack.c.l.b16 %v3319
    %v3452 = vunpack.c.l.b16 %v3320
    %v3453 = vunpack.c.l.b16 %v3321
    %v3454 = vunpack.c.l.b16 %v3322
    %v3455 = vunpack.c.l.b16 %v3323
    %v3456 = vunpack.c.l.b16 %v3324
    %v3457 = vunpack.c.l.b16 %v3325
    %v3458 = vunpack.c.l.b16 %v3326
    %v3459 = vunpack.c.l.b16 %v3327
    %v3460 = vunpack.c.l.b16 %v3328
    %v3461 = vunpack.c.l.b16 %v3329
    %v3462 = vunpack.c.l.b16 %v3330
    %v3463 = vunpack.c.l.b16 %v3331
    %v3464 = vunpack.c.l.b16 %v3332
    %v3465 = vunpack.c.l.b16 %v3333
    %v3466 = vunpack.c.l.b16 %v3334
    %v3467 = vunpack.c.l.b16 %v3335
    %v3468 = vunpack.c.l.b16 %v3336
    %v3469 = vunpack.c.l.b16 %v3337
    %v3470 = vunpack.c.l.b16 %v3338
    %v3471 = vunpack.c.l.b16 %v3339
    %v3472 = vunpack.c.l.b16 %v3340
    %v3473 = vunpack.c.l.b16 %v3341
    %v3474 = vunpack.c.l.b16 %v3342
    %v3475 = vunpack.c.l.b16 %v3343
    %v3476 = vunpack.c.l.b16 %v3344
    %v3477 = vunpack.c.l.b16 %v3345
    %v3478 = vunpack.c.l.b16 %v3346
    %v3479 = vunpack.c.l.b16 %v3347
    %v3480 = vunpack.c.l.b16 %v3348
    %v3481 = vunpack.c.l.b16 %v3349
    %v3482 = vunpack.c.l.b16 %v3350
    %v3483 = vunpack.c.l.b16 %v3351
    %v3484 = vpack.c.b16 %v3421, %v3420
    %v3485 = vpack.c.b16 %v3423, %v3422
    %v3486 = vpack.c.b16 %v3425, %v3424
    %v3487 = vpack.c.b16 %v3427, %v3426
    %v3488 = vpack.c.b16 %v3429, %v3428
    %v3489 = vpack.c.b16 %v3431, %v3430
    %v3490 = vpack.c.b16 %v3433, %v3432
    %v3491 = vpack.c.b16 %v3435, %v3434
    %v3492 = vpack.c.b16 %v3437, %v3436
    %v3493 = vpack.c.b16 %v3439, %v3438
    %v3494 = vpack.c.b16 %v3441, %v3440
    %v3495 = vpack.c.b16 %v3443, %v3442
    %v3496 = vpack.c.b16 %v3445, %v3444
    %v3497 = vpack.c.b16 %v3447, %v3446
    %v3498 = vpack.c.b16 %v3449, %v3448
    %v3499 = vpack.c.b16 %v3451, %v3450
    %v3500 = vpack.c.b16 %v3453, %v3452
    %v3501 = vpack.c.b16 %v3455, %v3454
    %v3502 = vpack.c.b16 %v3457, %v3456
    %v3503 = vpack.c.b16 %v3459, %v3458
    %v3504 = vpack.c.b16 %v3461, %v3460
    %v3505 = vpack.c.b16 %v3463, %v3462
    %v3506 = vpack.c.b16 %v3465, %v3464
    %v3507 = vpack.c.b16 %v3467, %v3466
    %v3508 = vpack.c.b16 %v3469, %v3468
    %v3509 = vpack.c.b16 %v3471, %v3470
    %v3510 = vpack.c.b16 %v3473, %v3472
    %v3511 = vpack.c.b16 %v3475, %v3474
    %v3512 = vpack.c.b16 %v3477, %v3476
    %v3513 = vpack.c.b16 %v3479, %v3478
    %v3514 = vpack.c.b16 %v3481, %v3480
    %v3515 = vpack.c.b16 %v3483, %v3482
    %3548 = vmatprep.subr.bf16.mxu0 0
    %3549 = vmatpush1.bf16.msra.mxu0 %v3484
    %3550 = vmatprep.subr.bf16.mxu0 0
    %3551 = vmatpush1.bf16.msra.mxu0 %v3485
    %3552 = vmatprep.subr.bf16.mxu0 0
    %3553 = vmatpush1.bf16.msra.mxu0 %v3486
    %3554 = vmatprep.subr.bf16.mxu0 0
    %3555 = vmatpush1.bf16.msra.mxu0 %v3487
    %3556 = vmatprep.subr.bf16.mxu0 0
    %3557 = vmatpush1.bf16.msra.mxu0 %v3488
    %3558 = vmatprep.subr.bf16.mxu0 0
    %3559 = vmatpush1.bf16.msra.mxu0 %v3489
    %3560 = vmatprep.subr.bf16.mxu0 0
    %3561 = vmatpush1.bf16.msra.mxu0 %v3490
    %3562 = vmatprep.subr.bf16.mxu0 0
    %3563 = vmatpush1.bf16.msra.mxu0 %v3491
    %3564 = vmatprep.subr.bf16.mxu0 0
    %3565 = vmatpush1.bf16.msra.mxu0 %v3492
    %3566 = vmatprep.subr.bf16.mxu0 0
    %3567 = vmatpush1.bf16.msra.mxu0 %v3493
    %3568 = vmatprep.subr.bf16.mxu0 0
    %3569 = vmatpush1.bf16.msra.mxu0 %v3494
    %3570 = vmatprep.subr.bf16.mxu0 0
    %3571 = vmatpush1.bf16.msra.mxu0 %v3495
    %3572 = vmatprep.subr.bf16.mxu0 0
    %3573 = vmatpush1.bf16.msra.mxu0 %v3496
    %3574 = vmatprep.subr.bf16.mxu0 0
    %3575 = vmatpush1.bf16.msra.mxu0 %v3497
    %3576 = vmatprep.subr.bf16.mxu0 0
    %3577 = vmatpush1.bf16.msra.mxu0 %v3498
    %3578 = vmatprep.subr.bf16.mxu0 0
    %3579 = vmatpush1.bf16.msra.mxu0 %v3499
    %3580 = vmatprep.mubr.bf16.mxu0 %v3285
    %3581 = vmatmul.mubr.bf16.gmra.mrb[0].mxu0 %v3284
    %v3582 = vpop.f32.mrb[0].mxu0
    %v3583 = vadd.f32 %v3355, %v3582
    %v3584 = vpop.f32.mrb[0].mxu0
    %v3585 = vpop.f32.mrb[0].mxu0
    %v3586 = vadd.f32 %v3355, %v3585
    %v3587 = vpop.f32.mrb[0].mxu0
    %3588 = vdwg.mxu0
    %3589 = vmatprep.subr.bf16.mxu0 0
    %3590 = vmatpush1.bf16.msra.mxu0 %v3500
    %3591 = vmatprep.subr.bf16.mxu0 0
    %3592 = vmatpush1.bf16.msra.mxu0 %v3501
    %3593 = vmatprep.subr.bf16.mxu0 0
    %3594 = vmatpush1.bf16.msra.mxu0 %v3502
    %3595 = vmatprep.subr.bf16.mxu0 0
    %3596 = vmatpush1.bf16.msra.mxu0 %v3503
    %3597 = vmatprep.subr.bf16.mxu0 0
    %3598 = vmatpush1.bf16.msra.mxu0 %v3504
    %3599 = vmatprep.subr.bf16.mxu0 0
    %3600 = vmatpush1.bf16.msra.mxu0 %v3505
    %3601 = vmatprep.subr.bf16.mxu0 0
    %3602 = vmatpush1.bf16.msra.mxu0 %v3506
    %3603 = vmatprep.subr.bf16.mxu0 0
    %3604 = vmatpush1.bf16.msra.mxu0 %v3507
    %3605 = vmatprep.subr.bf16.mxu0 0
    %3606 = vmatpush1.bf16.msra.mxu0 %v3508
    %3607 = vmatprep.subr.bf16.mxu0 0
    %3608 = vmatpush1.bf16.msra.mxu0 %v3509
    %3609 = vmatprep.subr.bf16.mxu0 0
    %3610 = vmatpush1.bf16.msra.mxu0 %v3510
    %3611 = vmatprep.subr.bf16.mxu0 0
    %3612 = vmatpush1.bf16.msra.mxu0 %v3511
    %3613 = vmatprep.subr.bf16.mxu0 0
    %3614 = vmatpush1.bf16.msra.mxu0 %v3512
    %3615 = vmatprep.subr.bf16.mxu0 0
    %3616 = vmatpush1.bf16.msra.mxu0 %v3513
    %3617 = vmatprep.subr.bf16.mxu0 0
    %3618 = vmatpush1.bf16.msra.mxu0 %v3514
    %3619 = vmatprep.subr.bf16.mxu0 0
    %3620 = vmatpush1.bf16.msra.mxu0 %v3515
    %3621 = vmatprep.mubr.bf16.mxu0 %v3287
    %3622 = vmatmul.mubr.bf16.gmra.mrb[0].mxu0 %v3286
    %v3623 = vpop.f32.mrb[0].mxu0
    %v3624 = vadd.f32 %v3583, %v3623
    %v3625 = vpop.f32.mrb[0].mxu0
    %v3626 = vpop.f32.mrb[0].mxu0
    %v3627 = vadd.f32 %v3586, %v3626
    %v3628 = vpop.f32.mrb[0].mxu0
    %3629 = vdwg.mxu0
    %v3630 = vadd.f32 %v2973, %v3624
    %v3631 = vadd.f32 %v2974, %v3627
    %3632 = vadd.xlane.f32.xlu0 %v3630
    %v3633 = vpop.xlane.xlu0 %3632
    %3634 = vadd.xlane.f32.xlu0 %v3631
    %v3635 = vpop.xlane.xlu0 %3634
    %v3636 = vmul.f32 %v3633, %v2944
    %v3637 = vmul.f32 %v3635, %v2944
    %v3638 = vsub.f32 %v3630, %v3636
    %v3639 = vsub.f32 %v3631, %v3637
    %v3640 = vmul.f32 %v3638, %v3638
    %v3641 = vmul.f32 %v3639, %v3639
    %3642 = vadd.xlane.f32.xlu0 %v3640
    %v3643 = vpop.xlane.xlu0 %3642
    %3644 = vadd.xlane.f32.xlu0 %v3641
    %v3645 = vpop.xlane.xlu0 %3644
    %v3646 = vmul.f32 %v3643, %v2944
    %v3647 = vmul.f32 %v3645, %v2944
    %v3648 = vadd.f32 %v3646, 1e-05
    %v3649 = vadd.f32 %v3647, 1e-05
    %v3650 = vrsqrt.pop %v3648
    %v3651 = vrsqrt.pop %v3649
    %v3652 = vmul.f32 %v3638, %v3650
    %v3653 = vmul.f32 %v3639, %v3651
    %v3654 = vlaneseq
    %v3655 = vshrl.u32 %v3654, 7
    %v3656 = vsub.s32 0, %v3655
    %v3657 = vrot.slane %v159, %v3656
    %v3658 = vmul.f32 %v3652, %v3657
    %v3659 = vmul.f32 %v3653, %v3657
    %v3660 = vlaneseq
    %v3661 = vshrl.u32 %v3660, 7
    %v3662 = vsub.s32 0, %v3661
    %v3663 = vrot.slane %v160, %v3662
    %v3664 = vadd.f32 %v3658, %v3663
    %v3665 = vadd.f32 %v3659, %v3663
    %v3682 = vsel %vm1218, %v1749, %v1743
    %v3683 = vsel %vm1220, %v1755, %v3682
    %v3684 = vsel %vm1222, %v1761, %v3683
    %v3685 = vsel %vm1224, %v1767, %v3684
    %v3686 = vsel %vm1226, %v1773, %v3685
    %v3687 = vsel %vm1228, %v1779, %v3686
    %v3688 = vsel %vm1230, %v1785, %v3687
    %v3689 = vsel %vm1218, %v1797, %v1791
    %v3690 = vsel %vm1220, %v1803, %v3689
    %v3691 = vsel %vm1222, %v1809, %v3690
    %v3692 = vsel %vm1224, %v1815, %v3691
    %v3693 = vsel %vm1226, %v1821, %v3692
    %v3694 = vsel %vm1228, %v1827, %v3693
    %v3695 = vsel %vm1230, %v1833, %v3694
    %v3698 = vpack.c.bf16 %v3665, %v3664
    %v3699 = vpack.c.bf16 %v3695, %v3688
    %v3700 = vld [vmem:[#allocation13] sm:$0xf]
    %v3701 = vld [vmem:[#allocation13 + $0x4] sm:$0xf]
    %v3702 = vld [vmem:[#allocation13 + $0x8] sm:$0xf]
    %v3703 = vld [vmem:[#allocation13 + $0xc] sm:$0xf]
    %v3704 = vld [vmem:[#allocation13 + $0x10] sm:$0xf]
    %v3705 = vld [vmem:[#allocation13 + $0x14] sm:$0xf]
    %v3706 = vld [vmem:[#allocation13 + $0x18] sm:$0xf]
    %v3707 = vld [vmem:[#allocation13 + $0x1c] sm:$0xf]
    %v3708 = vld [vmem:[#allocation13 + $0x20] sm:$0xf]
    %v3709 = vld [vmem:[#allocation13 + $0x24] sm:$0xf]
    %v3710 = vld [vmem:[#allocation13 + $0x28] sm:$0xf]
    %v3711 = vld [vmem:[#allocation13 + $0x2c] sm:$0xf]
    %v3712 = vld [vmem:[#allocation13 + $0x30] sm:$0xf]
    %v3713 = vld [vmem:[#allocation13 + $0x34] sm:$0xf]
    %v3714 = vld [vmem:[#allocation13 + $0x38] sm:$0xf]
    %v3715 = vld [vmem:[#allocation13 + $0x3c] sm:$0xf]
    %v3716 = vlaneseq
    %v3717 = vshrl.u32 %v3716, 7
    %v3718 = vsub.s32 0, %v3717
    %v3719 = vrot.slane %v163, %v3718
    %v3736 = vunpack.c.l.b16 %v3700
    %v3737 = vunpack.c.l.b16 %v3701
    %v3738 = vunpack.c.l.b16 %v3702
    %v3739 = vunpack.c.l.b16 %v3703
    %v3740 = vunpack.c.l.b16 %v3704
    %v3741 = vunpack.c.l.b16 %v3705
    %v3742 = vunpack.c.l.b16 %v3706
    %v3743 = vunpack.c.l.b16 %v3707
    %v3744 = vunpack.c.l.b16 %v3708
    %v3745 = vunpack.c.l.b16 %v3709
    %v3746 = vunpack.c.l.b16 %v3710
    %v3747 = vunpack.c.l.b16 %v3711
    %v3748 = vunpack.c.l.b16 %v3712
    %v3749 = vunpack.c.l.b16 %v3713
    %v3750 = vunpack.c.l.b16 %v3714
    %v3751 = vunpack.c.l.b16 %v3715
    %v3752 = vpack.c.b16 %v3737, %v3736
    %v3753 = vpack.c.b16 %v3739, %v3738
    %v3754 = vpack.c.b16 %v3741, %v3740
    %v3755 = vpack.c.b16 %v3743, %v3742
    %v3756 = vpack.c.b16 %v3745, %v3744
    %v3757 = vpack.c.b16 %v3747, %v3746
    %v3758 = vpack.c.b16 %v3749, %v3748
    %v3759 = vpack.c.b16 %v3751, %v3750
    %3768 = vmatprep.subr.bf16.mxu0 0
    %3769 = vmatpush1.bf16.msra.mxu0 %v3752
    %3770 = vmatprep.subr.bf16.mxu0 0
    %3771 = vmatpush1.bf16.msra.mxu0 %v3753
    %3772 = vmatprep.subr.bf16.mxu0 0
    %3773 = vmatpush1.bf16.msra.mxu0 %v3754
    %3774 = vmatprep.subr.bf16.mxu0 0
    %3775 = vmatpush1.bf16.msra.mxu0 %v3755
    %3776 = vmatprep.subr.bf16.mxu0 0
    %3777 = vmatpush1.bf16.msra.mxu0 %v3756
    %3778 = vmatprep.subr.bf16.mxu0 0
    %3779 = vmatpush1.bf16.msra.mxu0 %v3757
    %3780 = vmatprep.subr.bf16.mxu0 0
    %3781 = vmatpush1.bf16.msra.mxu0 %v3758
    %3782 = vmatprep.subr.bf16.mxu0 0
    %3783 = vmatpush1.bf16.msra.mxu0 %v3759
    %3784 = vmatprep.subr.bf16.mxu0 0
    %3785 = vmatpush1.bf16.msra.mxu0 0
    %3786 = vmatprep.subr.bf16.mxu0 0
    %3787 = vmatpush1.bf16.msra.mxu0 0
    %3788 = vmatprep.subr.bf16.mxu0 0
    %3789 = vmatpush1.bf16.msra.mxu0 0
    %3790 = vmatprep.subr.bf16.mxu0 0
    %3791 = vmatpush1.bf16.msra.mxu0 0
    %3792 = vmatprep.subr.bf16.mxu0 0
    %3793 = vmatpush1.bf16.msra.mxu0 0
    %3794 = vmatprep.subr.bf16.mxu0 0
    %3795 = vmatpush1.bf16.msra.mxu0 0
    %3796 = vmatprep.subr.bf16.mxu0 0
    %3797 = vmatpush1.bf16.msra.mxu0 0
    %3798 = vmatprep.subr.bf16.mxu0 0
    %3799 = vmatpush1.bf16.msra.mxu0 0
    %3800 = vmatprep.mubr.bf16.mxu0 0
    %3801 = vmatmul.mubr.bf16.gmra.mrb[0].mxu0 %v3698
    %v3802 = vpop.f32.mrb[0].mxu0
    %v3803 = vadd.f32 %v3719, %v3802
    %v3804 = vpop.f32.mrb[0].mxu0
    %v3805 = vpop.f32.mrb[0].mxu0
    %v3806 = vadd.f32 %v3719, %v3805
    %v3807 = vpop.f32.mrb[0].mxu0
    %3808 = vmatprep.mubr.bf16.mxu0 0
    %3809 = vmatmul.mubr.bf16.gmra.mrb[0].mxu0 %v3699
    %v3810 = vpop.f32.mrb[0].mxu0
    %v3811 = vadd.f32 %v3719, %v3810
    %v3812 = vpop.f32.mrb[0].mxu0
    %v3813 = vpop.f32.mrb[0].mxu0
    %v3814 = vadd.f32 %v3719, %v3813
    %v3815 = vpop.f32.mrb[0].mxu0
    %3816 = vdwg.mxu0
    %3817 = vst [vmem:[#allocation16] sm:$0xff] %v3803
    %3818 = vst [vmem:[#allocation16 + $0x8] sm:$0xff] %v3806
    %3819 = vst [vmem:[#allocation17] sm:$0xff] %v3811
    %3820 = vst [vmem:[#allocation17 + $0x8] sm:$0xff] %v3814
    // Predicated region
    $region90: #{cross_attention_forward.1} parent=1 // pred_check
      _
    $region91: #{cross_attention_forward.1} parent=1 // pred_check_branch
      %3822 = sbr.rel (0) target = $region93
    $region92: #{cross_attention_forward.1} parent=1 // pred_region
      %s3824 = ssub.s32 256, 256
      %3825 = vsyncadd [#allocation4], %s3824
      %s3826 = sshll.u32 [#allocation16], 4
      %s3827 = int_to_ptr.vmem [resolvable:$true] %s3826
      %3832 = dma.vmem_to_hbm [thread:$0]  %s3827, 256, %s14, [#allocation4], 128, 128, 8
    $region93: #{cross_attention_forward.1} parent=1 // pred_fallthru
      _
    // Predicated region
    $region94: #{cross_attention_forward.1} parent=1 // pred_check
      _
    $region95: #{cross_attention_forward.1} parent=1 // pred_check_branch
      %3834 = sbr.rel (0) target = $region97
    $region96: #{cross_attention_forward.1} parent=1 // pred_region
      %s3836 = ssub.s32 256, 256
      %3837 = vsyncadd [#allocation18], %s3836
      %s3838 = sshll.u32 [#allocation17], 4
      %s3839 = int_to_ptr.vmem [resolvable:$true] %s3838
      %3844 = dma.vmem_to_hbm [thread:$0]  %s3839, 256, %s15, [#allocation18], 128, 128, 8
    $region97: #{cross_attention_forward.1} parent=1 // pred_fallthru
      _
    // Predicated region
    $region98: #{cross_attention_forward.1} parent=1 // pred_check
      _
    $region99: #{cross_attention_forward.1} parent=1 // pred_check_branch
      %3846 = sbr.rel (0) target = $region101
    $region100: #{cross_attention_forward.1} parent=1 // pred_region
      %3847 = dma.done [#allocation4], 256
    $region101: #{cross_attention_forward.1} parent=1 // pred_fallthru
      _
    // Predicated region
    $region102: #{cross_attention_forward.1} parent=1 // pred_check
      _
    $region103: #{cross_attention_forward.1} parent=1 // pred_check_branch
      %3849 = sbr.rel (0) target = $region105
    $region104: #{cross_attention_forward.1} parent=1 // pred_region
      %3850 = dma.done [#allocation18], 256
    $region105: #{cross_attention_forward.1} parent=1 // pred_fallthru
      _
    %3851 = vsyncpa [#allocation3], 1
    %3852 = vsyncpa [#allocation6], 1
    %3853 = vsyncpa [#allocation9], 1
    %3854 = vsyncpa [#allocation12], 1
    %3855 = vsyncpa [#allocation15], 1
    %3856 = vsyncpa [#allocation4], 1
    %3857 = vsyncpa [#allocation18], 1

</llo_original>
